<compile_context>
chip_gen: v5e
topology: v5e:2x2
jax: 0.10.0
libtpu: 0.0.40
codegen_flags: <defaults>
</compile_context>

<pallas_src>
import math
from functools import partial

import jax
import jax.numpy as jnp
import numpy as np
from jax.experimental import pallas as pl
from jax.experimental.pallas import tpu as pltpu

LANE = 128


def _round_up(x, m):
    return ((x + m - 1) // m) * m


def _nbytes(x):
    return int(math.prod(x.shape)) * jnp.dtype(x.dtype).itemsize


def _tpu_config():
    """Generation-aware VMEM limit and default row tile.

    v5e/v6e have 128 MiB physical VMEM -> larger limit and tm=1024.
    v7x has only 64 MiB -> conservative 48 MiB limit and tm=512.
    """
    vmem_cap = None
    try:
        vmem_cap = int(pltpu.get_tpu_info().vmem_capacity_bytes)
    except Exception:
        vmem_cap = None
    if vmem_cap is not None and vmem_cap > 96 * 1024 * 1024:
        return 96 * 1024 * 1024, 1024
    return 48 * 1024 * 1024, 512


_VMEM_LIMIT, _DEFAULT_TM = _tpu_config()


# ----------------------------------------------------------------------------
# Kernel 1: one (tm, N) tile of  relu?( A @ W + bias [+ residual] )
#   A: bf16 rows = flattened spatial positions; W: bf16 (BN scale folded in),
#   held fully resident in VMEM (block index never changes); bias f32;
#   f32 MXU accumulation.  Used for all three 1x1 convs.
# ----------------------------------------------------------------------------
def _matmul_bias_kernel(*refs, apply_relu: bool, has_residual: bool):
    if has_residual:
        a_ref, w_ref, b_ref, r_ref, o_ref = refs
    else:
        a_ref, w_ref, b_ref, o_ref = refs
        r_ref = None
    y = jnp.dot(a_ref[...], w_ref[...], preferred_element_type=jnp.float32)
    y = y + b_ref[...]
    if r_ref is not None:
        y = y + r_ref[...].astype(jnp.float32)
    if apply_relu:
        y = jnp.maximum(y, 0.0)
    o_ref[...] = y.astype(o_ref.dtype)


def matmul_bias(a, w, bias, residual=None, apply_relu=False,
                out_dtype=jnp.bfloat16, tm=512):
    """a: (M, K) bf16, w: (K, N) bf16 (BN scale folded), bias: (1, N) f32."""
    M, K = a.shape
    N = w.shape[1]
    # Either tm (multiple of 8) or the full row extent -> (8,128) rule holds.
    tm_e = min(tm, M)
    grid = (pl.cdiv(M, tm_e),)

    args = [a, w, bias]
    in_specs = [
        pl.BlockSpec((tm_e, K), lambda i: (i, 0)),
        # Weight + bias blocks are grid-invariant -> fetched from HBM once and
        # kept resident in VMEM for the whole pass (pure A-stream kernel).
        pl.BlockSpec((K, N), lambda i: (0, 0)),
        pl.BlockSpec((1, N), lambda i: (0, 0)),
    ]
    if residual is not None:
        args.append(residual)
        in_specs.append(pl.BlockSpec((tm_e, N), lambda i: (i, 0)))

    # With the weight resident, every operand really is read once -> the
    # flat sum of sizes is now an accurate bytes_accessed estimate.
    cost = pl.CostEstimate(
        flops=2 * M * K * N,
        transcendentals=0,
        bytes_accessed=int(sum(_nbytes(x) for x in args)
                           + M * N * jnp.dtype(out_dtype).itemsize),
    )
    return pl.pallas_call(
        partial(_matmul_bias_kernel, apply_relu=apply_relu,
                has_residual=residual is not None),
        out_shape=jax.ShapeDtypeStruct((M, N), out_dtype),
        grid_spec=pltpu.PrefetchScalarGridSpec(
            num_scalar_prefetch=0,
            grid=grid,
            in_specs=in_specs,
            out_specs=pl.BlockSpec((tm_e, N), lambda i: (i, 0)),
        ),
        compiler_params=pltpu.CompilerParams(
            dimension_semantics=("parallel",),
            vmem_limit_bytes=_VMEM_LIMIT,
        ),
        cost_estimate=cost,
    )(*args)


# ----------------------------------------------------------------------------
# Kernel 2: 3x3 conv (padding=1, given stride) + BN bias + ReLU, no HBM im2col.
# Input arrives stride-phase-decomposed (identity for stride 1).  Grid is
# (batch, output-row tiles); each step accumulates the 9 tap matmuls into a
# small per-tile f32 accumulator and stores one lane-dense output block.
# ----------------------------------------------------------------------------
def _conv3x3_bias_kernel(x_ref, w_ref, b_ref, o_ref, *,
                         stride: int, rt: int, Wo: int, apply_relu: bool):
    # x_ref: (s*s, Hph, Wph, Cin) bf16 phases of one image (fetched once per n).
    # w_ref: (9, Cin, Cout) bf16 (BN scale folded); b_ref: (1, Cout) f32.
    # o_ref: (1, rt, Wo, Cout).
    s = stride
    cout = o_ref.shape[-1]
    row0 = pl.multiple_of(pl.program_id(1) * rt, rt)
    acc = jnp.zeros((rt * Wo, cout), jnp.float32)
    for kh in range(3):
        qh, rh = divmod(kh, s)
        for kw in range(3):
            qw, rw = divmod(kw, s)
            patch = x_ref[rh * s + rw, pl.ds(row0 + qh, rt), pl.ds(qw, Wo), :]
            acc = acc + jnp.dot(patch.reshape(rt * Wo, -1),
                                w_ref[kh * 3 + kw],
                                preferred_element_type=jnp.float32)
    y = acc + b_ref[...]
    if apply_relu:
        y = jnp.maximum(y, 0.0)
    o_ref[0] = y.reshape(rt, Wo, cout).astype(o_ref.dtype)


def conv3x3_bias(x_nhwc, w_taps, bias, stride, apply_relu=True,
                 out_dtype=jnp.bfloat16, row_tile=8):
    """x_nhwc: (N,H,W,Cin) bf16 (channels 128-padded); w_taps: (9,Cin,Cout) bf16.
    Returns (N, Ho, Wo, Cout)."""
    N, H, W, Cin = x_nhwc.shape
    Cout = w_taps.shape[-1]
    s = stride
    Ho = (H - 1) // s + 1
    Wo = (W - 1) // s + 1
    Hp, Wp = H + 2, W + 2
    Hph = -(-Hp // s)
    Wph = -(-Wp // s)

    # Spatial pad by 1; for stride>1 decompose into the s*s stride phases
    # (a ~1x copy instead of the 9x HBM im2col blow-up).  stride==1 needs no
    # phase transpose at all -> only the pad pass remains.
    xp = jnp.pad(x_nhwc, ((0, 0), (1, 1), (1, 1), (0, 0)))
    if s == 1:
        ph = xp.reshape(N, Hph, Wph, Cin)
        n_ph = 1
    else:
        xp = jnp.pad(xp, ((0, 0), (0, Hph * s - Hp), (0, Wph * s - Wp), (0, 0)))
        ph = xp.reshape(N, Hph, s, Wph, s, Cin)
        ph = jnp.transpose(ph, (0, 2, 4, 1, 3, 5)).reshape(N * s * s, Hph, Wph, Cin)
        n_ph = s * s

    # Output-row tile: largest divisor of Ho not exceeding row_tile, so tiles
    # divide the image exactly and all in-kernel slices stay in bounds.
    rt = 1
    for d in range(min(row_tile, Ho), 0, -1):
        if Ho % d == 0:
            rt = d
            break
    R = Ho // rt

    M = N * Ho * Wo
    cost = pl.CostEstimate(
        flops=2 * M * 9 * Cin * Cout,
        transcendentals=0,
        bytes_accessed=int(_nbytes(ph) + _nbytes(w_taps) + _nbytes(bias)
                           + M * Cout * jnp.dtype(out_dtype).itemsize),
    )
    return pl.pallas_call(
        partial(_conv3x3_bias_kernel, stride=s, rt=rt, Wo=Wo,
                apply_relu=apply_relu),
        out_shape=jax.ShapeDtypeStruct((N, Ho, Wo, Cout), out_dtype),
        grid_spec=pltpu.PrefetchScalarGridSpec(
            num_scalar_prefetch=0,
            grid=(N, R),
            in_specs=[
                # Block index constant across the row axis -> one DMA per image.
                pl.BlockSpec((n_ph, Hph, Wph, Cin), lambda n, r: (n, 0, 0, 0)),
                pl.BlockSpec((9, Cin, Cout), lambda n, r: (0, 0, 0)),
                pl.BlockSpec((1, Cout), lambda n, r: (0, 0)),
            ],
            # Last two block dims equal the full array dims -> valid for any
            # Wo/Cout (14x14, 7x7, ...), lane-dense stores along Cout.
            out_specs=pl.BlockSpec((1, rt, Wo, Cout), lambda n, r: (n, r, 0, 0)),
        ),
        compiler_params=pltpu.CompilerParams(
            dimension_semantics=("parallel", "parallel"),
            vmem_limit_bytes=_VMEM_LIMIT,
        ),
        cost_estimate=cost,
    )(ph, w_taps, bias)


# ----------------------------------------------------------------------------
# Glue: BN folding and weight preparation (scale folded in, bf16, 128-padded)
# ----------------------------------------------------------------------------
def fold_bn(bn, eps=1e-5):
    gamma, beta, mean, var = bn
    scale = gamma / jnp.sqrt(var + eps)
    return scale, beta - mean * scale


def prep_1x1(w_oihw, bn, cin_p, cout_p, eps=1e-5):
    scale, bias = fold_bn(bn, eps)
    cout, cin = w_oihw.shape[0], w_oihw.shape[1]
    wm = w_oihw.reshape(cout, cin).T * scale[None, :]
    wm = jnp.pad(wm, ((0, cin_p - cin), (0, cout_p - cout))).astype(jnp.bfloat16)
    b = jnp.pad(bias, (0, cout_p - cout)).reshape(1, cout_p).astype(jnp.float32)
    return wm, b


def prep_3x3(w_oihw, bn, cin_p, cout_p, eps=1e-5):
    scale, bias = fold_bn(bn, eps)
    cout, cin = w_oihw.shape[0], w_oihw.shape[1]
    wt = jnp.transpose(w_oihw, (2, 3, 1, 0)).reshape(9, cin, cout)
    wt = wt * scale[None, None, :]
    wt = jnp.pad(wt, ((0, 0), (0, cin_p - cin), (0, cout_p - cout)))
    return wt.astype(jnp.bfloat16), \
        jnp.pad(bias, (0, cout_p - cout)).reshape(1, cout_p).astype(jnp.float32)


# ----------------------------------------------------------------------------
# BottleNeck forward:
#   conv1x1 -> BN -> ReLU -> conv3x3(stride) -> BN -> ReLU -> conv1x1 -> BN
#   + shortcut (conv1x1(stride)+BN or identity), then ReLU.
# ----------------------------------------------------------------------------
@partial(jax.jit, static_argnames=("stride", "tm"))
def bottleneck_forward(x_nchw, params, stride, tm=None):
    if tm is None:
        tm = _DEFAULT_TM
    # Do the HBM-bandwidth-bound layout transpose in bf16 (half the traffic).
    x = jnp.transpose(x_nchw.astype(jnp.bfloat16), (0, 2, 3, 1))       # NHWC
    N, H, W, Cin = x.shape
    mid_c = params["w1"].shape[0]
    exp_c = params["w3"].shape[0]          # out_channels * expansion
    C1, C2, C3 = (_round_up(c, LANE) for c in (Cin, mid_c, exp_c))

    x_p = jnp.pad(x, ((0, 0), (0, 0), (0, 0), (0, C1 - Cin)))

    w1m, b1 = prep_1x1(params["w1"], params["bn1"], C1, C2)
    w2t, b2 = prep_3x3(params["w2"], params["bn2"], C2, C2)
    w3m, b3 = prep_1x1(params["w3"], params["bn3"], C2, C3)

    # conv1x1 -> BN -> ReLU
    y1 = matmul_bias(x_p.reshape(N * H * W, C1), w1m, b1,
                     apply_relu=True, out_dtype=jnp.bfloat16, tm=tm)
    # conv3x3(stride) -> BN -> ReLU   (no HBM im2col, row-tiled grid)
    y2 = conv3x3_bias(y1.reshape(N, H, W, C2), w2t, b2, stride,
                      apply_relu=True, out_dtype=jnp.bfloat16)
    Ho, Wo = y2.shape[1], y2.shape[2]
    y2 = y2.reshape(N * Ho * Wo, C2)

    # shortcut: conv1x1(stride) -> BN, or identity
    if stride != 1 or Cin != exp_c:
        wsm, bs = prep_1x1(params["ws"], params["bns"], C1, C3)
        xs = x_p[:, ::stride, ::stride, :][:, :Ho, :Wo, :].reshape(N * Ho * Wo, C1)
        sc = matmul_bias(xs, wsm, bs, apply_relu=False,
                         out_dtype=jnp.bfloat16, tm=tm)
    else:
        sc = x_p.reshape(N * H * W, C1)    # C1 == C3 in the identity case

    # final conv1x1 -> BN, + shortcut, ReLU (fused); bf16 store (f32 MXU acc),
    # halving the writeback + downstream NCHW-transpose read traffic.
    out = matmul_bias(y2, w3m, b3, residual=sc, apply_relu=True,
                      out_dtype=jnp.bfloat16, tm=tm)
    out = out.reshape(N, Ho, Wo, C3)[..., :exp_c]
    return jnp.transpose(out, (0, 3, 1, 2)).astype(jnp.float32)        # NCHW f32


# ----------------------------------------------------------------------------
# Pure-JAX f32 reference (correctness check)
# ----------------------------------------------------------------------------
def _ref_conv(x_nhwc, w_oihw, stride, pad):
    return jax.lax.conv_general_dilated(
        x_nhwc, jnp.transpose(w_oihw, (2, 3, 1, 0)),
        window_strides=(stride, stride),
        padding=[(pad, pad), (pad, pad)],
        dimension_numbers=("NHWC", "HWIO", "NHWC"))


def bottleneck_reference(x_nchw, params, stride):
    x = jnp.transpose(x_nchw, (0, 2, 3, 1)).astype(jnp.float32)
    s1, b1 = fold_bn(params["bn1"])
    y = jnp.maximum(_ref_conv(x, params["w1"], 1, 0) * s1 + b1, 0.0)
    s2, b2 = fold_bn(params["bn2"])
    y = jnp.maximum(_ref_conv(y, params["w2"], stride, 1) * s2 + b2, 0.0)
    s3, b3 = fold_bn(params["bn3"])
    y = _ref_conv(y, params["w3"], 1, 0) * s3 + b3
    cin, ce = x.shape[-1], params["w3"].shape[0]
    if stride != 1 or cin != ce:
        ss, bs = fold_bn(params["bns"])
        sc = _ref_conv(x, params["ws"], stride, 0) * ss + bs
    else:
        sc = x
    return jnp.transpose(jnp.maximum(y + sc, 0.0), (0, 3, 1, 2))


# ----------------------------------------------------------------------------
# Deterministic parameter init (kaiming-uniform-like scale)
# ----------------------------------------------------------------------------
def init_params(key, in_channels, out_channels, expansion=4):
    ks = jax.random.split(key, 8)

    def conv_w(k, cout, cin, kh, kw):
        bound = 1.0 / math.sqrt(cin * kh * kw)
        return jax.random.uniform(k, (cout, cin, kh, kw), jnp.float32, -bound, bound)

    def bn_params(k, c):
        kg, kb, km, kv = jax.random.split(k, 4)
        gamma = 1.0 + 0.1 * jax.random.normal(kg, (c,), jnp.float32)
        beta = 0.1 * jax.random.normal(kb, (c,), jnp.float32)
        mean = 0.1 * jax.random.normal(km, (c,), jnp.float32)
        var = jnp.abs(jax.random.normal(kv, (c,), jnp.float32)) + 0.5
        return (gamma, beta, mean, var)

    oe = out_channels * expansion
    return {
        "w1": conv_w(ks[0], out_channels, in_channels, 1, 1),
        "bn1": bn_params(ks[1], out_channels),
        "w2": conv_w(ks[2], out_channels, out_channels, 3, 3),
        "bn2": bn_params(ks[3], out_channels),
        "w3": conv_w(ks[4], oe, out_channels, 1, 1),
        "bn3": bn_params(ks[5], oe),
        "ws": conv_w(ks[6], oe, in_channels, 1, 1),
        "bns": bn_params(ks[7], oe),
    }


if __name__ == "__main__":
    key = jax.random.PRNGKey(0)
    configs = [
        # (batch, in_channels, out_channels, spatial, stride)
        (2, 4, 8, 16, 2),    # strided conv shortcut
        (2, 4, 8, 16, 1),    # stride-1 conv shortcut
        (2, 32, 8, 16, 1),   # identity shortcut (in == 4*out)
        (2, 4, 8, 14, 2),    # 14x14 -> 7x7 output (non-multiple-of-8 rows/cols)
    ]
    for batch, cin, cout, spatial, stride in configs:
        k_x, k_p, key = jax.random.split(key, 3)
        x = jax.random.normal(k_x, (batch, cin, spatial, spatial), jnp.float32)
        params = init_params(k_p, cin, cout)

        out = jax.block_until_ready(bottleneck_forward(x, params, stride))
        ref = jax.block_until_ready(bottleneck_reference(x, params, stride))

        ho = (spatial - 1) // stride + 1
        assert out.shape == (batch, cout * 4, ho, ho), out.shape
        # bf16 matmul inputs / bf16 final store (f32 accumulation) -> loose tol.
        np.testing.assert_allclose(np.asarray(out), np.asarray(ref),
                                   rtol=5e-2, atol=5e-2)

    print("KERNEL_OK")
</pallas_src>

<mosaic_0001>
module attributes {stable_mosaic.version = 11 : i64} {
  func.func @_matmul_bias_kernel(%arg0: i32, %arg1: memref<512x128xbf16, #tpu.memory_space<vmem>>, %arg2: memref<128x128xbf16, #tpu.memory_space<vmem>>, %arg3: memref<1x128xf32, #tpu.memory_space<vmem>>, %arg4: memref<512x128xbf16, #tpu.memory_space<vmem>>) attributes {dimension_semantics = [#tpu.dimension_semantics<parallel>], iteration_bounds = array<i64: 1>, scalar_prefetch = 0 : i64, scratch_operands = 0 : i64, tpu.core_type = #tpu.core_type<tc>, window_params = [{transform_indices = @transform_0, window_bounds = array<i64: 512, 128>}, {pipeline_mode = #tpu.pipeline_mode<synchronous>, transform_indices = @transform_1, window_bounds = array<i64: 128, 128>}, {pipeline_mode = #tpu.pipeline_mode<synchronous>, transform_indices = @transform_2, window_bounds = array<i64: 1, 128>}, {transform_indices = @transform_3, window_bounds = array<i64: 512, 128>}]} {
    %c0 = arith.constant 0 : index
    %c0_0 = arith.constant 0 : index
    %0 = vector.load %arg1[%c0, %c0_0] : memref<512x128xbf16, #tpu.memory_space<vmem>>, vector<512x128xbf16>
    %c0_1 = arith.constant 0 : index
    %c0_2 = arith.constant 0 : index
    %1 = vector.load %arg2[%c0_1, %c0_2] : memref<128x128xbf16, #tpu.memory_space<vmem>>, vector<128x128xbf16>
    %cst = arith.constant dense<0.000000e+00> : vector<512x128xf32>
    %2 = tpu.matmul %0, %1, %cst {dimension_numbers = #tpu.dot_dimension_numbers<[1], [0], [0], [1], [0, 0, 1, 1], [], []>} : vector<512x128xbf16>, vector<128x128xbf16>, vector<512x128xf32> -> vector<512x128xf32>
    %c0_3 = arith.constant 0 : index
    %c0_4 = arith.constant 0 : index
    %3 = vector.load %arg3[%c0_3, %c0_4] : memref<1x128xf32, #tpu.memory_space<vmem>>, vector<1x128xf32>
    %4 = vector.broadcast %3 : vector<1x128xf32> to vector<512x128xf32>
    %5 = arith.addf %2, %4 : vector<512x128xf32>
    %cst_5 = arith.constant 0.000000e+00 : f32
    %6 = vector.broadcast %cst_5 : f32 to vector<512x128xf32>
    %7 = arith.maximumf %5, %6 : vector<512x128xf32>
    %8 = arith.truncf %7 : vector<512x128xf32> to vector<512x128xbf16>
    %c0_6 = arith.constant 0 : index
    %c0_7 = arith.constant 0 : index
    %9 = vector.load %arg4[%c0_6, %c0_7] : memref<512x128xbf16, #tpu.memory_space<vmem>>, vector<512x128xbf16>
    tpu.vector_store %arg4[%c0_6, %c0_7], %8 {strides = array<i32>} : memref<512x128xbf16, #tpu.memory_space<vmem>>, vector<512x128xbf16>,
    return
  }
  func.func @transform_0(%arg0: i32) -> (i32, i32) {
    %c0_i32 = arith.constant 0 : i32
    %c0_i32_0 = arith.constant 0 : i32
    return %arg0, %c0_i32 : i32, i32
  }
  func.func @transform_1(%arg0: i32) -> (i32, i32) {
    %c0_i32 = arith.constant 0 : i32
    %c0_i32_0 = arith.constant 0 : i32
    %c0_i32_1 = arith.constant 0 : i32
    return %c0_i32, %c0_i32_0 : i32, i32
  }
  func.func @transform_2(%arg0: i32) -> (i32, i32) {
    %c0_i32 = arith.constant 0 : i32
    %c0_i32_0 = arith.constant 0 : i32
    %c0_i32_1 = arith.constant 0 : i32
    return %c0_i32, %c0_i32_0 : i32, i32
  }
  func.func @transform_3(%arg0: i32) -> (i32, i32) {
    %c0_i32 = arith.constant 0 : i32
    %c0_i32_0 = arith.constant 0 : i32
    return %arg0, %c0_i32 : i32, i32
  }
}

module attributes {stable_mosaic.version = 11 : i64} {
  func.func @_conv3x3_bias_kernel(%arg0: i32, %arg1: i32, %arg2: memref<4x9x9x128xbf16, #tpu.memory_space<vmem>>, %arg3: memref<9x128x128xbf16, #tpu.memory_space<vmem>>, %arg4: memref<1x128xf32, #tpu.memory_space<vmem>>, %arg5: memref<1x8x8x128xbf16, #tpu.memory_space<vmem>>) attributes {dimension_semantics = [#tpu.dimension_semantics<parallel>, #tpu.dimension_semantics<parallel>], iteration_bounds = array<i64: 2, 1>, scalar_prefetch = 0 : i64, scratch_operands = 0 : i64, tpu.core_type = #tpu.core_type<tc>, window_params = [{transform_indices = @transform_0, window_bounds = array<i64: 4, 9, 9, 128>}, {pipeline_mode = #tpu.pipeline_mode<synchronous>, transform_indices = @transform_1, window_bounds = array<i64: 9, 128, 128>}, {pipeline_mode = #tpu.pipeline_mode<synchronous>, transform_indices = @transform_2, window_bounds = array<i64: 1, 128>}, {transform_indices = @transform_3, window_bounds = array<i64: 1, 8, 8, 128>}]} {
    %c8_i32 = arith.constant 8 : i32
    %0 = arith.muli %arg1, %c8_i32 : i32
    %1 = tpu.assume_multiple %0, 8 : i32
    %cst = arith.constant 0.000000e+00 : f32
    %2 = vector.broadcast %cst : f32 to vector<64x128xf32>
    %c0_i32 = arith.constant 0 : i32
    %3 = arith.addi %1, %c0_i32 : i32
    %c0 = arith.constant 0 : index
    %4 = arith.index_cast %3 : i32 to index
    %c0_0 = arith.constant 0 : index
    %c0_1 = arith.constant 0 : index
    %5 = vector.load %arg2[%c0, %4, %c0_0, %c0_1] : memref<4x9x9x128xbf16, #tpu.memory_space<vmem>>, vector<1x8x8x128xbf16>
    %6 = vector.shape_cast %5 : vector<1x8x8x128xbf16> to vector<8x8x128xbf16>
    %7 = vector.shape_cast %6 : vector<8x8x128xbf16> to vector<64x128xbf16>
    %c0_2 = arith.constant 0 : index
    %c0_3 = arith.constant 0 : index
    %c0_4 = arith.constant 0 : index
    %8 = vector.load %arg3[%c0_2, %c0_3, %c0_4] : memref<9x128x128xbf16, #tpu.memory_space<vmem>>, vector<1x128x128xbf16>
    %9 = vector.shape_cast %8 : vector<1x128x128xbf16> to vector<128x128xbf16>
    %cst_5 = arith.constant dense<0.000000e+00> : vector<64x128xf32>
    %10 = tpu.matmul %7, %9, %cst_5 {dimension_numbers = #tpu.dot_dimension_numbers<[1], [0], [0], [1], [0, 0, 1, 1], [], []>} : vector<64x128xbf16>, vector<128x128xbf16>, vector<64x128xf32> -> vector<64x128xf32>
    %11 = arith.addf %2, %10 : vector<64x128xf32>
    %c0_i32_6 = arith.constant 0 : i32
    %12 = arith.addi %1, %c0_i32_6 : i32
    %c1 = arith.constant 1 : index
    %13 = arith.index_cast %12 : i32 to index
    %c0_7 = arith.constant 0 : index
    %c0_8 = arith.constant 0 : index
    %14 = vector.load %arg2[%c1, %13, %c0_7, %c0_8] : memref<4x9x9x128xbf16, #tpu.memory_space<vmem>>, vector<1x8x8x128xbf16>
    %15 = vector.shape_cast %14 : vector<1x8x8x128xbf16> to vector<8x8x128xbf16>
    %16 = vector.shape_cast %15 : vector<8x8x128xbf16> to vector<64x128xbf16>
    %c1_9 = arith.constant 1 : index
    %c0_10 = arith.constant 0 : index
    %c0_11 = arith.constant 0 : index
    %17 = vector.load %arg3[%c1_9, %c0_10, %c0_11] : memref<9x128x128xbf16, #tpu.memory_space<vmem>>, vector<1x128x128xbf16>
    %18 = vector.shape_cast %17 : vector<1x128x128xbf16> to vector<128x128xbf16>
    %cst_12 = arith.constant dense<0.000000e+00> : vector<64x128xf32>
    %19 = tpu.matmul %16, %18, %cst_12 {dimension_numbers = #tpu.dot_dimension_numbers<[1], [0], [0], [1], [0, 0, 1, 1], [], []>} : vector<64x128xbf16>, vector<128x128xbf16>, vector<64x128xf32> -> vector<64x128xf32>
    %20 = arith.addf %11, %19 : vector<64x128xf32>
    %c0_i32_13 = arith.constant 0 : i32
    %21 = arith.addi %1, %c0_i32_13 : i32
    %c0_14 = arith.constant 0 : index
    %22 = arith.index_cast %21 : i32 to index
    %c1_15 = arith.constant 1 : index
    %c0_16 = arith.constant 0 : index
    %23 = vector.load %arg2[%c0_14, %22, %c1_15, %c0_16] : memref<4x9x9x128xbf16, #tpu.memory_space<vmem>>, vector<1x8x8x128xbf16>
    %24 = vector.shape_cast %23 : vector<1x8x8x128xbf16> to vector<8x8x128xbf16>
    %25 = vector.shape_cast %24 : vector<8x8x128xbf16> to vector<64x128xbf16>
    %c2 = arith.constant 2 : index
    %c0_17 = arith.constant 0 : index
    %c0_18 = arith.constant 0 : index
    %26 = vector.load %arg3[%c2, %c0_17, %c0_18] : memref<9x128x128xbf16, #tpu.memory_space<vmem>>, vector<1x128x128xbf16>
    %27 = vector.shape_cast %26 : vector<1x128x128xbf16> to vector<128x128xbf16>
    %cst_19 = arith.constant dense<0.000000e+00> : vector<64x128xf32>
    %28 = tpu.matmul %25, %27, %cst_19 {dimension_numbers = #tpu.dot_dimension_numbers<[1], [0], [0], [1], [0, 0, 1, 1], [], []>} : vector<64x128xbf16>, vector<128x128xbf16>, vector<64x128xf32> -> vector<64x128xf32>
    %29 = arith.addf %20, %28 : vector<64x128xf32>
    %c0_i32_20 = arith.constant 0 : i32
    %30 = arith.addi %1, %c0_i32_20 : i32
    %c2_21 = arith.constant 2 : index
    %31 = arith.index_cast %30 : i32 to index
    %c0_22 = arith.constant 0 : index
    %c0_23 = arith.constant 0 : index
    %32 = vector.load %arg2[%c2_21, %31, %c0_22, %c0_23] : memref<4x9x9x128xbf16, #tpu.memory_space<vmem>>, vector<1x8x8x128xbf16>
    %33 = vector.shape_cast %32 : vector<1x8x8x128xbf16> to vector<8x8x128xbf16>
    %34 = vector.shape_cast %33 : vector<8x8x128xbf16> to vector<64x128xbf16>
    %c3 = arith.constant 3 : index
    %c0_24 = arith.constant 0 : index
    %c0_25 = arith.constant 0 : index
    %35 = vector.load %arg3[%c3, %c0_24, %c0_25] : memref<9x128x128xbf16, #tpu.memory_space<vmem>>, vector<1x128x128xbf16>
    %36 = vector.shape_cast %35 : vector<1x128x128xbf16> to vector<128x128xbf16>
    %cst_26 = arith.constant dense<0.000000e+00> : vector<64x128xf32>
    %37 = tpu.matmul %34, %36, %cst_26 {dimension_numbers = #tpu.dot_dimension_numbers<[1], [0], [0], [1], [0, 0, 1, 1], [], []>} : vector<64x128xbf16>, vector<128x128xbf16>, vector<64x128xf32> -> vector<64x128xf32>
    %38 = arith.addf %29, %37 : vector<64x128xf32>
    %c0_i32_27 = arith.constant 0 : i32
    %39 = arith.addi %1, %c0_i32_27 : i32
    %c3_28 = arith.constant 3 : index
    %40 = arith.index_cast %39 : i32 to index
    %c0_29 = arith.constant 0 : index
    %c0_30 = arith.constant 0 : index
    %41 = vector.load %arg2[%c3_28, %40, %c0_29, %c0_30] : memref<4x9x9x128xbf16, #tpu.memory_space<vmem>>, vector<1x8x8x128xbf16>
    %42 = vector.shape_cast %41 : vector<1x8x8x128xbf16> to vector<8x8x128xbf16>
    %43 = vector.shape_cast %42 : vector<8x8x128xbf16> to vector<64x128xbf16>
    %c4 = arith.constant 4 : index
    %c0_31 = arith.constant 0 : index
    %c0_32 = arith.constant 0 : index
    %44 = vector.load %arg3[%c4, %c0_31, %c0_32] : memref<9x128x128xbf16, #tpu.memory_space<vmem>>, vector<1x128x128xbf16>
    %45 = vector.shape_cast %44 : vector<1x128x128xbf16> to vector<128x128xbf16>
    %cst_33 = arith.constant dense<0.000000e+00> : vector<64x128xf32>
    %46 = tpu.matmul %43, %45, %cst_33 {dimension_numbers = #tpu.dot_dimension_numbers<[1], [0], [0], [1], [0, 0, 1, 1], [], []>} : vector<64x128xbf16>, vector<128x128xbf16>, vector<64x128xf32> -> vector<64x128xf32>
    %47 = arith.addf %38, %46 : vector<64x128xf32>
    %c0_i32_34 = arith.constant 0 : i32
    %48 = arith.addi %1, %c0_i32_34 : i32
    %c2_35 = arith.constant 2 : index
    %49 = arith.index_cast %48 : i32 to index
    %c1_36 = arith.constant 1 : index
    %c0_37 = arith.constant 0 : index
    %50 = vector.load %arg2[%c2_35, %49, %c1_36, %c0_37] : memref<4x9x9x128xbf16, #tpu.memory_space<vmem>>, vector<1x8x8x128xbf16>
    %51 = vector.shape_cast %50 : vector<1x8x8x128xbf16> to vector<8x8x128xbf16>
    %52 = vector.shape_cast %51 : vector<8x8x128xbf16> to vector<64x128xbf16>
    %c5 = arith.constant 5 : index
    %c0_38 = arith.constant 0 : index
    %c0_39 = arith.constant 0 : index
    %53 = vector.load %arg3[%c5, %c0_38, %c0_39] : memref<9x128x128xbf16, #tpu.memory_space<vmem>>, vector<1x128x128xbf16>
    %54 = vector.shape_cast %53 : vector<1x128x128xbf16> to vector<128x128xbf16>
    %cst_40 = arith.constant dense<0.000000e+00> : vector<64x128xf32>
    %55 = tpu.matmul %52, %54, %cst_40 {dimension_numbers = #tpu.dot_dimension_numbers<[1], [0], [0], [1], [0, 0, 1, 1], [], []>} : vector<64x128xbf16>, vector<128x128xbf16>, vector<64x128xf32> -> vector<64x128xf32>
    %56 = arith.addf %47, %55 : vector<64x128xf32>
    %c1_i32 = arith.constant 1 : i32
    %57 = arith.addi %1, %c1_i32 : i32
    %c0_41 = arith.constant 0 : index
    %58 = arith.index_cast %57 : i32 to index
    %c0_42 = arith.constant 0 : index
    %c0_43 = arith.constant 0 : index
    %59 = vector.load %arg2[%c0_41, %58, %c0_42, %c0_43] : memref<4x9x9x128xbf16, #tpu.memory_space<vmem>>, vector<1x8x8x128xbf16>
    %60 = vector.shape_cast %59 : vector<1x8x8x128xbf16> to vector<8x8x128xbf16>
    %61 = vector.shape_cast %60 : vector<8x8x128xbf16> to vector<64x128xbf16>
    %c6 = arith.constant 6 : index
    %c0_44 = arith.constant 0 : index
    %c0_45 = arith.constant 0 : index
    %62 = vector.load %arg3[%c6, %c0_44, %c0_45] : memref<9x128x128xbf16, #tpu.memory_space<vmem>>, vector<1x128x128xbf16>
    %63 = vector.shape_cast %62 : vector<1x128x128xbf16> to vector<128x128xbf16>
    %cst_46 = arith.constant dense<0.000000e+00> : vector<64x128xf32>
    %64 = tpu.matmul %61, %63, %cst_46 {dimension_numbers = #tpu.dot_dimension_numbers<[1], [0], [0], [1], [0, 0, 1, 1], [], []>} : vector<64x128xbf16>, vector<128x128xbf16>, vector<64x128xf32> -> vector<64x128xf32>
    %65 = arith.addf %56, %64 : vector<64x128xf32>
    %c1_i32_47 = arith.constant 1 : i32
    %66 = arith.addi %1, %c1_i32_47 : i32
    %c1_48 = arith.constant 1 : index
    %67 = arith.index_cast %66 : i32 to index
    %c0_49 = arith.constant 0 : index
    %c0_50 = arith.constant 0 : index
    %68 = vector.load %arg2[%c1_48, %67, %c0_49, %c0_50] : memref<4x9x9x128xbf16, #tpu.memory_space<vmem>>, vector<1x8x8x128xbf16>
    %69 = vector.shape_cast %68 : vector<1x8x8x128xbf16> to vector<8x8x128xbf16>
    %70 = vector.shape_cast %69 : vector<8x8x128xbf16> to vector<64x128xbf16>
    %c7 = arith.constant 7 : index
    %c0_51 = arith.constant 0 : index
    %c0_52 = arith.constant 0 : index
    %71 = vector.load %arg3[%c7, %c0_51, %c0_52] : memref<9x128x128xbf16, #tpu.memory_space<vmem>>, vector<1x128x128xbf16>
    %72 = vector.shape_cast %71 : vector<1x128x128xbf16> to vector<128x128xbf16>
    %cst_53 = arith.constant dense<0.000000e+00> : vector<64x128xf32>
    %73 = tpu.matmul %70, %72, %cst_53 {dimension_numbers = #tpu.dot_dimension_numbers<[1], [0], [0], [1], [0, 0, 1, 1], [], []>} : vector<64x128xbf16>, vector<128x128xbf16>, vector<64x128xf32> -> vector<64x128xf32>
    %74 = arith.addf %65, %73 : vector<64x128xf32>
    %c1_i32_54 = arith.constant 1 : i32
    %75 = arith.addi %1, %c1_i32_54 : i32
    %c0_55 = arith.constant 0 : index
    %76 = arith.index_cast %75 : i32 to index
    %c1_56 = arith.constant 1 : index
    %c0_57 = arith.constant 0 : index
    %77 = vector.load %arg2[%c0_55, %76, %c1_56, %c0_57] : memref<4x9x9x128xbf16, #tpu.memory_space<vmem>>, vector<1x8x8x128xbf16>
    %78 = vector.shape_cast %77 : vector<1x8x8x128xbf16> to vector<8x8x128xbf16>
    %79 = vector.shape_cast %78 : vector<8x8x128xbf16> to vector<64x128xbf16>
    %c8 = arith.constant 8 : index
    %c0_58 = arith.constant 0 : index
    %c0_59 = arith.constant 0 : index
    %80 = vector.load %arg3[%c8, %c0_58, %c0_59] : memref<9x128x128xbf16, #tpu.memory_space<vmem>>, vector<1x128x128xbf16>
    %81 = vector.shape_cast %80 : vector<1x128x128xbf16> to vector<128x128xbf16>
    %cst_60 = arith.constant dense<0.000000e+00> : vector<64x128xf32>
    %82 = tpu.matmul %79, %81, %cst_60 {dimension_numbers = #tpu.dot_dimension_numbers<[1], [0], [0], [1], [0, 0, 1, 1], [], []>} : vector<64x128xbf16>, vector<128x128xbf16>, vector<64x128xf32> -> vector<64x128xf32>
    %83 = arith.addf %74, %82 : vector<64x128xf32>
    %c0_61 = arith.constant 0 : index
    %c0_62 = arith.constant 0 : index
    %84 = vector.load %arg4[%c0_61, %c0_62] : memref<1x128xf32, #tpu.memory_space<vmem>>, vector<1x128xf32>
    %85 = vector.broadcast %84 : vector<1x128xf32> to vector<64x128xf32>
    %86 = arith.addf %83, %85 : vector<64x128xf32>
    %cst_63 = arith.constant 0.000000e+00 : f32
    %87 = vector.broadcast %cst_63 : f32 to vector<64x128xf32>
    %88 = arith.maximumf %86, %87 : vector<64x128xf32>
    %89 = vector.shape_cast %88 : vector<64x128xf32> to vector<8x8x128xf32>
    %90 = arith.truncf %89 : vector<8x8x128xf32> to vector<8x8x128xbf16>
    %c0_64 = arith.constant 0 : index
    %c0_65 = arith.constant 0 : index
    %c0_66 = arith.constant 0 : index
    %c0_67 = arith.constant 0 : index
    %91 = vector.load %arg5[%c0_64, %c0_65, %c0_66, %c0_67] : memref<1x8x8x128xbf16, #tpu.memory_space<vmem>>, vector<1x8x8x128xbf16>
    %92 = vector.shape_cast %91 : vector<1x8x8x128xbf16> to vector<8x8x128xbf16>
    %93 = vector.shape_cast %90 : vector<8x8x128xbf16> to vector<1x8x8x128xbf16>
    tpu.vector_store %arg5[%c0_64, %c0_65, %c0_66, %c0_67], %93 {strides = array<i32>} : memref<1x8x8x128xbf16, #tpu.memory_space<vmem>>, vector<1x8x8x128xbf16>,
    return
  }
  func.func @transform_0(%arg0: i32, %arg1: i32) -> (i32, i32, i32, i32) {
    %c0_i32 = arith.constant 0 : i32
    %c0_i32_0 = arith.constant 0 : i32
    %c0_i32_1 = arith.constant 0 : i32
    %c0_i32_2 = arith.constant 0 : i32
    return %arg0, %c0_i32, %c0_i32_0, %c0_i32_1 : i32, i32, i32, i32
  }
  func.func @transform_1(%arg0: i32, %arg1: i32) -> (i32, i32, i32) {
    %c0_i32 = arith.constant 0 : i32
    %c0_i32_0 = arith.constant 0 : i32
    %c0_i32_1 = arith.constant 0 : i32
    %c0_i32_2 = arith.constant 0 : i32
    return %c0_i32, %c0_i32_0, %c0_i32_1 : i32, i32, i32
  }
  func.func @transform_2(%arg0: i32, %arg1: i32) -> (i32, i32) {
    %c0_i32 = arith.constant 0 : i32
    %c0_i32_0 = arith.constant 0 : i32
    %c0_i32_1 = arith.constant 0 : i32
    return %c0_i32, %c0_i32_0 : i32, i32
  }
  func.func @transform_3(%arg0: i32, %arg1: i32) -> (i32, i32, i32, i32) {
    %c0_i32 = arith.constant 0 : i32
    %c0_i32_0 = arith.constant 0 : i32
    %c0_i32_1 = arith.constant 0 : i32
    return %arg0, %arg1, %c0_i32, %c0_i32_0 : i32, i32, i32, i32
  }
}

module attributes {stable_mosaic.version = 11 : i64} {
  func.func @_matmul_bias_kernel(%arg0: i32, %arg1: memref<128x128xbf16, #tpu.memory_space<vmem>>, %arg2: memref<128x128xbf16, #tpu.memory_space<vmem>>, %arg3: memref<1x128xf32, #tpu.memory_space<vmem>>, %arg4: memref<128x128xbf16, #tpu.memory_space<vmem>>) attributes {dimension_semantics = [#tpu.dimension_semantics<parallel>], iteration_bounds = array<i64: 1>, scalar_prefetch = 0 : i64, scratch_operands = 0 : i64, tpu.core_type = #tpu.core_type<tc>, window_params = [{transform_indices = @transform_0, window_bounds = array<i64: 128, 128>}, {pipeline_mode = #tpu.pipeline_mode<synchronous>, transform_indices = @transform_1, window_bounds = array<i64: 128, 128>}, {pipeline_mode = #tpu.pipeline_mode<synchronous>, transform_indices = @transform_2, window_bounds = array<i64: 1, 128>}, {transform_indices = @transform_3, window_bounds = array<i64: 128, 128>}]} {
    %c0 = arith.constant 0 : index
    %c0_0 = arith.constant 0 : index
    %0 = vector.load %arg1[%c0, %c0_0] : memref<128x128xbf16, #tpu.memory_space<vmem>>, vector<128x128xbf16>
    %c0_1 = arith.constant 0 : index
    %c0_2 = arith.constant 0 : index
    %1 = vector.load %arg2[%c0_1, %c0_2] : memref<128x128xbf16, #tpu.memory_space<vmem>>, vector<128x128xbf16>
    %cst = arith.constant dense<0.000000e+00> : vector<128x128xf32>
    %2 = tpu.matmul %0, %1, %cst {dimension_numbers = #tpu.dot_dimension_numbers<[1], [0], [0], [1], [0, 0, 1, 1], [], []>} : vector<128x128xbf16>, vector<128x128xbf16>, vector<128x128xf32> -> vector<128x128xf32>
    %c0_3 = arith.constant 0 : index
    %c0_4 = arith.constant 0 : index
    %3 = vector.load %arg3[%c0_3, %c0_4] : memref<1x128xf32, #tpu.memory_space<vmem>>, vector<1x128xf32>
    %4 = vector.broadcast %3 : vector<1x128xf32> to vector<128x128xf32>
    %5 = arith.addf %2, %4 : vector<128x128xf32>
    %6 = arith.truncf %5 : vector<128x128xf32> to vector<128x128xbf16>
    %c0_5 = arith.constant 0 : index
    %c0_6 = arith.constant 0 : index
    %7 = vector.load %arg4[%c0_5, %c0_6] : memref<128x128xbf16, #tpu.memory_space<vmem>>, vector<128x128xbf16>
    tpu.vector_store %arg4[%c0_5, %c0_6], %6 {strides = array<i32>} : memref<128x128xbf16, #tpu.memory_space<vmem>>, vector<128x128xbf16>,
    return
  }
  func.func @transform_0(%arg0: i32) -> (i32, i32) {
    %c0_i32 = arith.constant 0 : i32
    %c0_i32_0 = arith.constant 0 : i32
    return %arg0, %c0_i32 : i32, i32
  }
  func.func @transform_1(%arg0: i32) -> (i32, i32) {
    %c0_i32 = arith.constant 0 : i32
    %c0_i32_0 = arith.constant 0 : i32
    %c0_i32_1 = arith.constant 0 : i32
    return %c0_i32, %c0_i32_0 : i32, i32
  }
  func.func @transform_2(%arg0: i32) -> (i32, i32) {
    %c0_i32 = arith.constant 0 : i32
    %c0_i32_0 = arith.constant 0 : i32
    %c0_i32_1 = arith.constant 0 : i32
    return %c0_i32, %c0_i32_0 : i32, i32
  }
  func.func @transform_3(%arg0: i32) -> (i32, i32) {
    %c0_i32 = arith.constant 0 : i32
    %c0_i32_0 = arith.constant 0 : i32
    return %arg0, %c0_i32 : i32, i32
  }
}

module attributes {stable_mosaic.version = 11 : i64} {
  func.func @_matmul_bias_kernel(%arg0: i32, %arg1: memref<128x128xbf16, #tpu.memory_space<vmem>>, %arg2: memref<128x128xbf16, #tpu.memory_space<vmem>>, %arg3: memref<1x128xf32, #tpu.memory_space<vmem>>, %arg4: memref<128x128xbf16, #tpu.memory_space<vmem>>, %arg5: memref<128x128xbf16, #tpu.memory_space<vmem>>) attributes {dimension_semantics = [#tpu.dimension_semantics<parallel>], iteration_bounds = array<i64: 1>, scalar_prefetch = 0 : i64, scratch_operands = 0 : i64, tpu.core_type = #tpu.core_type<tc>, window_params = [{transform_indices = @transform_0, window_bounds = array<i64: 128, 128>}, {pipeline_mode = #tpu.pipeline_mode<synchronous>, transform_indices = @transform_1, window_bounds = array<i64: 128, 128>}, {pipeline_mode = #tpu.pipeline_mode<synchronous>, transform_indices = @transform_2, window_bounds = array<i64: 1, 128>}, {transform_indices = @transform_3, window_bounds = array<i64: 128, 128>}, {transform_indices = @transform_4, window_bounds = array<i64: 128, 128>}]} {
    %c0 = arith.constant 0 : index
    %c0_0 = arith.constant 0 : index
    %0 = vector.load %arg1[%c0, %c0_0] : memref<128x128xbf16, #tpu.memory_space<vmem>>, vector<128x128xbf16>
    %c0_1 = arith.constant 0 : index
    %c0_2 = arith.constant 0 : index
    %1 = vector.load %arg2[%c0_1, %c0_2] : memref<128x128xbf16, #tpu.memory_space<vmem>>, vector<128x128xbf16>
    %cst = arith.constant dense<0.000000e+00> : vector<128x128xf32>
    %2 = tpu.matmul %0, %1, %cst {dimension_numbers = #tpu.dot_dimension_numbers<[1], [0], [0], [1], [0, 0, 1, 1], [], []>} : vector<128x128xbf16>, vector<128x128xbf16>, vector<128x128xf32> -> vector<128x128xf32>
    %c0_3 = arith.constant 0 : index
    %c0_4 = arith.constant 0 : index
    %3 = vector.load %arg3[%c0_3, %c0_4] : memref<1x128xf32, #tpu.memory_space<vmem>>, vector<1x128xf32>
    %4 = vector.broadcast %3 : vector<1x128xf32> to vector<128x128xf32>
    %5 = arith.addf %2, %4 : vector<128x128xf32>
    %c0_5 = arith.constant 0 : index
    %c0_6 = arith.constant 0 : index
    %6 = vector.load %arg4[%c0_5, %c0_6] : memref<128x128xbf16, #tpu.memory_space<vmem>>, vector<128x128xbf16>
    %7 = arith.extf %6 : vector<128x128xbf16> to vector<128x128xf32>
    %8 = arith.addf %5, %7 : vector<128x128xf32>
    %cst_7 = arith.constant 0.000000e+00 : f32
    %9 = vector.broadcast %cst_7 : f32 to vector<128x128xf32>
    %10 = arith.maximumf %8, %9 : vector<128x128xf32>
    %11 = arith.truncf %10 : vector<128x128xf32> to vector<128x128xbf16>
    %c0_8 = arith.constant 0 : index
    %c0_9 = arith.constant 0 : index
    %12 = vector.load %arg5[%c0_8, %c0_9] : memref<128x128xbf16, #tpu.memory_space<vmem>>, vector<128x128xbf16>
    tpu.vector_store %arg5[%c0_8, %c0_9], %11 {strides = array<i32>} : memref<128x128xbf16, #tpu.memory_space<vmem>>, vector<128x128xbf16>,
    return
  }
  func.func @transform_0(%arg0: i32) -> (i32, i32) {
    %c0_i32 = arith.constant 0 : i32
    %c0_i32_0 = arith.constant 0 : i32
    return %arg0, %c0_i32 : i32, i32
  }
  func.func @transform_1(%arg0: i32) -> (i32, i32) {
    %c0_i32 = arith.constant 0 : i32
    %c0_i32_0 = arith.constant 0 : i32
    %c0_i32_1 = arith.constant 0 : i32
    return %c0_i32, %c0_i32_0 : i32, i32
  }
  func.func @transform_2(%arg0: i32) -> (i32, i32) {
    %c0_i32 = arith.constant 0 : i32
    %c0_i32_0 = arith.constant 0 : i32
    %c0_i32_1 = arith.constant 0 : i32
    return %c0_i32, %c0_i32_0 : i32, i32
  }
  func.func @transform_3(%arg0: i32) -> (i32, i32) {
    %c0_i32 = arith.constant 0 : i32
    %c0_i32_0 = arith.constant 0 : i32
    return %arg0, %c0_i32 : i32, i32
  }
  func.func @transform_4(%arg0: i32) -> (i32, i32) {
    %c0_i32 = arith.constant 0 : i32
    %c0_i32_0 = arith.constant 0 : i32
    return %arg0, %c0_i32 : i32, i32
  }
}

</mosaic_0001>

<llo_original>
// kernel: bottleneck_forward.4
$region0: #{bottleneck_forward.4}
  #allocation0 [shape = 'u32[]', space=smem, size = 0x4, offset = 0x4, fixed_abs, tag = 'smem constant byte address 0x4 - core index']
  #allocation1 [shape = 'u32[72,128]{1,0:T(1,128)}', space=vmem, size = 0x9000, scoped, tag = 'internal scratch']
  %s0 = inlined_call_operand.vmem [shape: bf16[512,128], index: 0, kind: input, shape index: {}]
  %s1 = inlined_call_operand.vmem [shape: bf16[128,128], index: 1, kind: input, shape index: {}]
  %s2 = inlined_call_operand.vmem [shape: f32[1,128], index: 2, kind: input, shape index: {}]
  %s3 = inlined_call_operand.vmem [shape: bf16[512,128], index: 3, kind: output, shape index: {}]
  %s4 = sld [smem:[#allocation0]]
  $region22: #{bottleneck_forward.4} parent=0
    _
  %s6 = ssub.s32 1, %s4
  %s7 = scalar_select 0, %s6, %s4
  // Predicated region
  $region2: #{bottleneck_forward.4} parent=0 // pred_check
    _
  $region3: #{bottleneck_forward.4} parent=0 // pred_check_branch
    %9 = sbr.rel (0) target = $region5
  $region4: #{bottleneck_forward.4} parent=0 // pred_region
    _
  $region5: #{bottleneck_forward.4} parent=0 // pred_fallthru
    _
  // Predicated region
  $region6: #{bottleneck_forward.4} parent=0 // pred_check
    _
  $region7: #{bottleneck_forward.4} parent=0 // pred_check_branch
    %11 = sbr.rel (0) target = $region9
  $region8: #{bottleneck_forward.4} parent=0 // pred_region
    _
  $region9: #{bottleneck_forward.4} parent=0 // pred_fallthru
    _
  // Predicated region
  $region10: #{bottleneck_forward.4} parent=0 // pred_check
    _
  $region11: #{bottleneck_forward.4} parent=0 // pred_check_branch
    %13 = sbr.rel (0) target = $region13
  $region12: #{bottleneck_forward.4} parent=0 // pred_region
    _
  $region13: #{bottleneck_forward.4} parent=0 // pred_fallthru
    _
  %v14 = vld [vmem:[%s0] sm:$0xf]
  %v15 = vld [vmem:[%s0 + $0x4] sm:$0xf]
  %v16 = vld [vmem:[%s0 + $0x8] sm:$0xf]
  %v17 = vld [vmem:[%s0 + $0xc] sm:$0xf]
  %v18 = vld [vmem:[%s0 + $0x10] sm:$0xf]
  %v19 = vld [vmem:[%s0 + $0x14] sm:$0xf]
  %v20 = vld [vmem:[%s0 + $0x18] sm:$0xf]
  %v21 = vld [vmem:[%s0 + $0x1c] sm:$0xf]
  %v22 = vld [vmem:[%s0 + $0x20] sm:$0xf]
  %v23 = vld [vmem:[%s0 + $0x24] sm:$0xf]
  %v24 = vld [vmem:[%s0 + $0x28] sm:$0xf]
  %v25 = vld [vmem:[%s0 + $0x2c] sm:$0xf]
  %v26 = vld [vmem:[%s0 + $0x30] sm:$0xf]
  %v27 = vld [vmem:[%s0 + $0x34] sm:$0xf]
  %v28 = vld [vmem:[%s0 + $0x38] sm:$0xf]
  %v29 = vld [vmem:[%s0 + $0x3c] sm:$0xf]
  %v30 = vld [vmem:[%s0 + $0x40] sm:$0xf]
  %v31 = vld [vmem:[%s0 + $0x44] sm:$0xf]
  %v32 = vld [vmem:[%s0 + $0x48] sm:$0xf]
  %v33 = vld [vmem:[%s0 + $0x4c] sm:$0xf]
  %v34 = vld [vmem:[%s0 + $0x50] sm:$0xf]
  %v35 = vld [vmem:[%s0 + $0x54] sm:$0xf]
  %v36 = vld [vmem:[%s0 + $0x58] sm:$0xf]
  %v37 = vld [vmem:[%s0 + $0x5c] sm:$0xf]
  %v38 = vld [vmem:[%s0 + $0x60] sm:$0xf]
  %v39 = vld [vmem:[%s0 + $0x64] sm:$0xf]
  %v40 = vld [vmem:[%s0 + $0x68] sm:$0xf]
  %v41 = vld [vmem:[%s0 + $0x6c] sm:$0xf]
  %v42 = vld [vmem:[%s0 + $0x70] sm:$0xf]
  %v43 = vld [vmem:[%s0 + $0x74] sm:$0xf]
  %v44 = vld [vmem:[%s0 + $0x78] sm:$0xf]
  %v45 = vld [vmem:[%s0 + $0x7c] sm:$0xf]
  %v46 = vld [vmem:[%s0 + $0x80] sm:$0xf]
  %v47 = vld [vmem:[%s0 + $0x84] sm:$0xf]
  %v48 = vld [vmem:[%s0 + $0x88] sm:$0xf]
  %v49 = vld [vmem:[%s0 + $0x8c] sm:$0xf]
  %v50 = vld [vmem:[%s0 + $0x90] sm:$0xf]
  %v51 = vld [vmem:[%s0 + $0x94] sm:$0xf]
  %v52 = vld [vmem:[%s0 + $0x98] sm:$0xf]
  %v53 = vld [vmem:[%s0 + $0x9c] sm:$0xf]
  %v54 = vld [vmem:[%s0 + $0xa0] sm:$0xf]
  %v55 = vld [vmem:[%s0 + $0xa4] sm:$0xf]
  %v56 = vld [vmem:[%s0 + $0xa8] sm:$0xf]
  %v57 = vld [vmem:[%s0 + $0xac] sm:$0xf]
  %v58 = vld [vmem:[%s0 + $0xb0] sm:$0xf]
  %v59 = vld [vmem:[%s0 + $0xb4] sm:$0xf]
  %v60 = vld [vmem:[%s0 + $0xb8] sm:$0xf]
  %v61 = vld [vmem:[%s0 + $0xbc] sm:$0xf]
  %v62 = vld [vmem:[%s0 + $0xc0] sm:$0xf]
  %v63 = vld [vmem:[%s0 + $0xc4] sm:$0xf]
  %v64 = vld [vmem:[%s0 + $0xc8] sm:$0xf]
  %v65 = vld [vmem:[%s0 + $0xcc] sm:$0xf]
  %v66 = vld [vmem:[%s0 + $0xd0] sm:$0xf]
  %v67 = vld [vmem:[%s0 + $0xd4] sm:$0xf]
  %v68 = vld [vmem:[%s0 + $0xd8] sm:$0xf]
  %v69 = vld [vmem:[%s0 + $0xdc] sm:$0xf]
  %v70 = vld [vmem:[%s0 + $0xe0] sm:$0xf]
  %v71 = vld [vmem:[%s0 + $0xe4] sm:$0xf]
  %v72 = vld [vmem:[%s0 + $0xe8] sm:$0xf]
  %v73 = vld [vmem:[%s0 + $0xec] sm:$0xf]
  %v74 = vld [vmem:[%s0 + $0xf0] sm:$0xf]
  %v75 = vld [vmem:[%s0 + $0xf4] sm:$0xf]
  %v76 = vld [vmem:[%s0 + $0xf8] sm:$0xf]
  %v77 = vld [vmem:[%s0 + $0xfc] sm:$0xf]
  %v78 = vld [vmem:[%s1] sm:$0xf]
  %v79 = vld [vmem:[%s1 + $0x4] sm:$0xf]
  %v80 = vld [vmem:[%s1 + $0x8] sm:$0xf]
  %v81 = vld [vmem:[%s1 + $0xc] sm:$0xf]
  %v82 = vld [vmem:[%s1 + $0x10] sm:$0xf]
  %v83 = vld [vmem:[%s1 + $0x14] sm:$0xf]
  %v84 = vld [vmem:[%s1 + $0x18] sm:$0xf]
  %v85 = vld [vmem:[%s1 + $0x1c] sm:$0xf]
  %v86 = vld [vmem:[%s1 + $0x20] sm:$0xf]
  %v87 = vld [vmem:[%s1 + $0x24] sm:$0xf]
  %v88 = vld [vmem:[%s1 + $0x28] sm:$0xf]
  %v89 = vld [vmem:[%s1 + $0x2c] sm:$0xf]
  %v90 = vld [vmem:[%s1 + $0x30] sm:$0xf]
  %v91 = vld [vmem:[%s1 + $0x34] sm:$0xf]
  %v92 = vld [vmem:[%s1 + $0x38] sm:$0xf]
  %v93 = vld [vmem:[%s1 + $0x3c] sm:$0xf]
  %v94 = vld [vmem:[%s2] sm:$0x1]
  %v96 = vperm.slane %v94, 0
  %v162 = vunpack.c.l.b16 %v14
  %v163 = vunpack.c.l.b16 %v15
  %v164 = vunpack.c.l.b16 %v16
  %v165 = vunpack.c.l.b16 %v17
  %v166 = vunpack.c.l.b16 %v18
  %v167 = vunpack.c.l.b16 %v19
  %v168 = vunpack.c.l.b16 %v20
  %v169 = vunpack.c.l.b16 %v21
  %v170 = vunpack.c.l.b16 %v22
  %v171 = vunpack.c.l.b16 %v23
  %v172 = vunpack.c.l.b16 %v24
  %v173 = vunpack.c.l.b16 %v25
  %v174 = vunpack.c.l.b16 %v26
  %v175 = vunpack.c.l.b16 %v27
  %v176 = vunpack.c.l.b16 %v28
  %v177 = vunpack.c.l.b16 %v29
  %v178 = vunpack.c.l.b16 %v30
  %v179 = vunpack.c.l.b16 %v31
  %v180 = vunpack.c.l.b16 %v32
  %v181 = vunpack.c.l.b16 %v33
  %v182 = vunpack.c.l.b16 %v34
  %v183 = vunpack.c.l.b16 %v35
  %v184 = vunpack.c.l.b16 %v36
  %v185 = vunpack.c.l.b16 %v37
  %v186 = vunpack.c.l.b16 %v38
  %v187 = vunpack.c.l.b16 %v39
  %v188 = vunpack.c.l.b16 %v40
  %v189 = vunpack.c.l.b16 %v41
  %v190 = vunpack.c.l.b16 %v42
  %v191 = vunpack.c.l.b16 %v43
  %v192 = vunpack.c.l.b16 %v44
  %v193 = vunpack.c.l.b16 %v45
  %v194 = vunpack.c.l.b16 %v46
  %v195 = vunpack.c.l.b16 %v47
  %v196 = vunpack.c.l.b16 %v48
  %v197 = vunpack.c.l.b16 %v49
  %v198 = vunpack.c.l.b16 %v50
  %v199 = vunpack.c.l.b16 %v51
  %v200 = vunpack.c.l.b16 %v52
  %v201 = vunpack.c.l.b16 %v53
  %v202 = vunpack.c.l.b16 %v54
  %v203 = vunpack.c.l.b16 %v55
  %v204 = vunpack.c.l.b16 %v56
  %v205 = vunpack.c.l.b16 %v57
  %v206 = vunpack.c.l.b16 %v58
  %v207 = vunpack.c.l.b16 %v59
  %v208 = vunpack.c.l.b16 %v60
  %v209 = vunpack.c.l.b16 %v61
  %v210 = vunpack.c.l.b16 %v62
  %v211 = vunpack.c.l.b16 %v63
  %v212 = vunpack.c.l.b16 %v64
  %v213 = vunpack.c.l.b16 %v65
  %v214 = vunpack.c.l.b16 %v66
  %v215 = vunpack.c.l.b16 %v67
  %v216 = vunpack.c.l.b16 %v68
  %v217 = vunpack.c.l.b16 %v69
  %v218 = vunpack.c.l.b16 %v70
  %v219 = vunpack.c.l.b16 %v71
  %v220 = vunpack.c.l.b16 %v72
  %v221 = vunpack.c.l.b16 %v73
  %v222 = vunpack.c.l.b16 %v74
  %v223 = vunpack.c.l.b16 %v75
  %v224 = vunpack.c.l.b16 %v76
  %v225 = vunpack.c.l.b16 %v77
  %v226 = vpack.c.b16 %v163, %v162
  %v227 = vpack.c.b16 %v165, %v164
  %v228 = vpack.c.b16 %v167, %v166
  %v229 = vpack.c.b16 %v169, %v168
  %v230 = vpack.c.b16 %v171, %v170
  %v231 = vpack.c.b16 %v173, %v172
  %v232 = vpack.c.b16 %v175, %v174
  %v233 = vpack.c.b16 %v177, %v176
  %v234 = vpack.c.b16 %v179, %v178
  %v235 = vpack.c.b16 %v181, %v180
  %v236 = vpack.c.b16 %v183, %v182
  %v237 = vpack.c.b16 %v185, %v184
  %v238 = vpack.c.b16 %v187, %v186
  %v239 = vpack.c.b16 %v189, %v188
  %v240 = vpack.c.b16 %v191, %v190
  %v241 = vpack.c.b16 %v193, %v192
  %v242 = vpack.c.b16 %v195, %v194
  %v243 = vpack.c.b16 %v197, %v196
  %v244 = vpack.c.b16 %v199, %v198
  %v245 = vpack.c.b16 %v201, %v200
  %v246 = vpack.c.b16 %v203, %v202
  %v247 = vpack.c.b16 %v205, %v204
  %v248 = vpack.c.b16 %v207, %v206
  %v249 = vpack.c.b16 %v209, %v208
  %v250 = vpack.c.b16 %v211, %v210
  %v251 = vpack.c.b16 %v213, %v212
  %v252 = vpack.c.b16 %v215, %v214
  %v253 = vpack.c.b16 %v217, %v216
  %v254 = vpack.c.b16 %v219, %v218
  %v255 = vpack.c.b16 %v221, %v220
  %v256 = vpack.c.b16 %v223, %v222
  %v257 = vpack.c.b16 %v225, %v224
  %v306 = vunpack.c.l.b16 %v78
  %v307 = vunpack.c.l.b16 %v79
  %v308 = vunpack.c.l.b16 %v80
  %v309 = vunpack.c.l.b16 %v81
  %v310 = vunpack.c.l.b16 %v82
  %v311 = vunpack.c.l.b16 %v83
  %v312 = vunpack.c.l.b16 %v84
  %v313 = vunpack.c.l.b16 %v85
  %v314 = vunpack.c.l.b16 %v86
  %v315 = vunpack.c.l.b16 %v87
  %v316 = vunpack.c.l.b16 %v88
  %v317 = vunpack.c.l.b16 %v89
  %v318 = vunpack.c.l.b16 %v90
  %v319 = vunpack.c.l.b16 %v91
  %v320 = vunpack.c.l.b16 %v92
  %v321 = vunpack.c.l.b16 %v93
  %v322 = vpack.c.b16 %v307, %v306
  %v323 = vpack.c.b16 %v309, %v308
  %v324 = vpack.c.b16 %v311, %v310
  %v325 = vpack.c.b16 %v313, %v312
  %v326 = vpack.c.b16 %v315, %v314
  %v327 = vpack.c.b16 %v317, %v316
  %v328 = vpack.c.b16 %v319, %v318
  %v329 = vpack.c.b16 %v321, %v320
  %338 = vmatpush.bf16.msra.mxu0 %v329
  %339 = vmatpush.bf16.msra.mxu0 %v328
  %340 = vmatpush.bf16.msra.mxu0 %v327
  %341 = vmatpush.bf16.msra.mxu0 %v326
  %342 = vmatpush.bf16.msra.mxu0 %v325
  %343 = vmatpush.bf16.msra.mxu0 %v324
  %344 = vmatpush.bf16.msra.mxu0 %v323
  %345 = vmatpush.bf16.msra.mxu0 %v322
  %346 = vmatmul.bf16.gmra.mxu0 %v226
  %v347 = vpop.f32.mrf.mxu0
  %v348 = vadd.f32 %v96, %v347
  %v349 = vpop.f32.mrf.mxu0
  %v350 = vadd.f32 %v96, %v349
  %351 = vmatmul.bf16.gmra.mxu0 %v227
  %v352 = vpop.f32.mrf.mxu0
  %v353 = vadd.f32 %v96, %v352
  %v354 = vpop.f32.mrf.mxu0
  %v355 = vadd.f32 %v96, %v354
  %356 = vmatmul.bf16.gmra.mxu0 %v228
  %v357 = vpop.f32.mrf.mxu0
  %v358 = vadd.f32 %v96, %v357
  %v359 = vpop.f32.mrf.mxu0
  %v360 = vadd.f32 %v96, %v359
  %361 = vmatmul.bf16.gmra.mxu0 %v229
  %v362 = vpop.f32.mrf.mxu0
  %v363 = vadd.f32 %v96, %v362
  %v364 = vpop.f32.mrf.mxu0
  %v365 = vadd.f32 %v96, %v364
  %366 = vmatmul.bf16.gmra.mxu0 %v230
  %v367 = vpop.f32.mrf.mxu0
  %v368 = vadd.f32 %v96, %v367
  %v369 = vpop.f32.mrf.mxu0
  %v370 = vadd.f32 %v96, %v369
  %371 = vmatmul.bf16.gmra.mxu0 %v231
  %v372 = vpop.f32.mrf.mxu0
  %v373 = vadd.f32 %v96, %v372
  %v374 = vpop.f32.mrf.mxu0
  %v375 = vadd.f32 %v96, %v374
  %376 = vmatmul.bf16.gmra.mxu0 %v232
  %v377 = vpop.f32.mrf.mxu0
  %v378 = vadd.f32 %v96, %v377
  %v379 = vpop.f32.mrf.mxu0
  %v380 = vadd.f32 %v96, %v379
  %381 = vmatmul.bf16.gmra.mxu0 %v233
  %v382 = vpop.f32.mrf.mxu0
  %v383 = vadd.f32 %v96, %v382
  %v384 = vpop.f32.mrf.mxu0
  %v385 = vadd.f32 %v96, %v384
  %386 = vmatmul.bf16.gmra.mxu0 %v234
  %v387 = vpop.f32.mrf.mxu0
  %v388 = vadd.f32 %v96, %v387
  %v389 = vpop.f32.mrf.mxu0
  %v390 = vadd.f32 %v96, %v389
  %391 = vmatmul.bf16.gmra.mxu0 %v235
  %v392 = vpop.f32.mrf.mxu0
  %v393 = vadd.f32 %v96, %v392
  %v394 = vpop.f32.mrf.mxu0
  %v395 = vadd.f32 %v96, %v394
  %396 = vmatmul.bf16.gmra.mxu0 %v236
  %v397 = vpop.f32.mrf.mxu0
  %v398 = vadd.f32 %v96, %v397
  %v399 = vpop.f32.mrf.mxu0
  %v400 = vadd.f32 %v96, %v399
  %401 = vmatmul.bf16.gmra.mxu0 %v237
  %v402 = vpop.f32.mrf.mxu0
  %v403 = vadd.f32 %v96, %v402
  %v404 = vpop.f32.mrf.mxu0
  %v405 = vadd.f32 %v96, %v404
  %406 = vmatmul.bf16.gmra.mxu0 %v238
  %v407 = vpop.f32.mrf.mxu0
  %v408 = vadd.f32 %v96, %v407
  %v409 = vpop.f32.mrf.mxu0
  %v410 = vadd.f32 %v96, %v409
  %411 = vmatmul.bf16.gmra.mxu0 %v239
  %v412 = vpop.f32.mrf.mxu0
  %v413 = vadd.f32 %v96, %v412
  %v414 = vpop.f32.mrf.mxu0
  %v415 = vadd.f32 %v96, %v414
  %416 = vmatmul.bf16.gmra.mxu0 %v240
  %v417 = vpop.f32.mrf.mxu0
  %v418 = vadd.f32 %v96, %v417
  %v419 = vpop.f32.mrf.mxu0
  %v420 = vadd.f32 %v96, %v419
  %421 = vmatmul.bf16.gmra.mxu0 %v241
  %v422 = vpop.f32.mrf.mxu0
  %v423 = vadd.f32 %v96, %v422
  %v424 = vpop.f32.mrf.mxu0
  %v425 = vadd.f32 %v96, %v424
  %426 = vmatmul.bf16.gmra.mxu0 %v242
  %v427 = vpop.f32.mrf.mxu0
  %v428 = vadd.f32 %v96, %v427
  %v429 = vpop.f32.mrf.mxu0
  %v430 = vadd.f32 %v96, %v429
  %431 = vmatmul.bf16.gmra.mxu0 %v243
  %v432 = vpop.f32.mrf.mxu0
  %v433 = vadd.f32 %v96, %v432
  %v434 = vpop.f32.mrf.mxu0
  %v435 = vadd.f32 %v96, %v434
  %436 = vmatmul.bf16.gmra.mxu0 %v244
  %v437 = vpop.f32.mrf.mxu0
  %v438 = vadd.f32 %v96, %v437
  %v439 = vpop.f32.mrf.mxu0
  %v440 = vadd.f32 %v96, %v439
  %441 = vmatmul.bf16.gmra.mxu0 %v245
  %v442 = vpop.f32.mrf.mxu0
  %v443 = vadd.f32 %v96, %v442
  %v444 = vpop.f32.mrf.mxu0
  %v445 = vadd.f32 %v96, %v444
  %446 = vmatmul.bf16.gmra.mxu0 %v246
  %v447 = vpop.f32.mrf.mxu0
  %v448 = vadd.f32 %v96, %v447
  %v449 = vpop.f32.mrf.mxu0
  %v450 = vadd.f32 %v96, %v449
  %451 = vmatmul.bf16.gmra.mxu0 %v247
  %v452 = vpop.f32.mrf.mxu0
  %v453 = vadd.f32 %v96, %v452
  %v454 = vpop.f32.mrf.mxu0
  %v455 = vadd.f32 %v96, %v454
  %456 = vmatmul.bf16.gmra.mxu0 %v248
  %v457 = vpop.f32.mrf.mxu0
  %v458 = vadd.f32 %v96, %v457
  %v459 = vpop.f32.mrf.mxu0
  %v460 = vadd.f32 %v96, %v459
  %461 = vmatmul.bf16.gmra.mxu0 %v249
  %v462 = vpop.f32.mrf.mxu0
  %v463 = vadd.f32 %v96, %v462
  %v464 = vpop.f32.mrf.mxu0
  %v465 = vadd.f32 %v96, %v464
  %466 = vmatmul.bf16.gmra.mxu0 %v250
  %v467 = vpop.f32.mrf.mxu0
  %v468 = vadd.f32 %v96, %v467
  %v469 = vpop.f32.mrf.mxu0
  %v470 = vadd.f32 %v96, %v469
  %471 = vmatmul.bf16.gmra.mxu0 %v251
  %v472 = vpop.f32.mrf.mxu0
  %v473 = vadd.f32 %v96, %v472
  %v474 = vpop.f32.mrf.mxu0
  %v475 = vadd.f32 %v96, %v474
  %476 = vmatmul.bf16.gmra.mxu0 %v252
  %v477 = vpop.f32.mrf.mxu0
  %v478 = vadd.f32 %v96, %v477
  %v479 = vpop.f32.mrf.mxu0
  %v480 = vadd.f32 %v96, %v479
  %481 = vmatmul.bf16.gmra.mxu0 %v253
  %v482 = vpop.f32.mrf.mxu0
  %v483 = vadd.f32 %v96, %v482
  %v484 = vpop.f32.mrf.mxu0
  %v485 = vadd.f32 %v96, %v484
  %486 = vmatmul.bf16.gmra.mxu0 %v254
  %v487 = vpop.f32.mrf.mxu0
  %v488 = vadd.f32 %v96, %v487
  %v489 = vpop.f32.mrf.mxu0
  %v490 = vadd.f32 %v96, %v489
  %491 = vmatmul.bf16.gmra.mxu0 %v255
  %v492 = vpop.f32.mrf.mxu0
  %v493 = vadd.f32 %v96, %v492
  %v494 = vpop.f32.mrf.mxu0
  %v495 = vadd.f32 %v96, %v494
  %496 = vmatmul.bf16.gmra.mxu0 %v256
  %v497 = vpop.f32.mrf.mxu0
  %v498 = vadd.f32 %v96, %v497
  %v499 = vpop.f32.mrf.mxu0
  %v500 = vadd.f32 %v96, %v499
  %501 = vmatmul.bf16.gmra.mxu0 %v257
  %v502 = vpop.f32.mrf.mxu0
  %v503 = vadd.f32 %v96, %v502
  %v504 = vpop.f32.mrf.mxu0
  %v505 = vadd.f32 %v96, %v504
  %506 = vdwg.mxu0
  %v507 = vmax.f32 %v348, 0.0
  %v508 = vmax.f32 %v350, 0.0
  %v509 = vmax.f32 %v353, 0.0
  %v510 = vmax.f32 %v355, 0.0
  %v511 = vmax.f32 %v358, 0.0
  %v512 = vmax.f32 %v360, 0.0
  %v513 = vmax.f32 %v363, 0.0
  %v514 = vmax.f32 %v365, 0.0
  %v515 = vmax.f32 %v368, 0.0
  %v516 = vmax.f32 %v370, 0.0
  %v517 = vmax.f32 %v373, 0.0
  %v518 = vmax.f32 %v375, 0.0
  %v519 = vmax.f32 %v378, 0.0
  %v520 = vmax.f32 %v380, 0.0
  %v521 = vmax.f32 %v383, 0.0
  %v522 = vmax.f32 %v385, 0.0
  %v523 = vmax.f32 %v388, 0.0
  %v524 = vmax.f32 %v390, 0.0
  %v525 = vmax.f32 %v393, 0.0
  %v526 = vmax.f32 %v395, 0.0
  %v527 = vmax.f32 %v398, 0.0
  %v528 = vmax.f32 %v400, 0.0
  %v529 = vmax.f32 %v403, 0.0
  %v530 = vmax.f32 %v405, 0.0
  %v531 = vmax.f32 %v408, 0.0
  %v532 = vmax.f32 %v410, 0.0
  %v533 = vmax.f32 %v413, 0.0
  %v534 = vmax.f32 %v415, 0.0
  %v535 = vmax.f32 %v418, 0.0
  %v536 = vmax.f32 %v420, 0.0
  %v537 = vmax.f32 %v423, 0.0
  %v538 = vmax.f32 %v425, 0.0
  %v539 = vmax.f32 %v428, 0.0
  %v540 = vmax.f32 %v430, 0.0
  %v541 = vmax.f32 %v433, 0.0
  %v542 = vmax.f32 %v435, 0.0
  %v543 = vmax.f32 %v438, 0.0
  %v544 = vmax.f32 %v440, 0.0
  %v545 = vmax.f32 %v443, 0.0
  %v546 = vmax.f32 %v445, 0.0
  %v547 = vmax.f32 %v448, 0.0
  %v548 = vmax.f32 %v450, 0.0
  %v549 = vmax.f32 %v453, 0.0
  %v550 = vmax.f32 %v455, 0.0
  %v551 = vmax.f32 %v458, 0.0
  %v552 = vmax.f32 %v460, 0.0
  %v553 = vmax.f32 %v463, 0.0
  %v554 = vmax.f32 %v465, 0.0
  %v555 = vmax.f32 %v468, 0.0
  %v556 = vmax.f32 %v470, 0.0
  %v557 = vmax.f32 %v473, 0.0
  %v558 = vmax.f32 %v475, 0.0
  %v559 = vmax.f32 %v478, 0.0
  %v560 = vmax.f32 %v480, 0.0
  %v561 = vmax.f32 %v483, 0.0
  %v562 = vmax.f32 %v485, 0.0
  %v563 = vmax.f32 %v488, 0.0
  %v564 = vmax.f32 %v490, 0.0
  %v565 = vmax.f32 %v493, 0.0
  %v566 = vmax.f32 %v495, 0.0
  %v567 = vmax.f32 %v498, 0.0
  %v568 = vmax.f32 %v500, 0.0
  %v569 = vmax.f32 %v503, 0.0
  %v570 = vmax.f32 %v505, 0.0
  %v571 = vpack.c.bf16 %v507, %v507
  %v572 = vpack.c.bf16 %v508, %v508
  %v573 = vpack.c.bf16 %v509, %v509
  %v574 = vpack.c.bf16 %v510, %v510
  %v575 = vpack.c.bf16 %v511, %v511
  %v576 = vpack.c.bf16 %v512, %v512
  %v577 = vpack.c.bf16 %v513, %v513
  %v578 = vpack.c.bf16 %v514, %v514
  %v579 = vpack.c.bf16 %v515, %v515
  %v580 = vpack.c.bf16 %v516, %v516
  %v581 = vpack.c.bf16 %v517, %v517
  %v582 = vpack.c.bf16 %v518, %v518
  %v583 = vpack.c.bf16 %v519, %v519
  %v584 = vpack.c.bf16 %v520, %v520
  %v585 = vpack.c.bf16 %v521, %v521
  %v586 = vpack.c.bf16 %v522, %v522
  %v587 = vpack.c.bf16 %v523, %v523
  %v588 = vpack.c.bf16 %v524, %v524
  %v589 = vpack.c.bf16 %v525, %v525
  %v590 = vpack.c.bf16 %v526, %v526
  %v591 = vpack.c.bf16 %v527, %v527
  %v592 = vpack.c.bf16 %v528, %v528
  %v593 = vpack.c.bf16 %v529, %v529
  %v594 = vpack.c.bf16 %v530, %v530
  %v595 = vpack.c.bf16 %v531, %v531
  %v596 = vpack.c.bf16 %v532, %v532
  %v597 = vpack.c.bf16 %v533, %v533
  %v598 = vpack.c.bf16 %v534, %v534
  %v599 = vpack.c.bf16 %v535, %v535
  %v600 = vpack.c.bf16 %v536, %v536
  %v601 = vpack.c.bf16 %v537, %v537
  %v602 = vpack.c.bf16 %v538, %v538
  %v603 = vpack.c.bf16 %v539, %v539
  %v604 = vpack.c.bf16 %v540, %v540
  %v605 = vpack.c.bf16 %v541, %v541
  %v606 = vpack.c.bf16 %v542, %v542
  %v607 = vpack.c.bf16 %v543, %v543
  %v608 = vpack.c.bf16 %v544, %v544
  %v609 = vpack.c.bf16 %v545, %v545
  %v610 = vpack.c.bf16 %v546, %v546
  %v611 = vpack.c.bf16 %v547, %v547
  %v612 = vpack.c.bf16 %v548, %v548
  %v613 = vpack.c.bf16 %v549, %v549
  %v614 = vpack.c.bf16 %v550, %v550
  %v615 = vpack.c.bf16 %v551, %v551
  %v616 = vpack.c.bf16 %v552, %v552
  %v617 = vpack.c.bf16 %v553, %v553
  %v618 = vpack.c.bf16 %v554, %v554
  %v619 = vpack.c.bf16 %v555, %v555
  %v620 = vpack.c.bf16 %v556, %v556
  %v621 = vpack.c.bf16 %v557, %v557
  %v622 = vpack.c.bf16 %v558, %v558
  %v623 = vpack.c.bf16 %v559, %v559
  %v624 = vpack.c.bf16 %v560, %v560
  %v625 = vpack.c.bf16 %v561, %v561
  %v626 = vpack.c.bf16 %v562, %v562
  %v627 = vpack.c.bf16 %v563, %v563
  %v628 = vpack.c.bf16 %v564, %v564
  %v629 = vpack.c.bf16 %v565, %v565
  %v630 = vpack.c.bf16 %v566, %v566
  %v631 = vpack.c.bf16 %v567, %v567
  %v632 = vpack.c.bf16 %v568, %v568
  %v633 = vpack.c.bf16 %v569, %v569
  %v634 = vpack.c.bf16 %v570, %v570
  %635 = vst [vmem:[%s3] sm:$0xf] %v571
  %636 = vst [vmem:[%s3 + $0x4] sm:$0xf] %v572
  %637 = vst [vmem:[%s3 + $0x8] sm:$0xf] %v573
  %638 = vst [vmem:[%s3 + $0xc] sm:$0xf] %v574
  %639 = vst [vmem:[%s3 + $0x10] sm:$0xf] %v575
  %640 = vst [vmem:[%s3 + $0x14] sm:$0xf] %v576
  %641 = vst [vmem:[%s3 + $0x18] sm:$0xf] %v577
  %642 = vst [vmem:[%s3 + $0x1c] sm:$0xf] %v578
  %643 = vst [vmem:[%s3 + $0x20] sm:$0xf] %v579
  %644 = vst [vmem:[%s3 + $0x24] sm:$0xf] %v580
  %645 = vst [vmem:[%s3 + $0x28] sm:$0xf] %v581
  %646 = vst [vmem:[%s3 + $0x2c] sm:$0xf] %v582
  %647 = vst [vmem:[%s3 + $0x30] sm:$0xf] %v583
  %648 = vst [vmem:[%s3 + $0x34] sm:$0xf] %v584
  %649 = vst [vmem:[%s3 + $0x38] sm:$0xf] %v585
  %650 = vst [vmem:[%s3 + $0x3c] sm:$0xf] %v586
  %651 = vst [vmem:[%s3 + $0x40] sm:$0xf] %v587
  %652 = vst [vmem:[%s3 + $0x44] sm:$0xf] %v588
  %653 = vst [vmem:[%s3 + $0x48] sm:$0xf] %v589
  %654 = vst [vmem:[%s3 + $0x4c] sm:$0xf] %v590
  %655 = vst [vmem:[%s3 + $0x50] sm:$0xf] %v591
  %656 = vst [vmem:[%s3 + $0x54] sm:$0xf] %v592
  %657 = vst [vmem:[%s3 + $0x58] sm:$0xf] %v593
  %658 = vst [vmem:[%s3 + $0x5c] sm:$0xf] %v594
  %659 = vst [vmem:[%s3 + $0x60] sm:$0xf] %v595
  %660 = vst [vmem:[%s3 + $0x64] sm:$0xf] %v596
  %661 = vst [vmem:[%s3 + $0x68] sm:$0xf] %v597
  %662 = vst [vmem:[%s3 + $0x6c] sm:$0xf] %v598
  %663 = vst [vmem:[%s3 + $0x70] sm:$0xf] %v599
  %664 = vst [vmem:[%s3 + $0x74] sm:$0xf] %v600
  %665 = vst [vmem:[%s3 + $0x78] sm:$0xf] %v601
  %666 = vst [vmem:[%s3 + $0x7c] sm:$0xf] %v602
  %667 = vst [vmem:[%s3 + $0x80] sm:$0xf] %v603
  %668 = vst [vmem:[%s3 + $0x84] sm:$0xf] %v604
  %669 = vst [vmem:[%s3 + $0x88] sm:$0xf] %v605
  %670 = vst [vmem:[%s3 + $0x8c] sm:$0xf] %v606
  %671 = vst [vmem:[%s3 + $0x90] sm:$0xf] %v607
  %672 = vst [vmem:[%s3 + $0x94] sm:$0xf] %v608
  %673 = vst [vmem:[%s3 + $0x98] sm:$0xf] %v609
  %674 = vst [vmem:[%s3 + $0x9c] sm:$0xf] %v610
  %675 = vst [vmem:[%s3 + $0xa0] sm:$0xf] %v611
  %676 = vst [vmem:[%s3 + $0xa4] sm:$0xf] %v612
  %677 = vst [vmem:[%s3 + $0xa8] sm:$0xf] %v613
  %678 = vst [vmem:[%s3 + $0xac] sm:$0xf] %v614
  %679 = vst [vmem:[%s3 + $0xb0] sm:$0xf] %v615
  %680 = vst [vmem:[%s3 + $0xb4] sm:$0xf] %v616
  %681 = vst [vmem:[%s3 + $0xb8] sm:$0xf] %v617
  %682 = vst [vmem:[%s3 + $0xbc] sm:$0xf] %v618
  %683 = vst [vmem:[%s3 + $0xc0] sm:$0xf] %v619
  %684 = vst [vmem:[%s3 + $0xc4] sm:$0xf] %v620
  %685 = vst [vmem:[%s3 + $0xc8] sm:$0xf] %v621
  %686 = vst [vmem:[%s3 + $0xcc] sm:$0xf] %v622
  %687 = vst [vmem:[%s3 + $0xd0] sm:$0xf] %v623
  %688 = vst [vmem:[%s3 + $0xd4] sm:$0xf] %v624
  %689 = vst [vmem:[%s3 + $0xd8] sm:$0xf] %v625
  %690 = vst [vmem:[%s3 + $0xdc] sm:$0xf] %v626
  %691 = vst [vmem:[%s3 + $0xe0] sm:$0xf] %v627
  %692 = vst [vmem:[%s3 + $0xe4] sm:$0xf] %v628
  %693 = vst [vmem:[%s3 + $0xe8] sm:$0xf] %v629
  %694 = vst [vmem:[%s3 + $0xec] sm:$0xf] %v630
  %695 = vst [vmem:[%s3 + $0xf0] sm:$0xf] %v631
  %696 = vst [vmem:[%s3 + $0xf4] sm:$0xf] %v632
  %697 = vst [vmem:[%s3 + $0xf8] sm:$0xf] %v633
  %698 = vst [vmem:[%s3 + $0xfc] sm:$0xf] %v634
  // Predicated region
  $region14: #{bottleneck_forward.4} parent=0 // pred_check
    _
  $region15: #{bottleneck_forward.4} parent=0 // pred_check_branch
    %700 = sbr.rel (0) target = $region17
  $region16: #{bottleneck_forward.4} parent=0 // pred_region
    _
  $region17: #{bottleneck_forward.4} parent=0 // pred_fallthru
    _
  // Predicated region
  $region18: #{bottleneck_forward.4} parent=0 // pred_check
    _
  $region19: #{bottleneck_forward.4} parent=0 // pred_check_branch
    %702 = sbr.rel (0) target = $region21
  $region20: #{bottleneck_forward.4} parent=0 // pred_region
    _
  $region21: #{bottleneck_forward.4} parent=0 // pred_fallthru
    _

// kernel: bottleneck_forward.5
$region0: #{bottleneck_forward.5}
  #allocation0 [shape = 'u32[]', space=smem, size = 0x4, offset = 0x4, fixed_abs, tag = 'smem constant byte address 0x4 - core index']
  #allocation1 [shape = 'u32[72,128]{1,0:T(1,128)}', space=vmem, size = 0x9000, scoped, tag = 'internal scratch']
  %s0 = inlined_call_operand.vmem [shape: bf16[8,9,9,128], index: 0, kind: input, shape index: {}]
  %s1 = inlined_call_operand.vmem [shape: bf16[9,128,128], index: 1, kind: input, shape index: {}]
  %s2 = inlined_call_operand.vmem [shape: f32[1,128], index: 2, kind: input, shape index: {}]
  %s3 = inlined_call_operand.vmem [shape: bf16[2,8,8,128], index: 3, kind: output, shape index: {}]
  %s4 = sld [smem:[#allocation0]]
  $region45: #{bottleneck_forward.5} parent=0
    _
  %s6 = ssub.s32 1, %s4
  %s7 = scalar_select 0, %s6, %s4
  loop: start=0, step=1, limit=4
  $region2: #{bottleneck_forward.5} parent=0 // loop_pre_header
    _
  $region3: #{bottleneck_forward.5} parent=0 // loop_header
    %s9 = sphi 0, %s13
    %p10 = scmp.ge.s32.totalorder %s9, 4
    %s16 = sphi 0, %s28
    %s17 = sphi 0, %s24
    %s18 = sphi 0, %s16
    %s19 = sphi 0, %s17
    %s20 = sphi 0, %s18
    %s21 = sphi 0, %s19
    %s31 = sphi 0, %s33
    %s34 = sphi 0, %s31
    %s35 = sphi 0, %s34
    %s51 = sphi 0, %s35
    %s55 = sphi 0, %s55
    %s57 = sphi 0, %s55
    %s58 = sphi 0, %s57
    %s72 = sphi 0, %s58
    %s76 = sphi 0, %s76
    %s78 = sphi 0, %s76
    %s79 = sphi 0, %s78
    %s93 = sphi 0, %s79
    %s101 = sphi 0, %s103
    %s104 = sphi 0, %s101
    %s105 = sphi 0, %s104
    %s121 = sphi 0, %s105
  $region4: #{bottleneck_forward.5} parent=0 // loop_header_branch
    %12 = sbr.rel (%p10) target = $region8
  $region5: #{bottleneck_forward.5} parent=0 // loop_body
    %s14 = ssub.s32 %s9, 1
    %s15 = ssub.s32 %s9, 2
    %s22 = sadd.s32 1, %s17
    %p23 = scmp.ge.s32.totalorder %s22, 1
    %s24 = scalar_select %p23, 0, %s22
    %s25 = sadd.s32 1, %s16
    %s26 = scalar_select %p23, %s25, %s16
    %p27 = scmp.ge.s32.totalorder %s26, 2
    %s28 = scalar_select %p27, 0, %s26
    %s29 = ssub.s32 %s16, %s28
    %p30 = scmp.eq.s32.totalorder %s29, 0
    %s32 = sadd.s32 %s31, 1
    %s33 = scalar_select %p30, %s31, %s32
    %p36 = pneg %p30
    %p37 = scmp.eq.s32.totalorder %s9, 1
    %p38 = por %p36, %p37
    %p39 = scmp.ne.s32.totalorder %s31, %s34
    %p40 = scmp.eq.s32.totalorder %s9, 0
    %p41 = por %p39, %p40
    %p42 = scmp.ne.s32.totalorder %s31, %s34
    %p43 = scmp.eq.s32.totalorder %s14, 1
    %p44 = por %p42, %p43
    %p45 = scmp.ne.s32.totalorder %s34, %s35
    %p46 = scmp.eq.s32.totalorder %s14, 0
    %p47 = por %p45, %p46
    %p48 = scmp.ne.s32.totalorder %s34, %s35
    %p49 = scmp.eq.s32.totalorder %s15, 1
    %p50 = por %p48, %p49
    %p52 = scmp.ne.s32.totalorder %s35, %s51
    %p53 = scmp.eq.s32.totalorder %s15, 0
    %p54 = por %p52, %p53
    %s56 = sadd.s32 %s55, 1
    %p59 = scmp.eq.s32.totalorder %s9, 1
    %p60 = scmp.ne.s32.totalorder %s55, %s57
    %p61 = scmp.eq.s32.totalorder %s9, 0
    %p62 = por %p60, %p61
    %p63 = scmp.ne.s32.totalorder %s55, %s57
    %p64 = scmp.eq.s32.totalorder %s14, 1
    %p65 = por %p63, %p64
    %p66 = scmp.ne.s32.totalorder %s57, %s58
    %p67 = scmp.eq.s32.totalorder %s14, 0
    %p68 = por %p66, %p67
    %p69 = scmp.ne.s32.totalorder %s57, %s58
    %p70 = scmp.eq.s32.totalorder %s15, 1
    %p71 = por %p69, %p70
    %p73 = scmp.ne.s32.totalorder %s58, %s72
    %p74 = scmp.eq.s32.totalorder %s15, 0
    %p75 = por %p73, %p74
    %s77 = sadd.s32 %s76, 1
    %p80 = scmp.eq.s32.totalorder %s9, 1
    %p81 = scmp.ne.s32.totalorder %s76, %s78
    %p82 = scmp.eq.s32.totalorder %s9, 0
    %p83 = por %p81, %p82
    %p84 = scmp.ne.s32.totalorder %s76, %s78
    %p85 = scmp.eq.s32.totalorder %s14, 1
    %p86 = por %p84, %p85
    %p87 = scmp.ne.s32.totalorder %s78, %s79
    %p88 = scmp.eq.s32.totalorder %s14, 0
    %p89 = por %p87, %p88
    %p90 = scmp.ne.s32.totalorder %s78, %s79
    %p91 = scmp.eq.s32.totalorder %s15, 1
    %p92 = por %p90, %p91
    %p94 = scmp.ne.s32.totalorder %s79, %s93
    %p95 = scmp.eq.s32.totalorder %s15, 0
    %p96 = por %p94, %p95
    %s97 = ssub.s32 %s16, %s28
    %s98 = ssub.s32 %s17, %s24
    %s99 = sor.u32 %s97, %s98
    %p100 = scmp.eq.s32.totalorder %s99, 0
    %s102 = sadd.s32 %s101, 1
    %s103 = scalar_select %p100, %s101, %s102
    %p106 = pneg %p100
    %p107 = scmp.eq.s32.totalorder %s9, 1
    %p108 = por %p106, %p107
    %p109 = scmp.ne.s32.totalorder %s101, %s104
    %p110 = scmp.eq.s32.totalorder %s9, 0
    %p111 = por %p109, %p110
    %p112 = scmp.ne.s32.totalorder %s101, %s104
    %p113 = scmp.eq.s32.totalorder %s14, 1
    %p114 = por %p112, %p113
    %p115 = scmp.ne.s32.totalorder %s104, %s105
    %p116 = scmp.eq.s32.totalorder %s14, 0
    %p117 = por %p115, %p116
    %p118 = scmp.ne.s32.totalorder %s104, %s105
    %p119 = scmp.eq.s32.totalorder %s15, 1
    %p120 = por %p118, %p119
    %p122 = scmp.ne.s32.totalorder %s105, %s121
    %p123 = scmp.eq.s32.totalorder %s15, 0
    %p124 = por %p122, %p123
    %p125 = scmp.le.s32.totalorder 1, %s9
    %p126 = scmp.lt.s32.totalorder %s9, 3
    %p127 = pnand %p125, %p126
    %p128 = pneg %p127
    // Predicated region
    $region9: #{bottleneck_forward.5} parent=5 // pred_check
      _
    $region10: #{bottleneck_forward.5} parent=5 // pred_check_branch
      %130 = sbr.rel (%p127) target = $region12
    $region11: #{bottleneck_forward.5} parent=5 // pred_region
      %s131 = ssub.s32 %s9, 1
      // Predicated region
      $region13: #{bottleneck_forward.5} parent=11 // pred_check
        %p132 = pneg %p68
      $region14: #{bottleneck_forward.5} parent=11 // pred_check_branch
        %134 = sbr.rel (%p132) target = $region16
      $region15: #{bottleneck_forward.5} parent=11 // pred_region
        _
      $region16: #{bottleneck_forward.5} parent=11 // pred_fallthru
        _
      // Predicated region
      $region17: #{bottleneck_forward.5} parent=11 // pred_check
        %p135 = pneg %p89
      $region18: #{bottleneck_forward.5} parent=11 // pred_check_branch
        %137 = sbr.rel (%p135) target = $region20
      $region19: #{bottleneck_forward.5} parent=11 // pred_region
        _
      $region20: #{bottleneck_forward.5} parent=11 // pred_fallthru
        _
    $region12: #{bottleneck_forward.5} parent=5 // pred_fallthru
      _
    %p138 = scmp.lt.s32.totalorder %s9, 2
    // Predicated region
    $region21: #{bottleneck_forward.5} parent=5 // pred_check
      %p139 = pneg %p138
    $region22: #{bottleneck_forward.5} parent=5 // pred_check_branch
      %141 = sbr.rel (%p139) target = $region24
    $region23: #{bottleneck_forward.5} parent=5 // pred_region
      // Predicated region
      $region25: #{bottleneck_forward.5} parent=23 // pred_check
        %p142 = pneg %p41
      $region26: #{bottleneck_forward.5} parent=23 // pred_check_branch
        %144 = sbr.rel (%p142) target = $region28
      $region27: #{bottleneck_forward.5} parent=23 // pred_region
        %s145 = smul.u32 4, %s16
        %p146 = scmp.lt.s32.totalorder %s145, 7
        %s147 = scalar_select %p146, %s145, 7
        %s148 = smul.addr %s147, 18
        %s149 = smul.addr %s148, 4
        %s150 = scalar_lea.vmem %s0, %s149
        %s151 = smul.u32 4, %s16
      $region28: #{bottleneck_forward.5} parent=23 // pred_fallthru
        _
    $region24: #{bottleneck_forward.5} parent=5 // pred_fallthru
      _
    %p152 = scmp.le.s32.totalorder 1, %s9
    %p153 = scmp.lt.s32.totalorder %s9, 3
    %p154 = pnand %p152, %p153
    %p155 = pneg %p154
    // Predicated region
    $region29: #{bottleneck_forward.5} parent=5 // pred_check
      _
    $region30: #{bottleneck_forward.5} parent=5 // pred_check_branch
      %157 = sbr.rel (%p154) target = $region32
    $region31: #{bottleneck_forward.5} parent=5 // pred_region
      %s158 = ssub.s32 %s9, 1
      %s159 = smul.u32 4, %s18
      %p160 = scmp.lt.s32.totalorder %s159, 7
      %s161 = scalar_select %p160, %s159, 7
      %s162 = smul.addr %s161, 18
      %s163 = smul.addr %s162, 4
      %s164 = scalar_lea.vmem %s0, %s163
      %p165 = pneg %p47
      %p166 = pneg %p44
      %p167 = pneg %p68
      %p168 = pneg %p65
      %p169 = pneg %p89
      %p170 = pneg %p86
      %p171 = pneg %p117
      %p172 = pneg %p114
      %s173 = smul.u32 8, %s19
      %p174 = scmp.lt.s32.totalorder %s18, 1
      %s175 = scalar_select %p174, %s18, 1
      %p176 = scmp.lt.s32.totalorder %s173, 7
      %s177 = scalar_select %p176, %s173, 7
      %s178 = smul.addr %s175, 8
      %s179 = sadd.s32 %s177, %s178
      %s180 = smul.addr %s179, 4
      %s181 = scalar_lea.vmem %s3, %s180
      %s182 = smul.u32 4, %s18
      %p183 = scmp.lt.s32.totalorder %s182, 7
      %s184 = scalar_select %p183, %s182, 7
      %s185 = smul.addr %s184, 18
      %s186 = smul.addr %s185, 4
      %s187 = scalar_lea.vmem %s0, %s186
      %s188 = smul.u32 4, %s18
      %s189 = smul.u32 8, %s19
      %p190 = scmp.lt.s32.totalorder %s18, 1
      %s191 = scalar_select %p190, %s18, 1
      %p192 = scmp.lt.s32.totalorder %s189, 7
      %s193 = scalar_select %p192, %s189, 7
      %s194 = smul.addr %s191, 8
      %s195 = sadd.s32 %s193, %s194
      %s196 = smul.addr %s195, 4
      %s197 = scalar_lea.vmem %s3, %s196
      %s198 = smul.u32 8, %s19
      %s199 = smul.u32 %s19, 8
      %s200 = smul.u32 %s199, 2
      %s201 = smul.addr %s200, 4
      %s202 = scalar_lea.vmem %s187, %s201
      %v203 = vld [vmem:[%s202] sm:$0xf]
      %v204 = vld [vmem:[%s202 + $0x8] sm:$0xf]
      %v205 = vld [vmem:[%s202 + $0x10] sm:$0xf]
      %v206 = vld [vmem:[%s202 + $0x18] sm:$0xf]
      %v207 = vld [vmem:[%s202 + $0x20] sm:$0xf]
      %v208 = vld [vmem:[%s202 + $0x28] sm:$0xf]
      %v209 = vld [vmem:[%s202 + $0x30] sm:$0xf]
      %v210 = vld [vmem:[%s202 + $0x38] sm:$0xf]
      %v211 = vld [vmem:[%s1] sm:$0xf]
      %v212 = vld [vmem:[%s1 + $0x4] sm:$0xf]
      %v213 = vld [vmem:[%s1 + $0x8] sm:$0xf]
      %v214 = vld [vmem:[%s1 + $0xc] sm:$0xf]
      %v215 = vld [vmem:[%s1 + $0x10] sm:$0xf]
      %v216 = vld [vmem:[%s1 + $0x14] sm:$0xf]
      %v217 = vld [vmem:[%s1 + $0x18] sm:$0xf]
      %v218 = vld [vmem:[%s1 + $0x1c] sm:$0xf]
      %v219 = vld [vmem:[%s1 + $0x20] sm:$0xf]
      %v220 = vld [vmem:[%s1 + $0x24] sm:$0xf]
      %v221 = vld [vmem:[%s1 + $0x28] sm:$0xf]
      %v222 = vld [vmem:[%s1 + $0x2c] sm:$0xf]
      %v223 = vld [vmem:[%s1 + $0x30] sm:$0xf]
      %v224 = vld [vmem:[%s1 + $0x34] sm:$0xf]
      %v225 = vld [vmem:[%s1 + $0x38] sm:$0xf]
      %v226 = vld [vmem:[%s1 + $0x3c] sm:$0xf]
      %s227 = sadd.s32 %s200, 18
      %s228 = smul.addr %s227, 4
      %s229 = scalar_lea.vmem %s187, %s228
      %v230 = vld [vmem:[%s229] sm:$0xf]
      %v231 = vld [vmem:[%s229 + $0x8] sm:$0xf]
      %v232 = vld [vmem:[%s229 + $0x10] sm:$0xf]
      %v233 = vld [vmem:[%s229 + $0x18] sm:$0xf]
      %v234 = vld [vmem:[%s229 + $0x20] sm:$0xf]
      %v235 = vld [vmem:[%s229 + $0x28] sm:$0xf]
      %v236 = vld [vmem:[%s229 + $0x30] sm:$0xf]
      %v237 = vld [vmem:[%s229 + $0x38] sm:$0xf]
      %s238 = scalar_lea.vmem %s1, 64
      %v239 = vld [vmem:[%s238] sm:$0xf]
      %v240 = vld [vmem:[%s238 + $0x4] sm:$0xf]
      %v241 = vld [vmem:[%s238 + $0x8] sm:$0xf]
      %v242 = vld [vmem:[%s238 + $0xc] sm:$0xf]
      %v243 = vld [vmem:[%s238 + $0x10] sm:$0xf]
      %v244 = vld [vmem:[%s238 + $0x14] sm:$0xf]
      %v245 = vld [vmem:[%s238 + $0x18] sm:$0xf]
      %v246 = vld [vmem:[%s238 + $0x1c] sm:$0xf]
      %v247 = vld [vmem:[%s238 + $0x20] sm:$0xf]
      %v248 = vld [vmem:[%s238 + $0x24] sm:$0xf]
      %v249 = vld [vmem:[%s238 + $0x28] sm:$0xf]
      %v250 = vld [vmem:[%s238 + $0x2c] sm:$0xf]
      %v251 = vld [vmem:[%s238 + $0x30] sm:$0xf]
      %v252 = vld [vmem:[%s238 + $0x34] sm:$0xf]
      %v253 = vld [vmem:[%s238 + $0x38] sm:$0xf]
      %v254 = vld [vmem:[%s238 + $0x3c] sm:$0xf]
      %v263 = vunpack.c.l.b16 %v230
      %v264 = vunpack.c.l.b16 %v231
      %v265 = vunpack.c.l.b16 %v232
      %v266 = vunpack.c.l.b16 %v233
      %v267 = vunpack.c.l.b16 %v234
      %v268 = vunpack.c.l.b16 %v235
      %v269 = vunpack.c.l.b16 %v236
      %v270 = vunpack.c.l.b16 %v237
      %v271 = vpack.c.b16 %v264, %v263
      %v272 = vpack.c.b16 %v266, %v265
      %v273 = vpack.c.b16 %v268, %v267
      %v274 = vpack.c.b16 %v270, %v269
      %v295 = vunpack.c.l.b16 %v239
      %v296 = vunpack.c.l.b16 %v240
      %v297 = vunpack.c.l.b16 %v241
      %v298 = vunpack.c.l.b16 %v242
      %v299 = vunpack.c.l.b16 %v243
      %v300 = vunpack.c.l.b16 %v244
      %v301 = vunpack.c.l.b16 %v245
      %v302 = vunpack.c.l.b16 %v246
      %v303 = vunpack.c.l.b16 %v247
      %v304 = vunpack.c.l.b16 %v248
      %v305 = vunpack.c.l.b16 %v249
      %v306 = vunpack.c.l.b16 %v250
      %v307 = vunpack.c.l.b16 %v251
      %v308 = vunpack.c.l.b16 %v252
      %v309 = vunpack.c.l.b16 %v253
      %v310 = vunpack.c.l.b16 %v254
      %v311 = vpack.c.b16 %v296, %v295
      %v312 = vpack.c.b16 %v298, %v297
      %v313 = vpack.c.b16 %v300, %v299
      %v314 = vpack.c.b16 %v302, %v301
      %v315 = vpack.c.b16 %v304, %v303
      %v316 = vpack.c.b16 %v306, %v305
      %v317 = vpack.c.b16 %v308, %v307
      %v318 = vpack.c.b16 %v310, %v309
      %327 = vmatpush.bf16.msra.mxu0 %v318
      %328 = vmatpush.bf16.msra.mxu0 %v317
      %329 = vmatpush.bf16.msra.mxu0 %v316
      %330 = vmatpush.bf16.msra.mxu0 %v315
      %331 = vmatpush.bf16.msra.mxu0 %v314
      %332 = vmatpush.bf16.msra.mxu0 %v313
      %333 = vmatpush.bf16.msra.mxu0 %v312
      %334 = vmatpush.bf16.msra.mxu0 %v311
      %335 = vmatmul.bf16.gmra.mxu0 %v271
      %v336 = vpop.f32.mrf.mxu0
      %v337 = vadd.f32 0.0, %v336
      %v338 = vpop.f32.mrf.mxu0
      %v339 = vadd.f32 0.0, %v338
      %340 = vmatmul.bf16.gmra.mxu0 %v272
      %v341 = vpop.f32.mrf.mxu0
      %v342 = vadd.f32 0.0, %v341
      %v343 = vpop.f32.mrf.mxu0
      %v344 = vadd.f32 0.0, %v343
      %345 = vmatmul.bf16.gmra.mxu0 %v273
      %v346 = vpop.f32.mrf.mxu0
      %v347 = vadd.f32 0.0, %v346
      %v348 = vpop.f32.mrf.mxu0
      %v349 = vadd.f32 0.0, %v348
      %350 = vmatmul.bf16.gmra.mxu0 %v274
      %v351 = vpop.f32.mrf.mxu0
      %v352 = vadd.f32 0.0, %v351
      %v353 = vpop.f32.mrf.mxu0
      %v354 = vadd.f32 0.0, %v353
      %355 = vdwg.mxu0
      %v364 = vunpack.c.l.b16 %v203
      %v365 = vunpack.c.l.b16 %v204
      %v366 = vunpack.c.l.b16 %v205
      %v367 = vunpack.c.l.b16 %v206
      %v368 = vunpack.c.l.b16 %v207
      %v369 = vunpack.c.l.b16 %v208
      %v370 = vunpack.c.l.b16 %v209
      %v371 = vunpack.c.l.b16 %v210
      %v372 = vpack.c.b16 %v365, %v364
      %v373 = vpack.c.b16 %v367, %v366
      %v374 = vpack.c.b16 %v369, %v368
      %v375 = vpack.c.b16 %v371, %v370
      %v396 = vunpack.c.l.b16 %v211
      %v397 = vunpack.c.l.b16 %v212
      %v398 = vunpack.c.l.b16 %v213
      %v399 = vunpack.c.l.b16 %v214
      %v400 = vunpack.c.l.b16 %v215
      %v401 = vunpack.c.l.b16 %v216
      %v402 = vunpack.c.l.b16 %v217
      %v403 = vunpack.c.l.b16 %v218
      %v404 = vunpack.c.l.b16 %v219
      %v405 = vunpack.c.l.b16 %v220
      %v406 = vunpack.c.l.b16 %v221
      %v407 = vunpack.c.l.b16 %v222
      %v408 = vunpack.c.l.b16 %v223
      %v409 = vunpack.c.l.b16 %v224
      %v410 = vunpack.c.l.b16 %v225
      %v411 = vunpack.c.l.b16 %v226
      %v412 = vpack.c.b16 %v397, %v396
      %v413 = vpack.c.b16 %v399, %v398
      %v414 = vpack.c.b16 %v401, %v400
      %v415 = vpack.c.b16 %v403, %v402
      %v416 = vpack.c.b16 %v405, %v404
      %v417 = vpack.c.b16 %v407, %v406
      %v418 = vpack.c.b16 %v409, %v408
      %v419 = vpack.c.b16 %v411, %v410
      %428 = vmatpush.bf16.msra.mxu0 %v419
      %429 = vmatpush.bf16.msra.mxu0 %v418
      %430 = vmatpush.bf16.msra.mxu0 %v417
      %431 = vmatpush.bf16.msra.mxu0 %v416
      %432 = vmatpush.bf16.msra.mxu0 %v415
      %433 = vmatpush.bf16.msra.mxu0 %v414
      %434 = vmatpush.bf16.msra.mxu0 %v413
      %435 = vmatpush.bf16.msra.mxu0 %v412
      %436 = vmatmul.bf16.gmra.mxu0 %v372
      %v437 = vpop.f32.mrf.mxu0
      %v438 = vadd.f32 %v337, %v437
      %v439 = vpop.f32.mrf.mxu0
      %v440 = vadd.f32 %v339, %v439
      %441 = vmatmul.bf16.gmra.mxu0 %v373
      %v442 = vpop.f32.mrf.mxu0
      %v443 = vadd.f32 %v342, %v442
      %v444 = vpop.f32.mrf.mxu0
      %v445 = vadd.f32 %v344, %v444
      %446 = vmatmul.bf16.gmra.mxu0 %v374
      %v447 = vpop.f32.mrf.mxu0
      %v448 = vadd.f32 %v347, %v447
      %v449 = vpop.f32.mrf.mxu0
      %v450 = vadd.f32 %v349, %v449
      %451 = vmatmul.bf16.gmra.mxu0 %v375
      %v452 = vpop.f32.mrf.mxu0
      %v453 = vadd.f32 %v352, %v452
      %v454 = vpop.f32.mrf.mxu0
      %v455 = vadd.f32 %v354, %v454
      %456 = vdwg.mxu0
      %v457 = vld [vmem:[%s202] sm:$0xf]
      %v458 = vld [vmem:[%s202 + $0x4] sm:$0x1]
      %v459 = vld [vmem:[%s202 + $0x8] sm:$0xf]
      %v460 = vld [vmem:[%s202 + $0xc] sm:$0x1]
      %v461 = vld [vmem:[%s202 + $0x10] sm:$0xf]
      %v462 = vld [vmem:[%s202 + $0x14] sm:$0x1]
      %v463 = vld [vmem:[%s202 + $0x18] sm:$0xf]
      %v464 = vld [vmem:[%s202 + $0x1c] sm:$0x1]
      %v465 = vld [vmem:[%s202 + $0x20] sm:$0xf]
      %v466 = vld [vmem:[%s202 + $0x24] sm:$0x1]
      %v467 = vld [vmem:[%s202 + $0x28] sm:$0xf]
      %v468 = vld [vmem:[%s202 + $0x2c] sm:$0x1]
      %v469 = vld [vmem:[%s202 + $0x30] sm:$0xf]
      %v470 = vld [vmem:[%s202 + $0x34] sm:$0x1]
      %v471 = vld [vmem:[%s202 + $0x38] sm:$0xf]
      %v472 = vld [vmem:[%s202 + $0x3c] sm:$0x1]
      %vm473 = vsmask.f32 3328
      %vm474 = vsmask.f32 7440
      %vm475 = vmor %vm473, %vm474
      %v477 = vshrl.u32 %v457, 16
      %v479 = vrot.slane %v477, 4
      %v480 = vshll.u32 %v457, 16
      %v482 = vrot.slane %v480, 5
      %v483 = vor.u32 %v479, %v482
      %v484 = vrot.slane %v483, 4
      %v486 = vshll.u32 %v458, 16
      %v488 = vrot.slane %v486, 5
      %v489 = vsel %vm475, %v484, %v488
      %v491 = vshrl.u32 %v459, 16
      %v493 = vrot.slane %v491, 4
      %v494 = vshll.u32 %v459, 16
      %v496 = vrot.slane %v494, 5
      %v497 = vor.u32 %v493, %v496
      %v498 = vrot.slane %v497, 4
      %v500 = vshll.u32 %v460, 16
      %v502 = vrot.slane %v500, 5
      %v503 = vsel %vm475, %v498, %v502
      %v505 = vshrl.u32 %v461, 16
      %v507 = vrot.slane %v505, 4
      %v508 = vshll.u32 %v461, 16
      %v510 = vrot.slane %v508, 5
      %v511 = vor.u32 %v507, %v510
      %v512 = vrot.slane %v511, 4
      %v514 = vshll.u32 %v462, 16
      %v516 = vrot.slane %v514, 5
      %v517 = vsel %vm475, %v512, %v516
      %v519 = vshrl.u32 %v463, 16
      %v521 = vrot.slane %v519, 4
      %v522 = vshll.u32 %v463, 16
      %v524 = vrot.slane %v522, 5
      %v525 = vor.u32 %v521, %v524
      %v526 = vrot.slane %v525, 4
      %v528 = vshll.u32 %v464, 16
      %v530 = vrot.slane %v528, 5
      %v531 = vsel %vm475, %v526, %v530
      %v533 = vshrl.u32 %v465, 16
      %v535 = vrot.slane %v533, 4
      %v536 = vshll.u32 %v465, 16
      %v538 = vrot.slane %v536, 5
      %v539 = vor.u32 %v535, %v538
      %v540 = vrot.slane %v539, 4
      %v542 = vshll.u32 %v466, 16
      %v544 = vrot.slane %v542, 5
      %v545 = vsel %vm475, %v540, %v544
      %v547 = vshrl.u32 %v467, 16
      %v549 = vrot.slane %v547, 4
      %v550 = vshll.u32 %v467, 16
      %v552 = vrot.slane %v550, 5
      %v553 = vor.u32 %v549, %v552
      %v554 = vrot.slane %v553, 4
      %v556 = vshll.u32 %v468, 16
      %v558 = vrot.slane %v556, 5
      %v559 = vsel %vm475, %v554, %v558
      %v561 = vshrl.u32 %v469, 16
      %v563 = vrot.slane %v561, 4
      %v564 = vshll.u32 %v469, 16
      %v566 = vrot.slane %v564, 5
      %v567 = vor.u32 %v563, %v566
      %v568 = vrot.slane %v567, 4
      %v570 = vshll.u32 %v470, 16
      %v572 = vrot.slane %v570, 5
      %v573 = vsel %vm475, %v568, %v572
      %v575 = vshrl.u32 %v471, 16
      %v577 = vrot.slane %v575, 4
      %v578 = vshll.u32 %v471, 16
      %v580 = vrot.slane %v578, 5
      %v581 = vor.u32 %v577, %v580
      %v582 = vrot.slane %v581, 4
      %v584 = vshll.u32 %v472, 16
      %v586 = vrot.slane %v584, 5
      %v587 = vsel %vm475, %v582, %v586
      %s588 = scalar_lea.vmem %s1, 128
      %v589 = vld [vmem:[%s588] sm:$0xf]
      %v590 = vld [vmem:[%s588 + $0x4] sm:$0xf]
      %v591 = vld [vmem:[%s588 + $0x8] sm:$0xf]
      %v592 = vld [vmem:[%s588 + $0xc] sm:$0xf]
      %v593 = vld [vmem:[%s588 + $0x10] sm:$0xf]
      %v594 = vld [vmem:[%s588 + $0x14] sm:$0xf]
      %v595 = vld [vmem:[%s588 + $0x18] sm:$0xf]
      %v596 = vld [vmem:[%s588 + $0x1c] sm:$0xf]
      %v597 = vld [vmem:[%s588 + $0x20] sm:$0xf]
      %v598 = vld [vmem:[%s588 + $0x24] sm:$0xf]
      %v599 = vld [vmem:[%s588 + $0x28] sm:$0xf]
      %v600 = vld [vmem:[%s588 + $0x2c] sm:$0xf]
      %v601 = vld [vmem:[%s588 + $0x30] sm:$0xf]
      %v602 = vld [vmem:[%s588 + $0x34] sm:$0xf]
      %v603 = vld [vmem:[%s588 + $0x38] sm:$0xf]
      %v604 = vld [vmem:[%s588 + $0x3c] sm:$0xf]
      %v605 = vunpack.c.l.b16 %v489
      %v606 = vunpack.c.l.b16 %v503
      %v607 = vunpack.c.l.b16 %v517
      %v608 = vunpack.c.l.b16 %v531
      %v609 = vunpack.c.l.b16 %v545
      %v610 = vunpack.c.l.b16 %v559
      %v611 = vunpack.c.l.b16 %v573
      %v612 = vunpack.c.l.b16 %v587
      %v613 = vpack.c.b16 %v606, %v605
      %v614 = vpack.c.b16 %v608, %v607
      %v615 = vpack.c.b16 %v610, %v609
      %v616 = vpack.c.b16 %v612, %v611
      %v637 = vunpack.c.l.b16 %v589
      %v638 = vunpack.c.l.b16 %v590
      %v639 = vunpack.c.l.b16 %v591
      %v640 = vunpack.c.l.b16 %v592
      %v641 = vunpack.c.l.b16 %v593
      %v642 = vunpack.c.l.b16 %v594
      %v643 = vunpack.c.l.b16 %v595
      %v644 = vunpack.c.l.b16 %v596
      %v645 = vunpack.c.l.b16 %v597
      %v646 = vunpack.c.l.b16 %v598
      %v647 = vunpack.c.l.b16 %v599
      %v648 = vunpack.c.l.b16 %v600
      %v649 = vunpack.c.l.b16 %v601
      %v650 = vunpack.c.l.b16 %v602
      %v651 = vunpack.c.l.b16 %v603
      %v652 = vunpack.c.l.b16 %v604
      %v653 = vpack.c.b16 %v638, %v637
      %v654 = vpack.c.b16 %v640, %v639
      %v655 = vpack.c.b16 %v642, %v641
      %v656 = vpack.c.b16 %v644, %v643
      %v657 = vpack.c.b16 %v646, %v645
      %v658 = vpack.c.b16 %v648, %v647
      %v659 = vpack.c.b16 %v650, %v649
      %v660 = vpack.c.b16 %v652, %v651
      %669 = vmatpush.bf16.msra.mxu0 %v660
      %670 = vmatpush.bf16.msra.mxu0 %v659
      %671 = vmatpush.bf16.msra.mxu0 %v658
      %672 = vmatpush.bf16.msra.mxu0 %v657
      %673 = vmatpush.bf16.msra.mxu0 %v656
      %674 = vmatpush.bf16.msra.mxu0 %v655
      %675 = vmatpush.bf16.msra.mxu0 %v654
      %676 = vmatpush.bf16.msra.mxu0 %v653
      %677 = vmatmul.bf16.gmra.mxu0 %v613
      %v678 = vpop.f32.mrf.mxu0
      %v679 = vadd.f32 0.0, %v678
      %v680 = vpop.f32.mrf.mxu0
      %v681 = vadd.f32 0.0, %v680
      %682 = vmatmul.bf16.gmra.mxu0 %v614
      %v683 = vpop.f32.mrf.mxu0
      %v684 = vadd.f32 0.0, %v683
      %v685 = vpop.f32.mrf.mxu0
      %v686 = vadd.f32 0.0, %v685
      %687 = vmatmul.bf16.gmra.mxu0 %v615
      %v688 = vpop.f32.mrf.mxu0
      %v689 = vadd.f32 0.0, %v688
      %v690 = vpop.f32.mrf.mxu0
      %v691 = vadd.f32 0.0, %v690
      %692 = vmatmul.bf16.gmra.mxu0 %v616
      %v693 = vpop.f32.mrf.mxu0
      %v694 = vadd.f32 0.0, %v693
      %v695 = vpop.f32.mrf.mxu0
      %v696 = vadd.f32 0.0, %v695
      %697 = vdwg.mxu0
      %v698 = vadd.f32 %v438, %v679
      %v699 = vadd.f32 %v440, %v681
      %v700 = vadd.f32 %v443, %v684
      %v701 = vadd.f32 %v445, %v686
      %v702 = vadd.f32 %v448, %v689
      %v703 = vadd.f32 %v450, %v691
      %v704 = vadd.f32 %v453, %v694
      %v705 = vadd.f32 %v455, %v696
      %s706 = sadd.s32 %s200, 36
      %s707 = smul.addr %s706, 4
      %s708 = scalar_lea.vmem %s187, %s707
      %v709 = vld [vmem:[%s708] sm:$0xf]
      %v710 = vld [vmem:[%s708 + $0x8] sm:$0xf]
      %v711 = vld [vmem:[%s708 + $0x10] sm:$0xf]
      %v712 = vld [vmem:[%s708 + $0x18] sm:$0xf]
      %v713 = vld [vmem:[%s708 + $0x20] sm:$0xf]
      %v714 = vld [vmem:[%s708 + $0x28] sm:$0xf]
      %v715 = vld [vmem:[%s708 + $0x30] sm:$0xf]
      %v716 = vld [vmem:[%s708 + $0x38] sm:$0xf]
      %s717 = scalar_lea.vmem %s1, 192
      %v718 = vld [vmem:[%s717] sm:$0xf]
      %v719 = vld [vmem:[%s717 + $0x4] sm:$0xf]
      %v720 = vld [vmem:[%s717 + $0x8] sm:$0xf]
      %v721 = vld [vmem:[%s717 + $0xc] sm:$0xf]
      %v722 = vld [vmem:[%s717 + $0x10] sm:$0xf]
      %v723 = vld [vmem:[%s717 + $0x14] sm:$0xf]
      %v724 = vld [vmem:[%s717 + $0x18] sm:$0xf]
      %v725 = vld [vmem:[%s717 + $0x1c] sm:$0xf]
      %v726 = vld [vmem:[%s717 + $0x20] sm:$0xf]
      %v727 = vld [vmem:[%s717 + $0x24] sm:$0xf]
      %v728 = vld [vmem:[%s717 + $0x28] sm:$0xf]
      %v729 = vld [vmem:[%s717 + $0x2c] sm:$0xf]
      %v730 = vld [vmem:[%s717 + $0x30] sm:$0xf]
      %v731 = vld [vmem:[%s717 + $0x34] sm:$0xf]
      %v732 = vld [vmem:[%s717 + $0x38] sm:$0xf]
      %v733 = vld [vmem:[%s717 + $0x3c] sm:$0xf]
      %v742 = vunpack.c.l.b16 %v709
      %v743 = vunpack.c.l.b16 %v710
      %v744 = vunpack.c.l.b16 %v711
      %v745 = vunpack.c.l.b16 %v712
      %v746 = vunpack.c.l.b16 %v713
      %v747 = vunpack.c.l.b16 %v714
      %v748 = vunpack.c.l.b16 %v715
      %v749 = vunpack.c.l.b16 %v716
      %v750 = vpack.c.b16 %v743, %v742
      %v751 = vpack.c.b16 %v745, %v744
      %v752 = vpack.c.b16 %v747, %v746
      %v753 = vpack.c.b16 %v749, %v748
      %v774 = vunpack.c.l.b16 %v718
      %v775 = vunpack.c.l.b16 %v719
      %v776 = vunpack.c.l.b16 %v720
      %v777 = vunpack.c.l.b16 %v721
      %v778 = vunpack.c.l.b16 %v722
      %v779 = vunpack.c.l.b16 %v723
      %v780 = vunpack.c.l.b16 %v724
      %v781 = vunpack.c.l.b16 %v725
      %v782 = vunpack.c.l.b16 %v726
      %v783 = vunpack.c.l.b16 %v727
      %v784 = vunpack.c.l.b16 %v728
      %v785 = vunpack.c.l.b16 %v729
      %v786 = vunpack.c.l.b16 %v730
      %v787 = vunpack.c.l.b16 %v731
      %v788 = vunpack.c.l.b16 %v732
      %v789 = vunpack.c.l.b16 %v733
      %v790 = vpack.c.b16 %v775, %v774
      %v791 = vpack.c.b16 %v777, %v776
      %v792 = vpack.c.b16 %v779, %v778
      %v793 = vpack.c.b16 %v781, %v780
      %v794 = vpack.c.b16 %v783, %v782
      %v795 = vpack.c.b16 %v785, %v784
      %v796 = vpack.c.b16 %v787, %v786
      %v797 = vpack.c.b16 %v789, %v788
      %806 = vmatpush.bf16.msra.mxu0 %v797
      %807 = vmatpush.bf16.msra.mxu0 %v796
      %808 = vmatpush.bf16.msra.mxu0 %v795
      %809 = vmatpush.bf16.msra.mxu0 %v794
      %810 = vmatpush.bf16.msra.mxu0 %v793
      %811 = vmatpush.bf16.msra.mxu0 %v792
      %812 = vmatpush.bf16.msra.mxu0 %v791
      %813 = vmatpush.bf16.msra.mxu0 %v790
      %814 = vmatmul.bf16.gmra.mxu0 %v750
      %v815 = vpop.f32.mrf.mxu0
      %v816 = vadd.f32 0.0, %v815
      %v817 = vpop.f32.mrf.mxu0
      %v818 = vadd.f32 0.0, %v817
      %819 = vmatmul.bf16.gmra.mxu0 %v751
      %v820 = vpop.f32.mrf.mxu0
      %v821 = vadd.f32 0.0, %v820
      %v822 = vpop.f32.mrf.mxu0
      %v823 = vadd.f32 0.0, %v822
      %824 = vmatmul.bf16.gmra.mxu0 %v752
      %v825 = vpop.f32.mrf.mxu0
      %v826 = vadd.f32 0.0, %v825
      %v827 = vpop.f32.mrf.mxu0
      %v828 = vadd.f32 0.0, %v827
      %829 = vmatmul.bf16.gmra.mxu0 %v753
      %v830 = vpop.f32.mrf.mxu0
      %v831 = vadd.f32 0.0, %v830
      %v832 = vpop.f32.mrf.mxu0
      %v833 = vadd.f32 0.0, %v832
      %834 = vdwg.mxu0
      %v835 = vadd.f32 %v698, %v816
      %v836 = vadd.f32 %v699, %v818
      %v837 = vadd.f32 %v700, %v821
      %v838 = vadd.f32 %v701, %v823
      %v839 = vadd.f32 %v702, %v826
      %v840 = vadd.f32 %v703, %v828
      %v841 = vadd.f32 %v704, %v831
      %v842 = vadd.f32 %v705, %v833
      %s843 = sadd.s32 %s200, 54
      %s844 = smul.addr %s843, 4
      %s845 = scalar_lea.vmem %s187, %s844
      %v846 = vld [vmem:[%s845] sm:$0xf]
      %v847 = vld [vmem:[%s845 + $0x8] sm:$0xf]
      %v848 = vld [vmem:[%s845 + $0x10] sm:$0xf]
      %v849 = vld [vmem:[%s845 + $0x18] sm:$0xf]
      %v850 = vld [vmem:[%s845 + $0x20] sm:$0xf]
      %v851 = vld [vmem:[%s845 + $0x28] sm:$0xf]
      %v852 = vld [vmem:[%s845 + $0x30] sm:$0xf]
      %v853 = vld [vmem:[%s845 + $0x38] sm:$0xf]
      %s854 = scalar_lea.vmem %s1, 256
      %v855 = vld [vmem:[%s854] sm:$0xf]
      %v856 = vld [vmem:[%s854 + $0x4] sm:$0xf]
      %v857 = vld [vmem:[%s854 + $0x8] sm:$0xf]
      %v858 = vld [vmem:[%s854 + $0xc] sm:$0xf]
      %v859 = vld [vmem:[%s854 + $0x10] sm:$0xf]
      %v860 = vld [vmem:[%s854 + $0x14] sm:$0xf]
      %v861 = vld [vmem:[%s854 + $0x18] sm:$0xf]
      %v862 = vld [vmem:[%s854 + $0x1c] sm:$0xf]
      %v863 = vld [vmem:[%s854 + $0x20] sm:$0xf]
      %v864 = vld [vmem:[%s854 + $0x24] sm:$0xf]
      %v865 = vld [vmem:[%s854 + $0x28] sm:$0xf]
      %v866 = vld [vmem:[%s854 + $0x2c] sm:$0xf]
      %v867 = vld [vmem:[%s854 + $0x30] sm:$0xf]
      %v868 = vld [vmem:[%s854 + $0x34] sm:$0xf]
      %v869 = vld [vmem:[%s854 + $0x38] sm:$0xf]
      %v870 = vld [vmem:[%s854 + $0x3c] sm:$0xf]
      %v879 = vunpack.c.l.b16 %v846
      %v880 = vunpack.c.l.b16 %v847
      %v881 = vunpack.c.l.b16 %v848
      %v882 = vunpack.c.l.b16 %v849
      %v883 = vunpack.c.l.b16 %v850
      %v884 = vunpack.c.l.b16 %v851
      %v885 = vunpack.c.l.b16 %v852
      %v886 = vunpack.c.l.b16 %v853
      %v887 = vpack.c.b16 %v880, %v879
      %v888 = vpack.c.b16 %v882, %v881
      %v889 = vpack.c.b16 %v884, %v883
      %v890 = vpack.c.b16 %v886, %v885
      %v911 = vunpack.c.l.b16 %v855
      %v912 = vunpack.c.l.b16 %v856
      %v913 = vunpack.c.l.b16 %v857
      %v914 = vunpack.c.l.b16 %v858
      %v915 = vunpack.c.l.b16 %v859
      %v916 = vunpack.c.l.b16 %v860
      %v917 = vunpack.c.l.b16 %v861
      %v918 = vunpack.c.l.b16 %v862
      %v919 = vunpack.c.l.b16 %v863
      %v920 = vunpack.c.l.b16 %v864
      %v921 = vunpack.c.l.b16 %v865
      %v922 = vunpack.c.l.b16 %v866
      %v923 = vunpack.c.l.b16 %v867
      %v924 = vunpack.c.l.b16 %v868
      %v925 = vunpack.c.l.b16 %v869
      %v926 = vunpack.c.l.b16 %v870
      %v927 = vpack.c.b16 %v912, %v911
      %v928 = vpack.c.b16 %v914, %v913
      %v929 = vpack.c.b16 %v916, %v915
      %v930 = vpack.c.b16 %v918, %v917
      %v931 = vpack.c.b16 %v920, %v919
      %v932 = vpack.c.b16 %v922, %v921
      %v933 = vpack.c.b16 %v924, %v923
      %v934 = vpack.c.b16 %v926, %v925
      %943 = vmatpush.bf16.msra.mxu0 %v934
      %944 = vmatpush.bf16.msra.mxu0 %v933
      %945 = vmatpush.bf16.msra.mxu0 %v932
      %946 = vmatpush.bf16.msra.mxu0 %v931
      %947 = vmatpush.bf16.msra.mxu0 %v930
      %948 = vmatpush.bf16.msra.mxu0 %v929
      %949 = vmatpush.bf16.msra.mxu0 %v928
      %950 = vmatpush.bf16.msra.mxu0 %v927
      %951 = vmatmul.bf16.gmra.mxu0 %v887
      %v952 = vpop.f32.mrf.mxu0
      %v953 = vadd.f32 0.0, %v952
      %v954 = vpop.f32.mrf.mxu0
      %v955 = vadd.f32 0.0, %v954
      %956 = vmatmul.bf16.gmra.mxu0 %v888
      %v957 = vpop.f32.mrf.mxu0
      %v958 = vadd.f32 0.0, %v957
      %v959 = vpop.f32.mrf.mxu0
      %v960 = vadd.f32 0.0, %v959
      %961 = vmatmul.bf16.gmra.mxu0 %v889
      %v962 = vpop.f32.mrf.mxu0
      %v963 = vadd.f32 0.0, %v962
      %v964 = vpop.f32.mrf.mxu0
      %v965 = vadd.f32 0.0, %v964
      %966 = vmatmul.bf16.gmra.mxu0 %v890
      %v967 = vpop.f32.mrf.mxu0
      %v968 = vadd.f32 0.0, %v967
      %v969 = vpop.f32.mrf.mxu0
      %v970 = vadd.f32 0.0, %v969
      %971 = vdwg.mxu0
      %v972 = vadd.f32 %v835, %v953
      %v973 = vadd.f32 %v836, %v955
      %v974 = vadd.f32 %v837, %v958
      %v975 = vadd.f32 %v838, %v960
      %v976 = vadd.f32 %v839, %v963
      %v977 = vadd.f32 %v840, %v965
      %v978 = vadd.f32 %v841, %v968
      %v979 = vadd.f32 %v842, %v970
      %v980 = vld [vmem:[%s708] sm:$0xf]
      %v981 = vld [vmem:[%s708 + $0x4] sm:$0x1]
      %v982 = vld [vmem:[%s708 + $0x8] sm:$0xf]
      %v983 = vld [vmem:[%s708 + $0xc] sm:$0x1]
      %v984 = vld [vmem:[%s708 + $0x10] sm:$0xf]
      %v985 = vld [vmem:[%s708 + $0x14] sm:$0x1]
      %v986 = vld [vmem:[%s708 + $0x18] sm:$0xf]
      %v987 = vld [vmem:[%s708 + $0x1c] sm:$0x1]
      %v988 = vld [vmem:[%s708 + $0x20] sm:$0xf]
      %v989 = vld [vmem:[%s708 + $0x24] sm:$0x1]
      %v990 = vld [vmem:[%s708 + $0x28] sm:$0xf]
      %v991 = vld [vmem:[%s708 + $0x2c] sm:$0x1]
      %v992 = vld [vmem:[%s708 + $0x30] sm:$0xf]
      %v993 = vld [vmem:[%s708 + $0x34] sm:$0x1]
      %v994 = vld [vmem:[%s708 + $0x38] sm:$0xf]
      %v995 = vld [vmem:[%s708 + $0x3c] sm:$0x1]
      %v997 = vshrl.u32 %v980, 16
      %v999 = vrot.slane %v997, 4
      %v1000 = vshll.u32 %v980, 16
      %v1002 = vrot.slane %v1000, 5
      %v1003 = vor.u32 %v999, %v1002
      %v1004 = vrot.slane %v1003, 4
      %v1006 = vshll.u32 %v981, 16
      %v1008 = vrot.slane %v1006, 5
      %v1009 = vsel %vm475, %v1004, %v1008
      %v1011 = vshrl.u32 %v982, 16
      %v1013 = vrot.slane %v1011, 4
      %v1014 = vshll.u32 %v982, 16
      %v1016 = vrot.slane %v1014, 5
      %v1017 = vor.u32 %v1013, %v1016
      %v1018 = vrot.slane %v1017, 4
      %v1020 = vshll.u32 %v983, 16
      %v1022 = vrot.slane %v1020, 5
      %v1023 = vsel %vm475, %v1018, %v1022
      %v1025 = vshrl.u32 %v984, 16
      %v1027 = vrot.slane %v1025, 4
      %v1028 = vshll.u32 %v984, 16
      %v1030 = vrot.slane %v1028, 5
      %v1031 = vor.u32 %v1027, %v1030
      %v1032 = vrot.slane %v1031, 4
      %v1034 = vshll.u32 %v985, 16
      %v1036 = vrot.slane %v1034, 5
      %v1037 = vsel %vm475, %v1032, %v1036
      %v1039 = vshrl.u32 %v986, 16
      %v1041 = vrot.slane %v1039, 4
      %v1042 = vshll.u32 %v986, 16
      %v1044 = vrot.slane %v1042, 5
      %v1045 = vor.u32 %v1041, %v1044
      %v1046 = vrot.slane %v1045, 4
      %v1048 = vshll.u32 %v987, 16
      %v1050 = vrot.slane %v1048, 5
      %v1051 = vsel %vm475, %v1046, %v1050
      %v1053 = vshrl.u32 %v988, 16
      %v1055 = vrot.slane %v1053, 4
      %v1056 = vshll.u32 %v988, 16
      %v1058 = vrot.slane %v1056, 5
      %v1059 = vor.u32 %v1055, %v1058
      %v1060 = vrot.slane %v1059, 4
      %v1062 = vshll.u32 %v989, 16
      %v1064 = vrot.slane %v1062, 5
      %v1065 = vsel %vm475, %v1060, %v1064
      %v1067 = vshrl.u32 %v990, 16
      %v1069 = vrot.slane %v1067, 4
      %v1070 = vshll.u32 %v990, 16
      %v1072 = vrot.slane %v1070, 5
      %v1073 = vor.u32 %v1069, %v1072
      %v1074 = vrot.slane %v1073, 4
      %v1076 = vshll.u32 %v991, 16
      %v1078 = vrot.slane %v1076, 5
      %v1079 = vsel %vm475, %v1074, %v1078
      %v1081 = vshrl.u32 %v992, 16
      %v1083 = vrot.slane %v1081, 4
      %v1084 = vshll.u32 %v992, 16
      %v1086 = vrot.slane %v1084, 5
      %v1087 = vor.u32 %v1083, %v1086
      %v1088 = vrot.slane %v1087, 4
      %v1090 = vshll.u32 %v993, 16
      %v1092 = vrot.slane %v1090, 5
      %v1093 = vsel %vm475, %v1088, %v1092
      %v1095 = vshrl.u32 %v994, 16
      %v1097 = vrot.slane %v1095, 4
      %v1098 = vshll.u32 %v994, 16
      %v1100 = vrot.slane %v1098, 5
      %v1101 = vor.u32 %v1097, %v1100
      %v1102 = vrot.slane %v1101, 4
      %v1104 = vshll.u32 %v995, 16
      %v1106 = vrot.slane %v1104, 5
      %v1107 = vsel %vm475, %v1102, %v1106
      %s1108 = scalar_lea.vmem %s1, 320
      %v1109 = vld [vmem:[%s1108] sm:$0xf]
      %v1110 = vld [vmem:[%s1108 + $0x4] sm:$0xf]
      %v1111 = vld [vmem:[%s1108 + $0x8] sm:$0xf]
      %v1112 = vld [vmem:[%s1108 + $0xc] sm:$0xf]
      %v1113 = vld [vmem:[%s1108 + $0x10] sm:$0xf]
      %v1114 = vld [vmem:[%s1108 + $0x14] sm:$0xf]
      %v1115 = vld [vmem:[%s1108 + $0x18] sm:$0xf]
      %v1116 = vld [vmem:[%s1108 + $0x1c] sm:$0xf]
      %v1117 = vld [vmem:[%s1108 + $0x20] sm:$0xf]
      %v1118 = vld [vmem:[%s1108 + $0x24] sm:$0xf]
      %v1119 = vld [vmem:[%s1108 + $0x28] sm:$0xf]
      %v1120 = vld [vmem:[%s1108 + $0x2c] sm:$0xf]
      %v1121 = vld [vmem:[%s1108 + $0x30] sm:$0xf]
      %v1122 = vld [vmem:[%s1108 + $0x34] sm:$0xf]
      %v1123 = vld [vmem:[%s1108 + $0x38] sm:$0xf]
      %v1124 = vld [vmem:[%s1108 + $0x3c] sm:$0xf]
      %v1125 = vunpack.c.l.b16 %v1009
      %v1126 = vunpack.c.l.b16 %v1023
      %v1127 = vunpack.c.l.b16 %v1037
      %v1128 = vunpack.c.l.b16 %v1051
      %v1129 = vunpack.c.l.b16 %v1065
      %v1130 = vunpack.c.l.b16 %v1079
      %v1131 = vunpack.c.l.b16 %v1093
      %v1132 = vunpack.c.l.b16 %v1107
      %v1133 = vpack.c.b16 %v1126, %v1125
      %v1134 = vpack.c.b16 %v1128, %v1127
      %v1135 = vpack.c.b16 %v1130, %v1129
      %v1136 = vpack.c.b16 %v1132, %v1131
      %v1157 = vunpack.c.l.b16 %v1109
      %v1158 = vunpack.c.l.b16 %v1110
      %v1159 = vunpack.c.l.b16 %v1111
      %v1160 = vunpack.c.l.b16 %v1112
      %v1161 = vunpack.c.l.b16 %v1113
      %v1162 = vunpack.c.l.b16 %v1114
      %v1163 = vunpack.c.l.b16 %v1115
      %v1164 = vunpack.c.l.b16 %v1116
      %v1165 = vunpack.c.l.b16 %v1117
      %v1166 = vunpack.c.l.b16 %v1118
      %v1167 = vunpack.c.l.b16 %v1119
      %v1168 = vunpack.c.l.b16 %v1120
      %v1169 = vunpack.c.l.b16 %v1121
      %v1170 = vunpack.c.l.b16 %v1122
      %v1171 = vunpack.c.l.b16 %v1123
      %v1172 = vunpack.c.l.b16 %v1124
      %v1173 = vpack.c.b16 %v1158, %v1157
      %v1174 = vpack.c.b16 %v1160, %v1159
      %v1175 = vpack.c.b16 %v1162, %v1161
      %v1176 = vpack.c.b16 %v1164, %v1163
      %v1177 = vpack.c.b16 %v1166, %v1165
      %v1178 = vpack.c.b16 %v1168, %v1167
      %v1179 = vpack.c.b16 %v1170, %v1169
      %v1180 = vpack.c.b16 %v1172, %v1171
      %1189 = vmatpush.bf16.msra.mxu0 %v1180
      %1190 = vmatpush.bf16.msra.mxu0 %v1179
      %1191 = vmatpush.bf16.msra.mxu0 %v1178
      %1192 = vmatpush.bf16.msra.mxu0 %v1177
      %1193 = vmatpush.bf16.msra.mxu0 %v1176
      %1194 = vmatpush.bf16.msra.mxu0 %v1175
      %1195 = vmatpush.bf16.msra.mxu0 %v1174
      %1196 = vmatpush.bf16.msra.mxu0 %v1173
      %1197 = vmatmul.bf16.gmra.mxu0 %v1133
      %v1198 = vpop.f32.mrf.mxu0
      %v1199 = vadd.f32 0.0, %v1198
      %v1200 = vpop.f32.mrf.mxu0
      %v1201 = vadd.f32 0.0, %v1200
      %1202 = vmatmul.bf16.gmra.mxu0 %v1134
      %v1203 = vpop.f32.mrf.mxu0
      %v1204 = vadd.f32 0.0, %v1203
      %v1205 = vpop.f32.mrf.mxu0
      %v1206 = vadd.f32 0.0, %v1205
      %1207 = vmatmul.bf16.gmra.mxu0 %v1135
      %v1208 = vpop.f32.mrf.mxu0
      %v1209 = vadd.f32 0.0, %v1208
      %v1210 = vpop.f32.mrf.mxu0
      %v1211 = vadd.f32 0.0, %v1210
      %1212 = vmatmul.bf16.gmra.mxu0 %v1136
      %v1213 = vpop.f32.mrf.mxu0
      %v1214 = vadd.f32 0.0, %v1213
      %v1215 = vpop.f32.mrf.mxu0
      %v1216 = vadd.f32 0.0, %v1215
      %1217 = vdwg.mxu0
      %v1218 = vadd.f32 %v972, %v1199
      %v1219 = vadd.f32 %v973, %v1201
      %v1220 = vadd.f32 %v974, %v1204
      %v1221 = vadd.f32 %v975, %v1206
      %v1222 = vadd.f32 %v976, %v1209
      %v1223 = vadd.f32 %v977, %v1211
      %v1224 = vadd.f32 %v978, %v1214
      %v1225 = vadd.f32 %v979, %v1216
      %s1226 = sadd.s32 %s199, 1
      %s1227 = smul.u32 %s1226, 2
      %s1228 = smul.addr %s1227, 4
      %s1229 = scalar_lea.vmem %s187, %s1228
      %v1230 = vld [vmem:[%s1229] sm:$0xf]
      %v1231 = vld [vmem:[%s1229 + $0x8] sm:$0xf]
      %v1232 = vld [vmem:[%s1229 + $0x10] sm:$0xf]
      %v1233 = vld [vmem:[%s1229 + $0x18] sm:$0xf]
      %v1234 = vld [vmem:[%s1229 + $0x20] sm:$0xf]
      %v1235 = vld [vmem:[%s1229 + $0x28] sm:$0xf]
      %v1236 = vld [vmem:[%s1229 + $0x30] sm:$0xf]
      %v1237 = vld [vmem:[%s1229 + $0x38] sm:$0xf]
      %s1238 = scalar_lea.vmem %s1, 384
      %v1239 = vld [vmem:[%s1238] sm:$0xf]
      %v1240 = vld [vmem:[%s1238 + $0x4] sm:$0xf]
      %v1241 = vld [vmem:[%s1238 + $0x8] sm:$0xf]
      %v1242 = vld [vmem:[%s1238 + $0xc] sm:$0xf]
      %v1243 = vld [vmem:[%s1238 + $0x10] sm:$0xf]
      %v1244 = vld [vmem:[%s1238 + $0x14] sm:$0xf]
      %v1245 = vld [vmem:[%s1238 + $0x18] sm:$0xf]
      %v1246 = vld [vmem:[%s1238 + $0x1c] sm:$0xf]
      %v1247 = vld [vmem:[%s1238 + $0x20] sm:$0xf]
      %v1248 = vld [vmem:[%s1238 + $0x24] sm:$0xf]
      %v1249 = vld [vmem:[%s1238 + $0x28] sm:$0xf]
      %v1250 = vld [vmem:[%s1238 + $0x2c] sm:$0xf]
      %v1251 = vld [vmem:[%s1238 + $0x30] sm:$0xf]
      %v1252 = vld [vmem:[%s1238 + $0x34] sm:$0xf]
      %v1253 = vld [vmem:[%s1238 + $0x38] sm:$0xf]
      %v1254 = vld [vmem:[%s1238 + $0x3c] sm:$0xf]
      %v1263 = vunpack.c.l.b16 %v1230
      %v1264 = vunpack.c.l.b16 %v1231
      %v1265 = vunpack.c.l.b16 %v1232
      %v1266 = vunpack.c.l.b16 %v1233
      %v1267 = vunpack.c.l.b16 %v1234
      %v1268 = vunpack.c.l.b16 %v1235
      %v1269 = vunpack.c.l.b16 %v1236
      %v1270 = vunpack.c.l.b16 %v1237
      %v1271 = vpack.c.b16 %v1264, %v1263
      %v1272 = vpack.c.b16 %v1266, %v1265
      %v1273 = vpack.c.b16 %v1268, %v1267
      %v1274 = vpack.c.b16 %v1270, %v1269
      %v1295 = vunpack.c.l.b16 %v1239
      %v1296 = vunpack.c.l.b16 %v1240
      %v1297 = vunpack.c.l.b16 %v1241
      %v1298 = vunpack.c.l.b16 %v1242
      %v1299 = vunpack.c.l.b16 %v1243
      %v1300 = vunpack.c.l.b16 %v1244
      %v1301 = vunpack.c.l.b16 %v1245
      %v1302 = vunpack.c.l.b16 %v1246
      %v1303 = vunpack.c.l.b16 %v1247
      %v1304 = vunpack.c.l.b16 %v1248
      %v1305 = vunpack.c.l.b16 %v1249
      %v1306 = vunpack.c.l.b16 %v1250
      %v1307 = vunpack.c.l.b16 %v1251
      %v1308 = vunpack.c.l.b16 %v1252
      %v1309 = vunpack.c.l.b16 %v1253
      %v1310 = vunpack.c.l.b16 %v1254
      %v1311 = vpack.c.b16 %v1296, %v1295
      %v1312 = vpack.c.b16 %v1298, %v1297
      %v1313 = vpack.c.b16 %v1300, %v1299
      %v1314 = vpack.c.b16 %v1302, %v1301
      %v1315 = vpack.c.b16 %v1304, %v1303
      %v1316 = vpack.c.b16 %v1306, %v1305
      %v1317 = vpack.c.b16 %v1308, %v1307
      %v1318 = vpack.c.b16 %v1310, %v1309
      %1327 = vmatpush.bf16.msra.mxu0 %v1318
      %1328 = vmatpush.bf16.msra.mxu0 %v1317
      %1329 = vmatpush.bf16.msra.mxu0 %v1316
      %1330 = vmatpush.bf16.msra.mxu0 %v1315
      %1331 = vmatpush.bf16.msra.mxu0 %v1314
      %1332 = vmatpush.bf16.msra.mxu0 %v1313
      %1333 = vmatpush.bf16.msra.mxu0 %v1312
      %1334 = vmatpush.bf16.msra.mxu0 %v1311
      %1335 = vmatmul.bf16.gmra.mxu0 %v1271
      %v1336 = vpop.f32.mrf.mxu0
      %v1337 = vadd.f32 0.0, %v1336
      %v1338 = vpop.f32.mrf.mxu0
      %v1339 = vadd.f32 0.0, %v1338
      %1340 = vmatmul.bf16.gmra.mxu0 %v1272
      %v1341 = vpop.f32.mrf.mxu0
      %v1342 = vadd.f32 0.0, %v1341
      %v1343 = vpop.f32.mrf.mxu0
      %v1344 = vadd.f32 0.0, %v1343
      %1345 = vmatmul.bf16.gmra.mxu0 %v1273
      %v1346 = vpop.f32.mrf.mxu0
      %v1347 = vadd.f32 0.0, %v1346
      %v1348 = vpop.f32.mrf.mxu0
      %v1349 = vadd.f32 0.0, %v1348
      %1350 = vmatmul.bf16.gmra.mxu0 %v1274
      %v1351 = vpop.f32.mrf.mxu0
      %v1352 = vadd.f32 0.0, %v1351
      %v1353 = vpop.f32.mrf.mxu0
      %v1354 = vadd.f32 0.0, %v1353
      %1355 = vdwg.mxu0
      %v1356 = vadd.f32 %v1218, %v1337
      %v1357 = vadd.f32 %v1219, %v1339
      %v1358 = vadd.f32 %v1220, %v1342
      %v1359 = vadd.f32 %v1221, %v1344
      %v1360 = vadd.f32 %v1222, %v1347
      %v1361 = vadd.f32 %v1223, %v1349
      %v1362 = vadd.f32 %v1224, %v1352
      %v1363 = vadd.f32 %v1225, %v1354
      %s1364 = sadd.s32 %s1227, 18
      %s1365 = smul.addr %s1364, 4
      %s1366 = scalar_lea.vmem %s187, %s1365
      %v1367 = vld [vmem:[%s1366] sm:$0xf]
      %v1368 = vld [vmem:[%s1366 + $0x8] sm:$0xf]
      %v1369 = vld [vmem:[%s1366 + $0x10] sm:$0xf]
      %v1370 = vld [vmem:[%s1366 + $0x18] sm:$0xf]
      %v1371 = vld [vmem:[%s1366 + $0x20] sm:$0xf]
      %v1372 = vld [vmem:[%s1366 + $0x28] sm:$0xf]
      %v1373 = vld [vmem:[%s1366 + $0x30] sm:$0xf]
      %v1374 = vld [vmem:[%s1366 + $0x38] sm:$0xf]
      %s1375 = scalar_lea.vmem %s1, 448
      %v1376 = vld [vmem:[%s1375] sm:$0xf]
      %v1377 = vld [vmem:[%s1375 + $0x4] sm:$0xf]
      %v1378 = vld [vmem:[%s1375 + $0x8] sm:$0xf]
      %v1379 = vld [vmem:[%s1375 + $0xc] sm:$0xf]
      %v1380 = vld [vmem:[%s1375 + $0x10] sm:$0xf]
      %v1381 = vld [vmem:[%s1375 + $0x14] sm:$0xf]
      %v1382 = vld [vmem:[%s1375 + $0x18] sm:$0xf]
      %v1383 = vld [vmem:[%s1375 + $0x1c] sm:$0xf]
      %v1384 = vld [vmem:[%s1375 + $0x20] sm:$0xf]
      %v1385 = vld [vmem:[%s1375 + $0x24] sm:$0xf]
      %v1386 = vld [vmem:[%s1375 + $0x28] sm:$0xf]
      %v1387 = vld [vmem:[%s1375 + $0x2c] sm:$0xf]
      %v1388 = vld [vmem:[%s1375 + $0x30] sm:$0xf]
      %v1389 = vld [vmem:[%s1375 + $0x34] sm:$0xf]
      %v1390 = vld [vmem:[%s1375 + $0x38] sm:$0xf]
      %v1391 = vld [vmem:[%s1375 + $0x3c] sm:$0xf]
      %v1400 = vunpack.c.l.b16 %v1367
      %v1401 = vunpack.c.l.b16 %v1368
      %v1402 = vunpack.c.l.b16 %v1369
      %v1403 = vunpack.c.l.b16 %v1370
      %v1404 = vunpack.c.l.b16 %v1371
      %v1405 = vunpack.c.l.b16 %v1372
      %v1406 = vunpack.c.l.b16 %v1373
      %v1407 = vunpack.c.l.b16 %v1374
      %v1408 = vpack.c.b16 %v1401, %v1400
      %v1409 = vpack.c.b16 %v1403, %v1402
      %v1410 = vpack.c.b16 %v1405, %v1404
      %v1411 = vpack.c.b16 %v1407, %v1406
      %v1432 = vunpack.c.l.b16 %v1376
      %v1433 = vunpack.c.l.b16 %v1377
      %v1434 = vunpack.c.l.b16 %v1378
      %v1435 = vunpack.c.l.b16 %v1379
      %v1436 = vunpack.c.l.b16 %v1380
      %v1437 = vunpack.c.l.b16 %v1381
      %v1438 = vunpack.c.l.b16 %v1382
      %v1439 = vunpack.c.l.b16 %v1383
      %v1440 = vunpack.c.l.b16 %v1384
      %v1441 = vunpack.c.l.b16 %v1385
      %v1442 = vunpack.c.l.b16 %v1386
      %v1443 = vunpack.c.l.b16 %v1387
      %v1444 = vunpack.c.l.b16 %v1388
      %v1445 = vunpack.c.l.b16 %v1389
      %v1446 = vunpack.c.l.b16 %v1390
      %v1447 = vunpack.c.l.b16 %v1391
      %v1448 = vpack.c.b16 %v1433, %v1432
      %v1449 = vpack.c.b16 %v1435, %v1434
      %v1450 = vpack.c.b16 %v1437, %v1436
      %v1451 = vpack.c.b16 %v1439, %v1438
      %v1452 = vpack.c.b16 %v1441, %v1440
      %v1453 = vpack.c.b16 %v1443, %v1442
      %v1454 = vpack.c.b16 %v1445, %v1444
      %v1455 = vpack.c.b16 %v1447, %v1446
      %1464 = vmatpush.bf16.msra.mxu0 %v1455
      %1465 = vmatpush.bf16.msra.mxu0 %v1454
      %1466 = vmatpush.bf16.msra.mxu0 %v1453
      %1467 = vmatpush.bf16.msra.mxu0 %v1452
      %1468 = vmatpush.bf16.msra.mxu0 %v1451
      %1469 = vmatpush.bf16.msra.mxu0 %v1450
      %1470 = vmatpush.bf16.msra.mxu0 %v1449
      %1471 = vmatpush.bf16.msra.mxu0 %v1448
      %1472 = vmatmul.bf16.gmra.mxu0 %v1408
      %v1473 = vpop.f32.mrf.mxu0
      %v1474 = vadd.f32 0.0, %v1473
      %v1475 = vpop.f32.mrf.mxu0
      %v1476 = vadd.f32 0.0, %v1475
      %1477 = vmatmul.bf16.gmra.mxu0 %v1409
      %v1478 = vpop.f32.mrf.mxu0
      %v1479 = vadd.f32 0.0, %v1478
      %v1480 = vpop.f32.mrf.mxu0
      %v1481 = vadd.f32 0.0, %v1480
      %1482 = vmatmul.bf16.gmra.mxu0 %v1410
      %v1483 = vpop.f32.mrf.mxu0
      %v1484 = vadd.f32 0.0, %v1483
      %v1485 = vpop.f32.mrf.mxu0
      %v1486 = vadd.f32 0.0, %v1485
      %1487 = vmatmul.bf16.gmra.mxu0 %v1411
      %v1488 = vpop.f32.mrf.mxu0
      %v1489 = vadd.f32 0.0, %v1488
      %v1490 = vpop.f32.mrf.mxu0
      %v1491 = vadd.f32 0.0, %v1490
      %1492 = vdwg.mxu0
      %v1493 = vadd.f32 %v1356, %v1474
      %v1494 = vadd.f32 %v1357, %v1476
      %v1495 = vadd.f32 %v1358, %v1479
      %v1496 = vadd.f32 %v1359, %v1481
      %v1497 = vadd.f32 %v1360, %v1484
      %v1498 = vadd.f32 %v1361, %v1486
      %v1499 = vadd.f32 %v1362, %v1489
      %v1500 = vadd.f32 %v1363, %v1491
      %v1501 = vld [vmem:[%s1229] sm:$0xf]
      %v1502 = vld [vmem:[%s1229 + $0x4] sm:$0x1]
      %v1503 = vld [vmem:[%s1229 + $0x8] sm:$0xf]
      %v1504 = vld [vmem:[%s1229 + $0xc] sm:$0x1]
      %v1505 = vld [vmem:[%s1229 + $0x10] sm:$0xf]
      %v1506 = vld [vmem:[%s1229 + $0x14] sm:$0x1]
      %v1507 = vld [vmem:[%s1229 + $0x18] sm:$0xf]
      %v1508 = vld [vmem:[%s1229 + $0x1c] sm:$0x1]
      %v1509 = vld [vmem:[%s1229 + $0x20] sm:$0xf]
      %v1510 = vld [vmem:[%s1229 + $0x24] sm:$0x1]
      %v1511 = vld [vmem:[%s1229 + $0x28] sm:$0xf]
      %v1512 = vld [vmem:[%s1229 + $0x2c] sm:$0x1]
      %v1513 = vld [vmem:[%s1229 + $0x30] sm:$0xf]
      %v1514 = vld [vmem:[%s1229 + $0x34] sm:$0x1]
      %v1515 = vld [vmem:[%s1229 + $0x38] sm:$0xf]
      %v1516 = vld [vmem:[%s1229 + $0x3c] sm:$0x1]
      %v1518 = vshrl.u32 %v1501, 16
      %v1520 = vrot.slane %v1518, 4
      %v1521 = vshll.u32 %v1501, 16
      %v1523 = vrot.slane %v1521, 5
      %v1524 = vor.u32 %v1520, %v1523
      %v1525 = vrot.slane %v1524, 4
      %v1527 = vshll.u32 %v1502, 16
      %v1529 = vrot.slane %v1527, 5
      %v1530 = vsel %vm475, %v1525, %v1529
      %v1532 = vshrl.u32 %v1503, 16
      %v1534 = vrot.slane %v1532, 4
      %v1535 = vshll.u32 %v1503, 16
      %v1537 = vrot.slane %v1535, 5
      %v1538 = vor.u32 %v1534, %v1537
      %v1539 = vrot.slane %v1538, 4
      %v1541 = vshll.u32 %v1504, 16
      %v1543 = vrot.slane %v1541, 5
      %v1544 = vsel %vm475, %v1539, %v1543
      %v1546 = vshrl.u32 %v1505, 16
      %v1548 = vrot.slane %v1546, 4
      %v1549 = vshll.u32 %v1505, 16
      %v1551 = vrot.slane %v1549, 5
      %v1552 = vor.u32 %v1548, %v1551
      %v1553 = vrot.slane %v1552, 4
      %v1555 = vshll.u32 %v1506, 16
      %v1557 = vrot.slane %v1555, 5
      %v1558 = vsel %vm475, %v1553, %v1557
      %v1560 = vshrl.u32 %v1507, 16
      %v1562 = vrot.slane %v1560, 4
      %v1563 = vshll.u32 %v1507, 16
      %v1565 = vrot.slane %v1563, 5
      %v1566 = vor.u32 %v1562, %v1565
      %v1567 = vrot.slane %v1566, 4
      %v1569 = vshll.u32 %v1508, 16
      %v1571 = vrot.slane %v1569, 5
      %v1572 = vsel %vm475, %v1567, %v1571
      %v1574 = vshrl.u32 %v1509, 16
      %v1576 = vrot.slane %v1574, 4
      %v1577 = vshll.u32 %v1509, 16
      %v1579 = vrot.slane %v1577, 5
      %v1580 = vor.u32 %v1576, %v1579
      %v1581 = vrot.slane %v1580, 4
      %v1583 = vshll.u32 %v1510, 16
      %v1585 = vrot.slane %v1583, 5
      %v1586 = vsel %vm475, %v1581, %v1585
      %v1588 = vshrl.u32 %v1511, 16
      %v1590 = vrot.slane %v1588, 4
      %v1591 = vshll.u32 %v1511, 16
      %v1593 = vrot.slane %v1591, 5
      %v1594 = vor.u32 %v1590, %v1593
      %v1595 = vrot.slane %v1594, 4
      %v1597 = vshll.u32 %v1512, 16
      %v1599 = vrot.slane %v1597, 5
      %v1600 = vsel %vm475, %v1595, %v1599
      %v1602 = vshrl.u32 %v1513, 16
      %v1604 = vrot.slane %v1602, 4
      %v1605 = vshll.u32 %v1513, 16
      %v1607 = vrot.slane %v1605, 5
      %v1608 = vor.u32 %v1604, %v1607
      %v1609 = vrot.slane %v1608, 4
      %v1611 = vshll.u32 %v1514, 16
      %v1613 = vrot.slane %v1611, 5
      %v1614 = vsel %vm475, %v1609, %v1613
      %v1616 = vshrl.u32 %v1515, 16
      %v1618 = vrot.slane %v1616, 4
      %v1619 = vshll.u32 %v1515, 16
      %v1621 = vrot.slane %v1619, 5
      %v1622 = vor.u32 %v1618, %v1621
      %v1623 = vrot.slane %v1622, 4
      %v1625 = vshll.u32 %v1516, 16
      %v1627 = vrot.slane %v1625, 5
      %v1628 = vsel %vm475, %v1623, %v1627
      %s1629 = scalar_lea.vmem %s1, 512
      %v1630 = vld [vmem:[%s1629] sm:$0xf]
      %v1631 = vld [vmem:[%s1629 + $0x4] sm:$0xf]
      %v1632 = vld [vmem:[%s1629 + $0x8] sm:$0xf]
      %v1633 = vld [vmem:[%s1629 + $0xc] sm:$0xf]
      %v1634 = vld [vmem:[%s1629 + $0x10] sm:$0xf]
      %v1635 = vld [vmem:[%s1629 + $0x14] sm:$0xf]
      %v1636 = vld [vmem:[%s1629 + $0x18] sm:$0xf]
      %v1637 = vld [vmem:[%s1629 + $0x1c] sm:$0xf]
      %v1638 = vld [vmem:[%s1629 + $0x20] sm:$0xf]
      %v1639 = vld [vmem:[%s1629 + $0x24] sm:$0xf]
      %v1640 = vld [vmem:[%s1629 + $0x28] sm:$0xf]
      %v1641 = vld [vmem:[%s1629 + $0x2c] sm:$0xf]
      %v1642 = vld [vmem:[%s1629 + $0x30] sm:$0xf]
      %v1643 = vld [vmem:[%s1629 + $0x34] sm:$0xf]
      %v1644 = vld [vmem:[%s1629 + $0x38] sm:$0xf]
      %v1645 = vld [vmem:[%s1629 + $0x3c] sm:$0xf]
      %v1646 = vunpack.c.l.b16 %v1530
      %v1647 = vunpack.c.l.b16 %v1544
      %v1648 = vunpack.c.l.b16 %v1558
      %v1649 = vunpack.c.l.b16 %v1572
      %v1650 = vunpack.c.l.b16 %v1586
      %v1651 = vunpack.c.l.b16 %v1600
      %v1652 = vunpack.c.l.b16 %v1614
      %v1653 = vunpack.c.l.b16 %v1628
      %v1654 = vpack.c.b16 %v1647, %v1646
      %v1655 = vpack.c.b16 %v1649, %v1648
      %v1656 = vpack.c.b16 %v1651, %v1650
      %v1657 = vpack.c.b16 %v1653, %v1652
      %v1678 = vunpack.c.l.b16 %v1630
      %v1679 = vunpack.c.l.b16 %v1631
      %v1680 = vunpack.c.l.b16 %v1632
      %v1681 = vunpack.c.l.b16 %v1633
      %v1682 = vunpack.c.l.b16 %v1634
      %v1683 = vunpack.c.l.b16 %v1635
      %v1684 = vunpack.c.l.b16 %v1636
      %v1685 = vunpack.c.l.b16 %v1637
      %v1686 = vunpack.c.l.b16 %v1638
      %v1687 = vunpack.c.l.b16 %v1639
      %v1688 = vunpack.c.l.b16 %v1640
      %v1689 = vunpack.c.l.b16 %v1641
      %v1690 = vunpack.c.l.b16 %v1642
      %v1691 = vunpack.c.l.b16 %v1643
      %v1692 = vunpack.c.l.b16 %v1644
      %v1693 = vunpack.c.l.b16 %v1645
      %v1694 = vpack.c.b16 %v1679, %v1678
      %v1695 = vpack.c.b16 %v1681, %v1680
      %v1696 = vpack.c.b16 %v1683, %v1682
      %v1697 = vpack.c.b16 %v1685, %v1684
      %v1698 = vpack.c.b16 %v1687, %v1686
      %v1699 = vpack.c.b16 %v1689, %v1688
      %v1700 = vpack.c.b16 %v1691, %v1690
      %v1701 = vpack.c.b16 %v1693, %v1692
      %1710 = vmatpush.bf16.msra.mxu0 %v1701
      %1711 = vmatpush.bf16.msra.mxu0 %v1700
      %1712 = vmatpush.bf16.msra.mxu0 %v1699
      %1713 = vmatpush.bf16.msra.mxu0 %v1698
      %1714 = vmatpush.bf16.msra.mxu0 %v1697
      %1715 = vmatpush.bf16.msra.mxu0 %v1696
      %1716 = vmatpush.bf16.msra.mxu0 %v1695
      %1717 = vmatpush.bf16.msra.mxu0 %v1694
      %1718 = vmatmul.bf16.gmra.mxu0 %v1654
      %v1719 = vpop.f32.mrf.mxu0
      %v1720 = vadd.f32 0.0, %v1719
      %v1721 = vpop.f32.mrf.mxu0
      %v1722 = vadd.f32 0.0, %v1721
      %1723 = vmatmul.bf16.gmra.mxu0 %v1655
      %v1724 = vpop.f32.mrf.mxu0
      %v1725 = vadd.f32 0.0, %v1724
      %v1726 = vpop.f32.mrf.mxu0
      %v1727 = vadd.f32 0.0, %v1726
      %1728 = vmatmul.bf16.gmra.mxu0 %v1656
      %v1729 = vpop.f32.mrf.mxu0
      %v1730 = vadd.f32 0.0, %v1729
      %v1731 = vpop.f32.mrf.mxu0
      %v1732 = vadd.f32 0.0, %v1731
      %1733 = vmatmul.bf16.gmra.mxu0 %v1657
      %v1734 = vpop.f32.mrf.mxu0
      %v1735 = vadd.f32 0.0, %v1734
      %v1736 = vpop.f32.mrf.mxu0
      %v1737 = vadd.f32 0.0, %v1736
      %1738 = vdwg.mxu0
      %v1739 = vadd.f32 %v1493, %v1720
      %v1740 = vadd.f32 %v1494, %v1722
      %v1741 = vadd.f32 %v1495, %v1725
      %v1742 = vadd.f32 %v1496, %v1727
      %v1743 = vadd.f32 %v1497, %v1730
      %v1744 = vadd.f32 %v1498, %v1732
      %v1745 = vadd.f32 %v1499, %v1735
      %v1746 = vadd.f32 %v1500, %v1737
      %v1747 = vld [vmem:[%s2] sm:$0x1]
      %v1749 = vperm.slane %v1747, 0
      %v1751 = vadd.f32 %v1739, %v1749
      %v1752 = vadd.f32 %v1740, %v1749
      %v1753 = vadd.f32 %v1741, %v1749
      %v1754 = vadd.f32 %v1742, %v1749
      %v1755 = vadd.f32 %v1743, %v1749
      %v1756 = vadd.f32 %v1744, %v1749
      %v1757 = vadd.f32 %v1745, %v1749
      %v1758 = vadd.f32 %v1746, %v1749
      %v1759 = vmax.f32 %v1751, 0.0
      %v1760 = vmax.f32 %v1752, 0.0
      %v1761 = vmax.f32 %v1753, 0.0
      %v1762 = vmax.f32 %v1754, 0.0
      %v1763 = vmax.f32 %v1755, 0.0
      %v1764 = vmax.f32 %v1756, 0.0
      %v1765 = vmax.f32 %v1757, 0.0
      %v1766 = vmax.f32 %v1758, 0.0
      %v1767 = vpack.c.bf16 %v1759, %v1759
      %v1768 = vpack.c.bf16 %v1760, %v1760
      %v1769 = vpack.c.bf16 %v1761, %v1761
      %v1770 = vpack.c.bf16 %v1762, %v1762
      %v1771 = vpack.c.bf16 %v1763, %v1763
      %v1772 = vpack.c.bf16 %v1764, %v1764
      %v1773 = vpack.c.bf16 %v1765, %v1765
      %v1774 = vpack.c.bf16 %v1766, %v1766
      %1775 = vst [vmem:[%s197] sm:$0xf] %v1767
      %1776 = vst [vmem:[%s197 + $0x4] sm:$0xf] %v1768
      %1777 = vst [vmem:[%s197 + $0x8] sm:$0xf] %v1769
      %1778 = vst [vmem:[%s197 + $0xc] sm:$0xf] %v1770
      %1779 = vst [vmem:[%s197 + $0x10] sm:$0xf] %v1771
      %1780 = vst [vmem:[%s197 + $0x14] sm:$0xf] %v1772
      %1781 = vst [vmem:[%s197 + $0x18] sm:$0xf] %v1773
      %1782 = vst [vmem:[%s197 + $0x1c] sm:$0xf] %v1774
      %s1783 = smul.u32 8, %s19
      %p1784 = scmp.lt.s32.totalorder %s18, 1
      %s1785 = scalar_select %p1784, %s18, 1
      %p1786 = scmp.lt.s32.totalorder %s1783, 7
      %s1787 = scalar_select %p1786, %s1783, 7
      %s1788 = smul.addr %s1785, 8
      %s1789 = sadd.s32 %s1787, %s1788
      %s1790 = smul.addr %s1789, 4
      %s1791 = scalar_lea.vmem %s3, %s1790
      // Predicated region
      $region33: #{bottleneck_forward.5} parent=31 // pred_check
        %p1792 = pneg %p114
      $region34: #{bottleneck_forward.5} parent=31 // pred_check_branch
        %1794 = sbr.rel (%p1792) target = $region36
      $region35: #{bottleneck_forward.5} parent=31 // pred_region
        %s1795 = smul.u32 8, %s19
      $region36: #{bottleneck_forward.5} parent=31 // pred_fallthru
        _
    $region32: #{bottleneck_forward.5} parent=5 // pred_fallthru
      _
    %p1796 = scmp.le.s32.totalorder 2, %s9
    // Predicated region
    $region37: #{bottleneck_forward.5} parent=5 // pred_check
      %p1797 = pneg %p1796
    $region38: #{bottleneck_forward.5} parent=5 // pred_check_branch
      %1799 = sbr.rel (%p1797) target = $region40
    $region39: #{bottleneck_forward.5} parent=5 // pred_region
      %s1800 = ssub.s32 %s9, 2
      // Predicated region
      $region41: #{bottleneck_forward.5} parent=39 // pred_check
        %p1801 = pneg %p120
      $region42: #{bottleneck_forward.5} parent=39 // pred_check_branch
        %1803 = sbr.rel (%p1801) target = $region44
      $region43: #{bottleneck_forward.5} parent=39 // pred_region
        %s1804 = smul.u32 8, %s21
        %p1805 = scmp.lt.s32.totalorder %s20, 1
        %s1806 = scalar_select %p1805, %s20, 1
        %p1807 = scmp.lt.s32.totalorder %s1804, 7
        %s1808 = scalar_select %p1807, %s1804, 7
        %s1809 = smul.addr %s1806, 8
        %s1810 = sadd.s32 %s1808, %s1809
        %s1811 = smul.addr %s1810, 4
        %s1812 = scalar_lea.vmem %s3, %s1811
      $region44: #{bottleneck_forward.5} parent=39 // pred_fallthru
        _
    $region40: #{bottleneck_forward.5} parent=5 // pred_fallthru
      _
  $region6: #{bottleneck_forward.5} parent=0 // loop_footer
    %s13 = sadd.s32 1, %s9
  $region7: #{bottleneck_forward.5} parent=0 // loop_footer_branch
    %8 = sbr.rel target = $region3
  $region8: #{bottleneck_forward.5} parent=0 // loop_exit
    _

// kernel: bottleneck_forward.6
$region0: #{bottleneck_forward.6}
  #allocation0 [shape = 'u32[]', space=smem, size = 0x4, offset = 0x4, fixed_abs, tag = 'smem constant byte address 0x4 - core index']
  #allocation1 [shape = 'u32[72,128]{1,0:T(1,128)}', space=vmem, size = 0x9000, scoped, tag = 'internal scratch']
  %s0 = inlined_call_operand.vmem [shape: bf16[128,128], index: 0, kind: input, shape index: {}]
  %s1 = inlined_call_operand.vmem [shape: bf16[128,128], index: 1, kind: input, shape index: {}]
  %s2 = inlined_call_operand.vmem [shape: f32[1,128], index: 2, kind: input, shape index: {}]
  %s3 = inlined_call_operand.vmem [shape: bf16[128,128], index: 3, kind: output, shape index: {}]
  %s4 = sld [smem:[#allocation0]]
  $region22: #{bottleneck_forward.6} parent=0
    _
  %s6 = ssub.s32 1, %s4
  %s7 = scalar_select 0, %s6, %s4
  // Predicated region
  $region2: #{bottleneck_forward.6} parent=0 // pred_check
    _
  $region3: #{bottleneck_forward.6} parent=0 // pred_check_branch
    %9 = sbr.rel (0) target = $region5
  $region4: #{bottleneck_forward.6} parent=0 // pred_region
    _
  $region5: #{bottleneck_forward.6} parent=0 // pred_fallthru
    _
  // Predicated region
  $region6: #{bottleneck_forward.6} parent=0 // pred_check
    _
  $region7: #{bottleneck_forward.6} parent=0 // pred_check_branch
    %11 = sbr.rel (0) target = $region9
  $region8: #{bottleneck_forward.6} parent=0 // pred_region
    _
  $region9: #{bottleneck_forward.6} parent=0 // pred_fallthru
    _
  // Predicated region
  $region10: #{bottleneck_forward.6} parent=0 // pred_check
    _
  $region11: #{bottleneck_forward.6} parent=0 // pred_check_branch
    %13 = sbr.rel (0) target = $region13
  $region12: #{bottleneck_forward.6} parent=0 // pred_region
    _
  $region13: #{bottleneck_forward.6} parent=0 // pred_fallthru
    _
  %v14 = vld [vmem:[%s0] sm:$0xf]
  %v15 = vld [vmem:[%s0 + $0x4] sm:$0xf]
  %v16 = vld [vmem:[%s0 + $0x8] sm:$0xf]
  %v17 = vld [vmem:[%s0 + $0xc] sm:$0xf]
  %v18 = vld [vmem:[%s0 + $0x10] sm:$0xf]
  %v19 = vld [vmem:[%s0 + $0x14] sm:$0xf]
  %v20 = vld [vmem:[%s0 + $0x18] sm:$0xf]
  %v21 = vld [vmem:[%s0 + $0x1c] sm:$0xf]
  %v22 = vld [vmem:[%s0 + $0x20] sm:$0xf]
  %v23 = vld [vmem:[%s0 + $0x24] sm:$0xf]
  %v24 = vld [vmem:[%s0 + $0x28] sm:$0xf]
  %v25 = vld [vmem:[%s0 + $0x2c] sm:$0xf]
  %v26 = vld [vmem:[%s0 + $0x30] sm:$0xf]
  %v27 = vld [vmem:[%s0 + $0x34] sm:$0xf]
  %v28 = vld [vmem:[%s0 + $0x38] sm:$0xf]
  %v29 = vld [vmem:[%s0 + $0x3c] sm:$0xf]
  %v30 = vld [vmem:[%s1] sm:$0xf]
  %v31 = vld [vmem:[%s1 + $0x4] sm:$0xf]
  %v32 = vld [vmem:[%s1 + $0x8] sm:$0xf]
  %v33 = vld [vmem:[%s1 + $0xc] sm:$0xf]
  %v34 = vld [vmem:[%s1 + $0x10] sm:$0xf]
  %v35 = vld [vmem:[%s1 + $0x14] sm:$0xf]
  %v36 = vld [vmem:[%s1 + $0x18] sm:$0xf]
  %v37 = vld [vmem:[%s1 + $0x1c] sm:$0xf]
  %v38 = vld [vmem:[%s1 + $0x20] sm:$0xf]
  %v39 = vld [vmem:[%s1 + $0x24] sm:$0xf]
  %v40 = vld [vmem:[%s1 + $0x28] sm:$0xf]
  %v41 = vld [vmem:[%s1 + $0x2c] sm:$0xf]
  %v42 = vld [vmem:[%s1 + $0x30] sm:$0xf]
  %v43 = vld [vmem:[%s1 + $0x34] sm:$0xf]
  %v44 = vld [vmem:[%s1 + $0x38] sm:$0xf]
  %v45 = vld [vmem:[%s1 + $0x3c] sm:$0xf]
  %v46 = vld [vmem:[%s2] sm:$0x1]
  %v48 = vperm.slane %v46, 0
  %v66 = vunpack.c.l.b16 %v14
  %v67 = vunpack.c.l.b16 %v15
  %v68 = vunpack.c.l.b16 %v16
  %v69 = vunpack.c.l.b16 %v17
  %v70 = vunpack.c.l.b16 %v18
  %v71 = vunpack.c.l.b16 %v19
  %v72 = vunpack.c.l.b16 %v20
  %v73 = vunpack.c.l.b16 %v21
  %v74 = vunpack.c.l.b16 %v22
  %v75 = vunpack.c.l.b16 %v23
  %v76 = vunpack.c.l.b16 %v24
  %v77 = vunpack.c.l.b16 %v25
  %v78 = vunpack.c.l.b16 %v26
  %v79 = vunpack.c.l.b16 %v27
  %v80 = vunpack.c.l.b16 %v28
  %v81 = vunpack.c.l.b16 %v29
  %v82 = vpack.c.b16 %v67, %v66
  %v83 = vpack.c.b16 %v69, %v68
  %v84 = vpack.c.b16 %v71, %v70
  %v85 = vpack.c.b16 %v73, %v72
  %v86 = vpack.c.b16 %v75, %v74
  %v87 = vpack.c.b16 %v77, %v76
  %v88 = vpack.c.b16 %v79, %v78
  %v89 = vpack.c.b16 %v81, %v80
  %v114 = vunpack.c.l.b16 %v30
  %v115 = vunpack.c.l.b16 %v31
  %v116 = vunpack.c.l.b16 %v32
  %v117 = vunpack.c.l.b16 %v33
  %v118 = vunpack.c.l.b16 %v34
  %v119 = vunpack.c.l.b16 %v35
  %v120 = vunpack.c.l.b16 %v36
  %v121 = vunpack.c.l.b16 %v37
  %v122 = vunpack.c.l.b16 %v38
  %v123 = vunpack.c.l.b16 %v39
  %v124 = vunpack.c.l.b16 %v40
  %v125 = vunpack.c.l.b16 %v41
  %v126 = vunpack.c.l.b16 %v42
  %v127 = vunpack.c.l.b16 %v43
  %v128 = vunpack.c.l.b16 %v44
  %v129 = vunpack.c.l.b16 %v45
  %v130 = vpack.c.b16 %v115, %v114
  %v131 = vpack.c.b16 %v117, %v116
  %v132 = vpack.c.b16 %v119, %v118
  %v133 = vpack.c.b16 %v121, %v120
  %v134 = vpack.c.b16 %v123, %v122
  %v135 = vpack.c.b16 %v125, %v124
  %v136 = vpack.c.b16 %v127, %v126
  %v137 = vpack.c.b16 %v129, %v128
  %146 = vmatpush.bf16.msra.mxu0 %v137
  %147 = vmatpush.bf16.msra.mxu0 %v136
  %148 = vmatpush.bf16.msra.mxu0 %v135
  %149 = vmatpush.bf16.msra.mxu0 %v134
  %150 = vmatpush.bf16.msra.mxu0 %v133
  %151 = vmatpush.bf16.msra.mxu0 %v132
  %152 = vmatpush.bf16.msra.mxu0 %v131
  %153 = vmatpush.bf16.msra.mxu0 %v130
  %154 = vmatmul.bf16.gmra.mxu0 %v82
  %v155 = vpop.f32.mrf.mxu0
  %v156 = vadd.f32 %v48, %v155
  %v157 = vpop.f32.mrf.mxu0
  %v158 = vadd.f32 %v48, %v157
  %159 = vmatmul.bf16.gmra.mxu0 %v83
  %v160 = vpop.f32.mrf.mxu0
  %v161 = vadd.f32 %v48, %v160
  %v162 = vpop.f32.mrf.mxu0
  %v163 = vadd.f32 %v48, %v162
  %164 = vmatmul.bf16.gmra.mxu0 %v84
  %v165 = vpop.f32.mrf.mxu0
  %v166 = vadd.f32 %v48, %v165
  %v167 = vpop.f32.mrf.mxu0
  %v168 = vadd.f32 %v48, %v167
  %169 = vmatmul.bf16.gmra.mxu0 %v85
  %v170 = vpop.f32.mrf.mxu0
  %v171 = vadd.f32 %v48, %v170
  %v172 = vpop.f32.mrf.mxu0
  %v173 = vadd.f32 %v48, %v172
  %174 = vmatmul.bf16.gmra.mxu0 %v86
  %v175 = vpop.f32.mrf.mxu0
  %v176 = vadd.f32 %v48, %v175
  %v177 = vpop.f32.mrf.mxu0
  %v178 = vadd.f32 %v48, %v177
  %179 = vmatmul.bf16.gmra.mxu0 %v87
  %v180 = vpop.f32.mrf.mxu0
  %v181 = vadd.f32 %v48, %v180
  %v182 = vpop.f32.mrf.mxu0
  %v183 = vadd.f32 %v48, %v182
  %184 = vmatmul.bf16.gmra.mxu0 %v88
  %v185 = vpop.f32.mrf.mxu0
  %v186 = vadd.f32 %v48, %v185
  %v187 = vpop.f32.mrf.mxu0
  %v188 = vadd.f32 %v48, %v187
  %189 = vmatmul.bf16.gmra.mxu0 %v89
  %v190 = vpop.f32.mrf.mxu0
  %v191 = vadd.f32 %v48, %v190
  %v192 = vpop.f32.mrf.mxu0
  %v193 = vadd.f32 %v48, %v192
  %194 = vdwg.mxu0
  %v195 = vpack.c.bf16 %v156, %v156
  %v196 = vpack.c.bf16 %v158, %v158
  %v197 = vpack.c.bf16 %v161, %v161
  %v198 = vpack.c.bf16 %v163, %v163
  %v199 = vpack.c.bf16 %v166, %v166
  %v200 = vpack.c.bf16 %v168, %v168
  %v201 = vpack.c.bf16 %v171, %v171
  %v202 = vpack.c.bf16 %v173, %v173
  %v203 = vpack.c.bf16 %v176, %v176
  %v204 = vpack.c.bf16 %v178, %v178
  %v205 = vpack.c.bf16 %v181, %v181
  %v206 = vpack.c.bf16 %v183, %v183
  %v207 = vpack.c.bf16 %v186, %v186
  %v208 = vpack.c.bf16 %v188, %v188
  %v209 = vpack.c.bf16 %v191, %v191
  %v210 = vpack.c.bf16 %v193, %v193
  %211 = vst [vmem:[%s3] sm:$0xf] %v195
  %212 = vst [vmem:[%s3 + $0x4] sm:$0xf] %v196
  %213 = vst [vmem:[%s3 + $0x8] sm:$0xf] %v197
  %214 = vst [vmem:[%s3 + $0xc] sm:$0xf] %v198
  %215 = vst [vmem:[%s3 + $0x10] sm:$0xf] %v199
  %216 = vst [vmem:[%s3 + $0x14] sm:$0xf] %v200
  %217 = vst [vmem:[%s3 + $0x18] sm:$0xf] %v201
  %218 = vst [vmem:[%s3 + $0x1c] sm:$0xf] %v202
  %219 = vst [vmem:[%s3 + $0x20] sm:$0xf] %v203
  %220 = vst [vmem:[%s3 + $0x24] sm:$0xf] %v204
  %221 = vst [vmem:[%s3 + $0x28] sm:$0xf] %v205
  %222 = vst [vmem:[%s3 + $0x2c] sm:$0xf] %v206
  %223 = vst [vmem:[%s3 + $0x30] sm:$0xf] %v207
  %224 = vst [vmem:[%s3 + $0x34] sm:$0xf] %v208
  %225 = vst [vmem:[%s3 + $0x38] sm:$0xf] %v209
  %226 = vst [vmem:[%s3 + $0x3c] sm:$0xf] %v210
  // Predicated region
  $region14: #{bottleneck_forward.6} parent=0 // pred_check
    _
  $region15: #{bottleneck_forward.6} parent=0 // pred_check_branch
    %228 = sbr.rel (0) target = $region17
  $region16: #{bottleneck_forward.6} parent=0 // pred_region
    _
  $region17: #{bottleneck_forward.6} parent=0 // pred_fallthru
    _
  // Predicated region
  $region18: #{bottleneck_forward.6} parent=0 // pred_check
    _
  $region19: #{bottleneck_forward.6} parent=0 // pred_check_branch
    %230 = sbr.rel (0) target = $region21
  $region20: #{bottleneck_forward.6} parent=0 // pred_region
    _
  $region21: #{bottleneck_forward.6} parent=0 // pred_fallthru
    _

// kernel: bottleneck_forward.7
$region0: #{bottleneck_forward.7}
  #allocation0 [shape = 'u32[]', space=smem, size = 0x4, offset = 0x4, fixed_abs, tag = 'smem constant byte address 0x4 - core index']
  #allocation1 [shape = 'u32[72,128]{1,0:T(1,128)}', space=vmem, size = 0x9000, scoped, tag = 'internal scratch']
  %s0 = inlined_call_operand.vmem [shape: bf16[128,128], index: 0, kind: input, shape index: {}]
  %s1 = inlined_call_operand.vmem [shape: bf16[128,128], index: 1, kind: input, shape index: {}]
  %s2 = inlined_call_operand.vmem [shape: f32[1,128], index: 2, kind: input, shape index: {}]
  %s3 = inlined_call_operand.vmem [shape: bf16[128,128], index: 3, kind: input, shape index: {}]
  %s4 = inlined_call_operand.vmem [shape: bf16[128,128], index: 4, kind: output, shape index: {}]
  %s5 = sld [smem:[#allocation0]]
  $region26: #{bottleneck_forward.7} parent=0
    _
  %s7 = ssub.s32 1, %s5
  %s8 = scalar_select 0, %s7, %s5
  // Predicated region
  $region2: #{bottleneck_forward.7} parent=0 // pred_check
    _
  $region3: #{bottleneck_forward.7} parent=0 // pred_check_branch
    %10 = sbr.rel (0) target = $region5
  $region4: #{bottleneck_forward.7} parent=0 // pred_region
    _
  $region5: #{bottleneck_forward.7} parent=0 // pred_fallthru
    _
  // Predicated region
  $region6: #{bottleneck_forward.7} parent=0 // pred_check
    _
  $region7: #{bottleneck_forward.7} parent=0 // pred_check_branch
    %12 = sbr.rel (0) target = $region9
  $region8: #{bottleneck_forward.7} parent=0 // pred_region
    _
  $region9: #{bottleneck_forward.7} parent=0 // pred_fallthru
    _
  // Predicated region
  $region10: #{bottleneck_forward.7} parent=0 // pred_check
    _
  $region11: #{bottleneck_forward.7} parent=0 // pred_check_branch
    %14 = sbr.rel (0) target = $region13
  $region12: #{bottleneck_forward.7} parent=0 // pred_region
    _
  $region13: #{bottleneck_forward.7} parent=0 // pred_fallthru
    _
  // Predicated region
  $region14: #{bottleneck_forward.7} parent=0 // pred_check
    _
  $region15: #{bottleneck_forward.7} parent=0 // pred_check_branch
    %16 = sbr.rel (0) target = $region17
  $region16: #{bottleneck_forward.7} parent=0 // pred_region
    _
  $region17: #{bottleneck_forward.7} parent=0 // pred_fallthru
    _
  %v17 = vld [vmem:[%s0] sm:$0xf]
  %v18 = vld [vmem:[%s0 + $0x4] sm:$0xf]
  %v19 = vld [vmem:[%s0 + $0x8] sm:$0xf]
  %v20 = vld [vmem:[%s0 + $0xc] sm:$0xf]
  %v21 = vld [vmem:[%s0 + $0x10] sm:$0xf]
  %v22 = vld [vmem:[%s0 + $0x14] sm:$0xf]
  %v23 = vld [vmem:[%s0 + $0x18] sm:$0xf]
  %v24 = vld [vmem:[%s0 + $0x1c] sm:$0xf]
  %v25 = vld [vmem:[%s0 + $0x20] sm:$0xf]
  %v26 = vld [vmem:[%s0 + $0x24] sm:$0xf]
  %v27 = vld [vmem:[%s0 + $0x28] sm:$0xf]
  %v28 = vld [vmem:[%s0 + $0x2c] sm:$0xf]
  %v29 = vld [vmem:[%s0 + $0x30] sm:$0xf]
  %v30 = vld [vmem:[%s0 + $0x34] sm:$0xf]
  %v31 = vld [vmem:[%s0 + $0x38] sm:$0xf]
  %v32 = vld [vmem:[%s0 + $0x3c] sm:$0xf]
  %v33 = vld [vmem:[%s1] sm:$0xf]
  %v34 = vld [vmem:[%s1 + $0x4] sm:$0xf]
  %v35 = vld [vmem:[%s1 + $0x8] sm:$0xf]
  %v36 = vld [vmem:[%s1 + $0xc] sm:$0xf]
  %v37 = vld [vmem:[%s1 + $0x10] sm:$0xf]
  %v38 = vld [vmem:[%s1 + $0x14] sm:$0xf]
  %v39 = vld [vmem:[%s1 + $0x18] sm:$0xf]
  %v40 = vld [vmem:[%s1 + $0x1c] sm:$0xf]
  %v41 = vld [vmem:[%s1 + $0x20] sm:$0xf]
  %v42 = vld [vmem:[%s1 + $0x24] sm:$0xf]
  %v43 = vld [vmem:[%s1 + $0x28] sm:$0xf]
  %v44 = vld [vmem:[%s1 + $0x2c] sm:$0xf]
  %v45 = vld [vmem:[%s1 + $0x30] sm:$0xf]
  %v46 = vld [vmem:[%s1 + $0x34] sm:$0xf]
  %v47 = vld [vmem:[%s1 + $0x38] sm:$0xf]
  %v48 = vld [vmem:[%s1 + $0x3c] sm:$0xf]
  %v49 = vld [vmem:[%s2] sm:$0x1]
  %v51 = vperm.slane %v49, 0
  %v69 = vunpack.c.l.b16 %v17
  %v70 = vunpack.c.l.b16 %v18
  %v71 = vunpack.c.l.b16 %v19
  %v72 = vunpack.c.l.b16 %v20
  %v73 = vunpack.c.l.b16 %v21
  %v74 = vunpack.c.l.b16 %v22
  %v75 = vunpack.c.l.b16 %v23
  %v76 = vunpack.c.l.b16 %v24
  %v77 = vunpack.c.l.b16 %v25
  %v78 = vunpack.c.l.b16 %v26
  %v79 = vunpack.c.l.b16 %v27
  %v80 = vunpack.c.l.b16 %v28
  %v81 = vunpack.c.l.b16 %v29
  %v82 = vunpack.c.l.b16 %v30
  %v83 = vunpack.c.l.b16 %v31
  %v84 = vunpack.c.l.b16 %v32
  %v85 = vpack.c.b16 %v70, %v69
  %v86 = vpack.c.b16 %v72, %v71
  %v87 = vpack.c.b16 %v74, %v73
  %v88 = vpack.c.b16 %v76, %v75
  %v89 = vpack.c.b16 %v78, %v77
  %v90 = vpack.c.b16 %v80, %v79
  %v91 = vpack.c.b16 %v82, %v81
  %v92 = vpack.c.b16 %v84, %v83
  %v117 = vunpack.c.l.b16 %v33
  %v118 = vunpack.c.l.b16 %v34
  %v119 = vunpack.c.l.b16 %v35
  %v120 = vunpack.c.l.b16 %v36
  %v121 = vunpack.c.l.b16 %v37
  %v122 = vunpack.c.l.b16 %v38
  %v123 = vunpack.c.l.b16 %v39
  %v124 = vunpack.c.l.b16 %v40
  %v125 = vunpack.c.l.b16 %v41
  %v126 = vunpack.c.l.b16 %v42
  %v127 = vunpack.c.l.b16 %v43
  %v128 = vunpack.c.l.b16 %v44
  %v129 = vunpack.c.l.b16 %v45
  %v130 = vunpack.c.l.b16 %v46
  %v131 = vunpack.c.l.b16 %v47
  %v132 = vunpack.c.l.b16 %v48
  %v133 = vpack.c.b16 %v118, %v117
  %v134 = vpack.c.b16 %v120, %v119
  %v135 = vpack.c.b16 %v122, %v121
  %v136 = vpack.c.b16 %v124, %v123
  %v137 = vpack.c.b16 %v126, %v125
  %v138 = vpack.c.b16 %v128, %v127
  %v139 = vpack.c.b16 %v130, %v129
  %v140 = vpack.c.b16 %v132, %v131
  %149 = vmatpush.bf16.msra.mxu0 %v140
  %150 = vmatpush.bf16.msra.mxu0 %v139
  %151 = vmatpush.bf16.msra.mxu0 %v138
  %152 = vmatpush.bf16.msra.mxu0 %v137
  %153 = vmatpush.bf16.msra.mxu0 %v136
  %154 = vmatpush.bf16.msra.mxu0 %v135
  %155 = vmatpush.bf16.msra.mxu0 %v134
  %156 = vmatpush.bf16.msra.mxu0 %v133
  %157 = vmatmul.bf16.gmra.mxu0 %v85
  %v158 = vpop.f32.mrf.mxu0
  %v159 = vadd.f32 %v51, %v158
  %v160 = vpop.f32.mrf.mxu0
  %v161 = vadd.f32 %v51, %v160
  %162 = vmatmul.bf16.gmra.mxu0 %v86
  %v163 = vpop.f32.mrf.mxu0
  %v164 = vadd.f32 %v51, %v163
  %v165 = vpop.f32.mrf.mxu0
  %v166 = vadd.f32 %v51, %v165
  %167 = vmatmul.bf16.gmra.mxu0 %v87
  %v168 = vpop.f32.mrf.mxu0
  %v169 = vadd.f32 %v51, %v168
  %v170 = vpop.f32.mrf.mxu0
  %v171 = vadd.f32 %v51, %v170
  %172 = vmatmul.bf16.gmra.mxu0 %v88
  %v173 = vpop.f32.mrf.mxu0
  %v174 = vadd.f32 %v51, %v173
  %v175 = vpop.f32.mrf.mxu0
  %v176 = vadd.f32 %v51, %v175
  %177 = vmatmul.bf16.gmra.mxu0 %v89
  %v178 = vpop.f32.mrf.mxu0
  %v179 = vadd.f32 %v51, %v178
  %v180 = vpop.f32.mrf.mxu0
  %v181 = vadd.f32 %v51, %v180
  %182 = vmatmul.bf16.gmra.mxu0 %v90
  %v183 = vpop.f32.mrf.mxu0
  %v184 = vadd.f32 %v51, %v183
  %v185 = vpop.f32.mrf.mxu0
  %v186 = vadd.f32 %v51, %v185
  %187 = vmatmul.bf16.gmra.mxu0 %v91
  %v188 = vpop.f32.mrf.mxu0
  %v189 = vadd.f32 %v51, %v188
  %v190 = vpop.f32.mrf.mxu0
  %v191 = vadd.f32 %v51, %v190
  %192 = vmatmul.bf16.gmra.mxu0 %v92
  %v193 = vpop.f32.mrf.mxu0
  %v194 = vadd.f32 %v51, %v193
  %v195 = vpop.f32.mrf.mxu0
  %v196 = vadd.f32 %v51, %v195
  %197 = vdwg.mxu0
  %v198 = vld [vmem:[%s3] sm:$0xf]
  %v199 = vld [vmem:[%s3 + $0x4] sm:$0xf]
  %v200 = vld [vmem:[%s3 + $0x8] sm:$0xf]
  %v201 = vld [vmem:[%s3 + $0xc] sm:$0xf]
  %v202 = vld [vmem:[%s3 + $0x10] sm:$0xf]
  %v203 = vld [vmem:[%s3 + $0x14] sm:$0xf]
  %v204 = vld [vmem:[%s3 + $0x18] sm:$0xf]
  %v205 = vld [vmem:[%s3 + $0x1c] sm:$0xf]
  %v206 = vld [vmem:[%s3 + $0x20] sm:$0xf]
  %v207 = vld [vmem:[%s3 + $0x24] sm:$0xf]
  %v208 = vld [vmem:[%s3 + $0x28] sm:$0xf]
  %v209 = vld [vmem:[%s3 + $0x2c] sm:$0xf]
  %v210 = vld [vmem:[%s3 + $0x30] sm:$0xf]
  %v211 = vld [vmem:[%s3 + $0x34] sm:$0xf]
  %v212 = vld [vmem:[%s3 + $0x38] sm:$0xf]
  %v213 = vld [vmem:[%s3 + $0x3c] sm:$0xf]
  %v214 = vunpack.c.l.bf16 %v198
  %v215 = vunpack.c.l.bf16 %v199
  %v216 = vunpack.c.l.bf16 %v200
  %v217 = vunpack.c.l.bf16 %v201
  %v218 = vunpack.c.l.bf16 %v202
  %v219 = vunpack.c.l.bf16 %v203
  %v220 = vunpack.c.l.bf16 %v204
  %v221 = vunpack.c.l.bf16 %v205
  %v222 = vunpack.c.l.bf16 %v206
  %v223 = vunpack.c.l.bf16 %v207
  %v224 = vunpack.c.l.bf16 %v208
  %v225 = vunpack.c.l.bf16 %v209
  %v226 = vunpack.c.l.bf16 %v210
  %v227 = vunpack.c.l.bf16 %v211
  %v228 = vunpack.c.l.bf16 %v212
  %v229 = vunpack.c.l.bf16 %v213
  %v230 = vadd.f32 %v159, %v214
  %v231 = vadd.f32 %v161, %v215
  %v232 = vadd.f32 %v164, %v216
  %v233 = vadd.f32 %v166, %v217
  %v234 = vadd.f32 %v169, %v218
  %v235 = vadd.f32 %v171, %v219
  %v236 = vadd.f32 %v174, %v220
  %v237 = vadd.f32 %v176, %v221
  %v238 = vadd.f32 %v179, %v222
  %v239 = vadd.f32 %v181, %v223
  %v240 = vadd.f32 %v184, %v224
  %v241 = vadd.f32 %v186, %v225
  %v242 = vadd.f32 %v189, %v226
  %v243 = vadd.f32 %v191, %v227
  %v244 = vadd.f32 %v194, %v228
  %v245 = vadd.f32 %v196, %v229
  %v246 = vmax.f32 %v230, 0.0
  %v247 = vmax.f32 %v231, 0.0
  %v248 = vmax.f32 %v232, 0.0
  %v249 = vmax.f32 %v233, 0.0
  %v250 = vmax.f32 %v234, 0.0
  %v251 = vmax.f32 %v235, 0.0
  %v252 = vmax.f32 %v236, 0.0
  %v253 = vmax.f32 %v237, 0.0
  %v254 = vmax.f32 %v238, 0.0
  %v255 = vmax.f32 %v239, 0.0
  %v256 = vmax.f32 %v240, 0.0
  %v257 = vmax.f32 %v241, 0.0
  %v258 = vmax.f32 %v242, 0.0
  %v259 = vmax.f32 %v243, 0.0
  %v260 = vmax.f32 %v244, 0.0
  %v261 = vmax.f32 %v245, 0.0
  %v262 = vpack.c.bf16 %v246, %v246
  %v263 = vpack.c.bf16 %v247, %v247
  %v264 = vpack.c.bf16 %v248, %v248
  %v265 = vpack.c.bf16 %v249, %v249
  %v266 = vpack.c.bf16 %v250, %v250
  %v267 = vpack.c.bf16 %v251, %v251
  %v268 = vpack.c.bf16 %v252, %v252
  %v269 = vpack.c.bf16 %v253, %v253
  %v270 = vpack.c.bf16 %v254, %v254
  %v271 = vpack.c.bf16 %v255, %v255
  %v272 = vpack.c.bf16 %v256, %v256
  %v273 = vpack.c.bf16 %v257, %v257
  %v274 = vpack.c.bf16 %v258, %v258
  %v275 = vpack.c.bf16 %v259, %v259
  %v276 = vpack.c.bf16 %v260, %v260
  %v277 = vpack.c.bf16 %v261, %v261
  %278 = vst [vmem:[%s4] sm:$0xf] %v262
  %279 = vst [vmem:[%s4 + $0x4] sm:$0xf] %v263
  %280 = vst [vmem:[%s4 + $0x8] sm:$0xf] %v264
  %281 = vst [vmem:[%s4 + $0xc] sm:$0xf] %v265
  %282 = vst [vmem:[%s4 + $0x10] sm:$0xf] %v266
  %283 = vst [vmem:[%s4 + $0x14] sm:$0xf] %v267
  %284 = vst [vmem:[%s4 + $0x18] sm:$0xf] %v268
  %285 = vst [vmem:[%s4 + $0x1c] sm:$0xf] %v269
  %286 = vst [vmem:[%s4 + $0x20] sm:$0xf] %v270
  %287 = vst [vmem:[%s4 + $0x24] sm:$0xf] %v271
  %288 = vst [vmem:[%s4 + $0x28] sm:$0xf] %v272
  %289 = vst [vmem:[%s4 + $0x2c] sm:$0xf] %v273
  %290 = vst [vmem:[%s4 + $0x30] sm:$0xf] %v274
  %291 = vst [vmem:[%s4 + $0x34] sm:$0xf] %v275
  %292 = vst [vmem:[%s4 + $0x38] sm:$0xf] %v276
  %293 = vst [vmem:[%s4 + $0x3c] sm:$0xf] %v277
  // Predicated region
  $region18: #{bottleneck_forward.7} parent=0 // pred_check
    _
  $region19: #{bottleneck_forward.7} parent=0 // pred_check_branch
    %295 = sbr.rel (0) target = $region21
  $region20: #{bottleneck_forward.7} parent=0 // pred_region
    _
  $region21: #{bottleneck_forward.7} parent=0 // pred_fallthru
    _
  // Predicated region
  $region22: #{bottleneck_forward.7} parent=0 // pred_check
    _
  $region23: #{bottleneck_forward.7} parent=0 // pred_check_branch
    %297 = sbr.rel (0) target = $region25
  $region24: #{bottleneck_forward.7} parent=0 // pred_region
    _
  $region25: #{bottleneck_forward.7} parent=0 // pred_fallthru
    _

</llo_original>
